<compile_context>
chip_gen: v7x
topology: tpu7x:2x2x1
jax: 0.10.0
libtpu: 0.0.40
codegen_flags: <defaults>
</compile_context>

<pallas_src>
import jax
import jax.numpy as jnp
from jax.experimental import pallas as pl
from jax.experimental.pallas import tpu as pltpu


# --------------------------------------------------------------------------- #
# Pallas kernel (built per static config via closure)
# --------------------------------------------------------------------------- #
def _make_kernel(stride, Ho, Wo, Cin, P, B, identity_sc):
    M = B * Ho * Wo
    K1 = 9 * Cin

    # conv1 tap (dy, dx) -> (phase index, row offset, col offset) inside the
    # phase-decomposed padded input.  For stride 1 there is a single phase.
    tap_src = []
    for dy in range(3):
        for dx in range(3):
            if stride == 1:
                tap_src.append((0, dy, dx))
            else:  # stride 2: phase (dy%2, dx%2), element offset (dy//2, dx//2)
                tap_src.append(((dy % 2) * 2 + (dx % 2), dy // 2, dx // 2))

    def body(x_ref, w1_ref, s1_ref, b1_ref, w2_ref, s2_ref, b2_ref, sel_ref,
             out_ref, col_ref, pad_ref):
        """
        x_ref  : (nphase, B, Hp, Wp, Cin) bf16  padded (phase-decomposed) input
        w1_ref : (9*Cin, P) bf16                conv1 weights, (dy,dx,ci)-major
        s1,b1  : (1, P) f32                     folded BN1 scale / bias
        w2_ref : (9*P, P) bf16                  conv2 weights, (dy,dx,ci)-major
        s2,b2  : (1, P) f32                     folded BN2 scale / bias
        sel_ref: (Cin, P) bf16 or None          option-'A' channel zero-pad
        out_ref: (M, P) f32                     M = B*Ho*Wo
        col_ref: (M, 9*P) bf16                  shared im2col scratch (VMEM)
        pad_ref: (B, Ho+2, Wo+2, P) bf16        conv2 halo buffer (VMEM)
        """
        # ---- conv1: gather the 9 bf16 taps into one im2col patch matrix ------
        for k, (p, r0, c0) in enumerate(tap_src):
            col_ref[:, k * Cin:(k + 1) * Cin] = (
                x_ref[p, :, r0:r0 + Ho, c0:c0 + Wo, :].reshape(M, Cin))

        # shortcut, reusing the already-gathered conv1 center tap (columns 4)
        center = col_ref[:, 4 * Cin:5 * Cin]
        if identity_sc:
            sc = center.astype(jnp.float32)            # Cin == P, stride == 1
        else:
            # option 'A': the stride-2 center tap IS x[:, ::2, ::2]; the channel
            # zero-pad is a resident 0/1 selection matmul on the idle MXU.
            sc = jnp.dot(center, sel_ref[...],
                         preferred_element_type=jnp.float32)

        # one wide bf16 MXU matmul (K = 9*Cin), f32 accumulation
        acc1 = jnp.dot(col_ref[:, :K1], w1_ref[...],
                       preferred_element_type=jnp.float32)
        out1 = jnp.maximum(acc1 * s1_ref[...] + b1_ref[...], 0.0)   # bn1 + relu

        # ---- conv2 (3x3, stride 1, pad 1) via bf16 halo buffer + im2col ------
        # zero only the 1-pixel halo; the interior is fully overwritten below.
        zrow = jnp.zeros((B, 1, Wo + 2, P), jnp.bfloat16)
        zcol = jnp.zeros((B, Ho, 1, P), jnp.bfloat16)
        pad_ref[:, 0:1, :, :] = zrow
        pad_ref[:, Ho + 1:Ho + 2, :, :] = zrow
        pad_ref[:, 1:Ho + 1, 0:1, :] = zcol
        pad_ref[:, 1:Ho + 1, Wo + 1:Wo + 2, :] = zcol
        pad_ref[:, 1:Ho + 1, 1:Wo + 1, :] = (
            out1.reshape(B, Ho, Wo, P).astype(jnp.bfloat16))

        for dy in range(3):
            for dx in range(3):
                k = dy * 3 + dx
                col_ref[:, k * P:(k + 1) * P] = (
                    pad_ref[:, dy:dy + Ho, dx:dx + Wo, :].reshape(M, P))
        acc2 = jnp.dot(col_ref[...], w2_ref[...],
                       preferred_element_type=jnp.float32)
        out2 = acc2 * s2_ref[...] + b2_ref[...]                      # bn2

        out_ref[...] = jnp.maximum(out2 + sc, 0.0).astype(out_ref.dtype)

    if identity_sc:
        def kernel(x_ref, w1_ref, s1_ref, b1_ref, w2_ref, s2_ref, b2_ref,
                   out_ref, col_ref, pad_ref):
            body(x_ref, w1_ref, s1_ref, b1_ref, w2_ref, s2_ref, b2_ref, None,
                 out_ref, col_ref, pad_ref)
        return kernel
    return body


# --------------------------------------------------------------------------- #
# Glue: BN folding, phase decomposition, VMEM budgeting, pallas_call wrapper
# --------------------------------------------------------------------------- #
def _fold_bn(gamma, beta, mean, var, eps=1e-5):
    scale = gamma / jnp.sqrt(var + eps)
    bias = beta - mean * scale
    return scale, bias


def _vmem_capacity_bytes():
    try:
        info = pltpu.get_tpu_info()
        cap = getattr(info, "vmem_capacity_bytes", None)
        if cap:
            return int(cap)
    except Exception:
        pass
    return 64 * 1024 * 1024          # conservative default (v7x per-TC VMEM)


def _per_image_vmem_bytes(nph, Hp, Wp, Cin, Ho, Wo, P):
    lane = lambda c: ((c + 127) // 128) * 128          # minor-dim lane padding
    inp = 2 * nph * Hp * Wp * lane(Cin) * 2            # bf16, double-buffered
    col = Ho * Wo * lane(9 * P) * 2                    # bf16 im2col scratch
    halo = (Ho + 2) * (Wo + 2) * lane(P) * 2           # bf16 conv2 halo
    outb = 2 * Ho * Wo * lane(P) * 4                   # f32, double-buffered
    return inp + col + halo + outb


def _pick_batch_block(N, per_image_bytes, budget, max_b=64):
    best = 1
    for b in range(1, min(N, max_b) + 1):
        if N % b == 0 and b * per_image_bytes <= budget:
            best = b
    return best


def basic_block_forward(x_nchw, params, stride):
    x = jnp.transpose(x_nchw, (0, 2, 3, 1)).astype(jnp.float32)   # NCHW -> NHWC
    N, H, W, Cin = x.shape
    w1, w2 = params["w1"], params["w2"]                           # torch OIHW
    P = w1.shape[0]
    assert H % stride == 0 and W % stride == 0
    Ho, Wo = H // stride, W // stride

    identity_sc = (stride == 1 and Cin == P)
    if not identity_sc:
        assert stride == 2 and Cin + 2 * (P // 4) == P, \
            "option-'A' shortcut expects stride=2 and planes == 2*in_planes"

    # Padded input, passed ONCE (bf16).  For stride 2 it is phase-decomposed
    # (xp[:, a::2, b::2, :] for a,b in {0,1}) so every conv tap and the
    # option-'A' shortcut are contiguous slices inside the kernel.
    xp = jnp.pad(x, ((0, 0), (1, 1), (1, 1), (0, 0)))
    if stride == 1:
        xs = xp[None]                                  # (1, N, H+2, W+2, Cin)
    else:
        xs = jnp.stack([xp[:, a::2, b::2, :]
                        for a in range(2) for b in range(2)], axis=0)
    xs = xs.astype(jnp.bfloat16)
    nph, _, Hp, Wp, _ = xs.shape

    # weights: torch (O, I, 3, 3) -> (dy,dx,ci)-major (9*I, O), bf16 for MXU.
    w1k = jnp.transpose(w1, (2, 3, 1, 0)).reshape(9 * Cin, P).astype(jnp.bfloat16)
    w2k = jnp.transpose(w2, (2, 3, 1, 0)).reshape(9 * P, P).astype(jnp.bfloat16)

    s1, b1 = _fold_bn(*params["bn1"])
    s2, b2 = _fold_bn(*params["bn2"])
    s1, b1, s2, b2 = (a.reshape(1, P).astype(jnp.float32)
                      for a in (s1, b1, s2, b2))

    # Generation-aware VMEM budgeting: B images per grid step.
    vmem_cap = _vmem_capacity_bytes()
    per_img = _per_image_vmem_bytes(nph, Hp, Wp, Cin, Ho, Wo, P)
    B = _pick_batch_block(N, per_img, vmem_cap // 2)
    M = B * Ho * Wo

    kernel = _make_kernel(stride, Ho, Wo, Cin, P, B, identity_sc)

    in_specs = [
        pl.BlockSpec((nph, B, Hp, Wp, Cin), lambda n: (0, n, 0, 0, 0)),
        pl.BlockSpec((9 * Cin, P), lambda n: (0, 0)),      # resident weights
        pl.BlockSpec((1, P), lambda n: (0, 0)),
        pl.BlockSpec((1, P), lambda n: (0, 0)),
        pl.BlockSpec((9 * P, P), lambda n: (0, 0)),        # resident weights
        pl.BlockSpec((1, P), lambda n: (0, 0)),
        pl.BlockSpec((1, P), lambda n: (0, 0)),
    ]
    args = [xs, w1k, s1, b1, w2k, s2, b2]
    if not identity_sc:
        # option-'A' channel zero-pad as a hoisted, resident 0/1 matrix.
        sel = (jnp.arange(P)[None, :] ==
               (jnp.arange(Cin)[:, None] + P // 4)).astype(jnp.bfloat16)
        args.append(sel)
        in_specs.append(pl.BlockSpec((Cin, P), lambda n: (0, 0)))

    out = pl.pallas_call(
        kernel,
        out_shape=jax.ShapeDtypeStruct((N * Ho * Wo, P), jnp.float32),
        grid_spec=pltpu.PrefetchScalarGridSpec(
            num_scalar_prefetch=0,
            grid=(N // B,),                              # B images per step
            in_specs=in_specs,
            out_specs=pl.BlockSpec((M, P), lambda n: (n, 0)),
            scratch_shapes=[
                pltpu.VMEM((M, 9 * P), jnp.bfloat16),            # shared im2col
                pltpu.VMEM((B, Ho + 2, Wo + 2, P), jnp.bfloat16),  # conv2 halo
            ],
        ),
        compiler_params=pltpu.CompilerParams(
            dimension_semantics=("parallel",),           # megacore shard on v7x
            vmem_limit_bytes=int(vmem_cap * 3 // 4),
        ),
    )(*args)

    out = out.reshape(N, Ho, Wo, P)
    return jnp.transpose(out, (0, 3, 1, 2))                       # back to NCHW


# --------------------------------------------------------------------------- #
# Pure-JAX reference (mirrors the kernel's bf16 rounding points) + init
# --------------------------------------------------------------------------- #
def _conv3x3_ref(x_nhwc, w_torch, stride):
    w = jnp.transpose(w_torch, (2, 3, 1, 0))                      # OIHW -> HWIO
    return jax.lax.conv_general_dilated(
        x_nhwc, w, (stride, stride), ((1, 1), (1, 1)),
        dimension_numbers=("NHWC", "HWIO", "NHWC"),
        precision=jax.lax.Precision.HIGHEST)


def basic_block_reference(x_nchw, params, stride):
    # Activations / weights rounded to bf16 where the kernel rounds them;
    # accumulation, BN, residual and ReLU stay f32.
    x = jnp.transpose(x_nchw, (0, 2, 3, 1)).astype(jnp.float32)
    xb = x.astype(jnp.bfloat16).astype(jnp.float32)
    w1b = params["w1"].astype(jnp.bfloat16).astype(jnp.float32)
    w2b = params["w2"].astype(jnp.bfloat16).astype(jnp.float32)
    P, Cin = params["w1"].shape[0], x.shape[-1]
    s1, b1 = _fold_bn(*params["bn1"])
    s2, b2 = _fold_bn(*params["bn2"])
    o1 = jnp.maximum(_conv3x3_ref(xb, w1b, stride) * s1 + b1, 0.0)
    o1 = o1.astype(jnp.bfloat16).astype(jnp.float32)   # kernel's bf16 conv2 LHS
    o2 = _conv3x3_ref(o1, w2b, 1) * s2 + b2
    if stride == 1 and Cin == P:
        sc = xb
    else:
        sc = jnp.pad(xb[:, ::2, ::2, :],
                     ((0, 0), (0, 0), (0, 0), (P // 4, P // 4)))
    return jnp.transpose(jnp.maximum(o2 + sc, 0.0), (0, 3, 1, 2))


def init_params(key, in_planes, planes):
    ks = jax.random.split(key, 10)
    w1 = jax.random.normal(ks[0], (planes, in_planes, 3, 3), jnp.float32) * 0.2
    w2 = jax.random.normal(ks[1], (planes, planes, 3, 3), jnp.float32) * 0.2
    bn1 = (1.0 + 0.1 * jax.random.normal(ks[2], (planes,), jnp.float32),   # gamma
           0.1 * jax.random.normal(ks[3], (planes,), jnp.float32),         # beta
           0.1 * jax.random.normal(ks[4], (planes,), jnp.float32),         # mean
           jax.random.uniform(ks[5], (planes,), jnp.float32, 0.5, 1.5))    # var
    bn2 = (1.0 + 0.1 * jax.random.normal(ks[6], (planes,), jnp.float32),
           0.1 * jax.random.normal(ks[7], (planes,), jnp.float32),
           0.1 * jax.random.normal(ks[8], (planes,), jnp.float32),
           jax.random.uniform(ks[9], (planes,), jnp.float32, 0.5, 1.5))
    return {"w1": w1, "w2": w2, "bn1": bn1, "bn2": bn2}


if __name__ == "__main__":
    key = jax.random.PRNGKey(0)
    kx1, kx2, kp1, kp2 = jax.random.split(key, 4)

    # Config 1: stride=2, in_planes(4) != planes(8)  -> option 'A' shortcut.
    x1 = jax.random.normal(kx1, (2, 4, 16, 16), jnp.float32)
    p1 = init_params(kp1, 4, 8)
    out1 = jax.block_until_ready(basic_block_forward(x1, p1, stride=2))
    ref1 = basic_block_reference(x1, p1, 2)
    assert out1.shape == (2, 8, 8, 8), out1.shape
    assert jnp.allclose(out1, ref1, atol=1e-2, rtol=1e-2), \
        float(jnp.max(jnp.abs(out1 - ref1)))

    # Config 2: stride=1, in_planes == planes (8)    -> identity shortcut.
    x2 = jax.random.normal(kx2, (2, 8, 16, 16), jnp.float32)
    p2 = init_params(kp2, 8, 8)
    out2 = jax.block_until_ready(basic_block_forward(x2, p2, stride=1))
    ref2 = basic_block_reference(x2, p2, 1)
    assert out2.shape == (2, 8, 16, 16), out2.shape
    assert jnp.allclose(out2, ref2, atol=1e-2, rtol=1e-2), \
        float(jnp.max(jnp.abs(out2 - ref2)))

    print("KERNEL_OK")
</pallas_src>

<mosaic_0001>
module attributes {stable_mosaic.version = 11 : i64} {
  func.func @body(%arg0: i32, %arg1: memref<4x2x9x9x4xbf16, #tpu.memory_space<vmem>>, %arg2: memref<36x8xbf16, #tpu.memory_space<vmem>>, %arg3: memref<1x8xf32, #tpu.memory_space<vmem>>, %arg4: memref<1x8xf32, #tpu.memory_space<vmem>>, %arg5: memref<72x8xbf16, #tpu.memory_space<vmem>>, %arg6: memref<1x8xf32, #tpu.memory_space<vmem>>, %arg7: memref<1x8xf32, #tpu.memory_space<vmem>>, %arg8: memref<4x8xbf16, #tpu.memory_space<vmem>>, %arg9: memref<128x8xf32, #tpu.memory_space<vmem>>, %arg10: memref<128x72xbf16, #tpu.memory_space<vmem>>, %arg11: memref<2x10x10x8xbf16, #tpu.memory_space<vmem>>) attributes {dimension_semantics = [#tpu.dimension_semantics<parallel>], iteration_bounds = array<i64: 1>, scalar_prefetch = 0 : i64, scratch_operands = 2 : i64, tpu.core_type = #tpu.core_type<tc>, window_params = [{transform_indices = @transform_0, window_bounds = array<i64: 4, 2, 9, 9, 4>}, {pipeline_mode = #tpu.pipeline_mode<synchronous>, transform_indices = @transform_1, window_bounds = array<i64: 36, 8>}, {pipeline_mode = #tpu.pipeline_mode<synchronous>, transform_indices = @transform_2, window_bounds = array<i64: 1, 8>}, {pipeline_mode = #tpu.pipeline_mode<synchronous>, transform_indices = @transform_3, window_bounds = array<i64: 1, 8>}, {pipeline_mode = #tpu.pipeline_mode<synchronous>, transform_indices = @transform_4, window_bounds = array<i64: 72, 8>}, {pipeline_mode = #tpu.pipeline_mode<synchronous>, transform_indices = @transform_5, window_bounds = array<i64: 1, 8>}, {pipeline_mode = #tpu.pipeline_mode<synchronous>, transform_indices = @transform_6, window_bounds = array<i64: 1, 8>}, {pipeline_mode = #tpu.pipeline_mode<synchronous>, transform_indices = @transform_7, window_bounds = array<i64: 4, 8>}, {transform_indices = @transform_8, window_bounds = array<i64: 128, 8>}]} {
    %c0 = arith.constant 0 : index
    %c0_0 = arith.constant 0 : index
    %c0_1 = arith.constant 0 : index
    %c0_2 = arith.constant 0 : index
    %c0_3 = arith.constant 0 : index
    %0 = vector.load %arg1[%c0, %c0_0, %c0_1, %c0_2, %c0_3] : memref<4x2x9x9x4xbf16, #tpu.memory_space<vmem>>, vector<1x2x8x8x4xbf16>
    %1 = vector.shape_cast %0 : vector<1x2x8x8x4xbf16> to vector<2x8x8x4xbf16>
    %2 = vector.shape_cast %1 : vector<2x8x8x4xbf16> to vector<128x4xbf16>
    %c0_4 = arith.constant 0 : index
    %c0_5 = arith.constant 0 : index
    %3 = vector.load %arg10[%c0_4, %c0_5] : memref<128x72xbf16, #tpu.memory_space<vmem>>, vector<128x4xbf16>
    tpu.vector_store %arg10[%c0_4, %c0_5], %2 {strides = array<i32>} : memref<128x72xbf16, #tpu.memory_space<vmem>>, vector<128x4xbf16>,
    %c1 = arith.constant 1 : index
    %c0_6 = arith.constant 0 : index
    %c0_7 = arith.constant 0 : index
    %c0_8 = arith.constant 0 : index
    %c0_9 = arith.constant 0 : index
    %4 = vector.load %arg1[%c1, %c0_6, %c0_7, %c0_8, %c0_9] : memref<4x2x9x9x4xbf16, #tpu.memory_space<vmem>>, vector<1x2x8x8x4xbf16>
    %5 = vector.shape_cast %4 : vector<1x2x8x8x4xbf16> to vector<2x8x8x4xbf16>
    %6 = vector.shape_cast %5 : vector<2x8x8x4xbf16> to vector<128x4xbf16>
    %c0_10 = arith.constant 0 : index
    %c4 = arith.constant 4 : index
    %7 = vector.load %arg10[%c0_10, %c4] : memref<128x72xbf16, #tpu.memory_space<vmem>>, vector<128x4xbf16>
    tpu.vector_store %arg10[%c0_10, %c4], %6 {strides = array<i32>} : memref<128x72xbf16, #tpu.memory_space<vmem>>, vector<128x4xbf16>,
    %c0_11 = arith.constant 0 : index
    %c0_12 = arith.constant 0 : index
    %c0_13 = arith.constant 0 : index
    %c1_14 = arith.constant 1 : index
    %c0_15 = arith.constant 0 : index
    %8 = vector.load %arg1[%c0_11, %c0_12, %c0_13, %c1_14, %c0_15] : memref<4x2x9x9x4xbf16, #tpu.memory_space<vmem>>, vector<1x2x8x8x4xbf16>
    %9 = vector.shape_cast %8 : vector<1x2x8x8x4xbf16> to vector<2x8x8x4xbf16>
    %10 = vector.shape_cast %9 : vector<2x8x8x4xbf16> to vector<128x4xbf16>
    %c0_16 = arith.constant 0 : index
    %c8 = arith.constant 8 : index
    %11 = vector.load %arg10[%c0_16, %c8] : memref<128x72xbf16, #tpu.memory_space<vmem>>, vector<128x4xbf16>
    tpu.vector_store %arg10[%c0_16, %c8], %10 {strides = array<i32>} : memref<128x72xbf16, #tpu.memory_space<vmem>>, vector<128x4xbf16>,
    %c2 = arith.constant 2 : index
    %c0_17 = arith.constant 0 : index
    %c0_18 = arith.constant 0 : index
    %c0_19 = arith.constant 0 : index
    %c0_20 = arith.constant 0 : index
    %12 = vector.load %arg1[%c2, %c0_17, %c0_18, %c0_19, %c0_20] : memref<4x2x9x9x4xbf16, #tpu.memory_space<vmem>>, vector<1x2x8x8x4xbf16>
    %13 = vector.shape_cast %12 : vector<1x2x8x8x4xbf16> to vector<2x8x8x4xbf16>
    %14 = vector.shape_cast %13 : vector<2x8x8x4xbf16> to vector<128x4xbf16>
    %c0_21 = arith.constant 0 : index
    %c12 = arith.constant 12 : index
    %15 = vector.load %arg10[%c0_21, %c12] : memref<128x72xbf16, #tpu.memory_space<vmem>>, vector<128x4xbf16>
    tpu.vector_store %arg10[%c0_21, %c12], %14 {strides = array<i32>} : memref<128x72xbf16, #tpu.memory_space<vmem>>, vector<128x4xbf16>,
    %c3 = arith.constant 3 : index
    %c0_22 = arith.constant 0 : index
    %c0_23 = arith.constant 0 : index
    %c0_24 = arith.constant 0 : index
    %c0_25 = arith.constant 0 : index
    %16 = vector.load %arg1[%c3, %c0_22, %c0_23, %c0_24, %c0_25] : memref<4x2x9x9x4xbf16, #tpu.memory_space<vmem>>, vector<1x2x8x8x4xbf16>
    %17 = vector.shape_cast %16 : vector<1x2x8x8x4xbf16> to vector<2x8x8x4xbf16>
    %18 = vector.shape_cast %17 : vector<2x8x8x4xbf16> to vector<128x4xbf16>
    %c0_26 = arith.constant 0 : index
    %c16 = arith.constant 16 : index
    %19 = vector.load %arg10[%c0_26, %c16] : memref<128x72xbf16, #tpu.memory_space<vmem>>, vector<128x4xbf16>
    tpu.vector_store %arg10[%c0_26, %c16], %18 {strides = array<i32>} : memref<128x72xbf16, #tpu.memory_space<vmem>>, vector<128x4xbf16>,
    %c2_27 = arith.constant 2 : index
    %c0_28 = arith.constant 0 : index
    %c0_29 = arith.constant 0 : index
    %c1_30 = arith.constant 1 : index
    %c0_31 = arith.constant 0 : index
    %20 = vector.load %arg1[%c2_27, %c0_28, %c0_29, %c1_30, %c0_31] : memref<4x2x9x9x4xbf16, #tpu.memory_space<vmem>>, vector<1x2x8x8x4xbf16>
    %21 = vector.shape_cast %20 : vector<1x2x8x8x4xbf16> to vector<2x8x8x4xbf16>
    %22 = vector.shape_cast %21 : vector<2x8x8x4xbf16> to vector<128x4xbf16>
    %c0_32 = arith.constant 0 : index
    %c20 = arith.constant 20 : index
    %23 = vector.load %arg10[%c0_32, %c20] : memref<128x72xbf16, #tpu.memory_space<vmem>>, vector<128x4xbf16>
    tpu.vector_store %arg10[%c0_32, %c20], %22 {strides = array<i32>} : memref<128x72xbf16, #tpu.memory_space<vmem>>, vector<128x4xbf16>,
    %c0_33 = arith.constant 0 : index
    %c0_34 = arith.constant 0 : index
    %c1_35 = arith.constant 1 : index
    %c0_36 = arith.constant 0 : index
    %c0_37 = arith.constant 0 : index
    %24 = vector.load %arg1[%c0_33, %c0_34, %c1_35, %c0_36, %c0_37] : memref<4x2x9x9x4xbf16, #tpu.memory_space<vmem>>, vector<1x2x8x8x4xbf16>
    %25 = vector.shape_cast %24 : vector<1x2x8x8x4xbf16> to vector<2x8x8x4xbf16>
    %26 = vector.shape_cast %25 : vector<2x8x8x4xbf16> to vector<128x4xbf16>
    %c0_38 = arith.constant 0 : index
    %c24 = arith.constant 24 : index
    %27 = vector.load %arg10[%c0_38, %c24] : memref<128x72xbf16, #tpu.memory_space<vmem>>, vector<128x4xbf16>
    tpu.vector_store %arg10[%c0_38, %c24], %26 {strides = array<i32>} : memref<128x72xbf16, #tpu.memory_space<vmem>>, vector<128x4xbf16>,
    %c1_39 = arith.constant 1 : index
    %c0_40 = arith.constant 0 : index
    %c1_41 = arith.constant 1 : index
    %c0_42 = arith.constant 0 : index
    %c0_43 = arith.constant 0 : index
    %28 = vector.load %arg1[%c1_39, %c0_40, %c1_41, %c0_42, %c0_43] : memref<4x2x9x9x4xbf16, #tpu.memory_space<vmem>>, vector<1x2x8x8x4xbf16>
    %29 = vector.shape_cast %28 : vector<1x2x8x8x4xbf16> to vector<2x8x8x4xbf16>
    %30 = vector.shape_cast %29 : vector<2x8x8x4xbf16> to vector<128x4xbf16>
    %c0_44 = arith.constant 0 : index
    %c28 = arith.constant 28 : index
    %31 = vector.load %arg10[%c0_44, %c28] : memref<128x72xbf16, #tpu.memory_space<vmem>>, vector<128x4xbf16>
    tpu.vector_store %arg10[%c0_44, %c28], %30 {strides = array<i32>} : memref<128x72xbf16, #tpu.memory_space<vmem>>, vector<128x4xbf16>,
    %c0_45 = arith.constant 0 : index
    %c0_46 = arith.constant 0 : index
    %c1_47 = arith.constant 1 : index
    %c1_48 = arith.constant 1 : index
    %c0_49 = arith.constant 0 : index
    %32 = vector.load %arg1[%c0_45, %c0_46, %c1_47, %c1_48, %c0_49] : memref<4x2x9x9x4xbf16, #tpu.memory_space<vmem>>, vector<1x2x8x8x4xbf16>
    %33 = vector.shape_cast %32 : vector<1x2x8x8x4xbf16> to vector<2x8x8x4xbf16>
    %34 = vector.shape_cast %33 : vector<2x8x8x4xbf16> to vector<128x4xbf16>
    %c0_50 = arith.constant 0 : index
    %c32 = arith.constant 32 : index
    %35 = vector.load %arg10[%c0_50, %c32] : memref<128x72xbf16, #tpu.memory_space<vmem>>, vector<128x4xbf16>
    tpu.vector_store %arg10[%c0_50, %c32], %34 {strides = array<i32>} : memref<128x72xbf16, #tpu.memory_space<vmem>>, vector<128x4xbf16>,
    %c0_51 = arith.constant 0 : index
    %c16_52 = arith.constant 16 : index
    %36 = vector.load %arg10[%c0_51, %c16_52] : memref<128x72xbf16, #tpu.memory_space<vmem>>, vector<128x4xbf16>
    %c0_53 = arith.constant 0 : index
    %c0_54 = arith.constant 0 : index
    %37 = vector.load %arg8[%c0_53, %c0_54] : memref<4x8xbf16, #tpu.memory_space<vmem>>, vector<4x8xbf16>
    %cst = arith.constant dense<0.000000e+00> : vector<128x8xf32>
    %38 = tpu.matmul %36, %37, %cst {dimension_numbers = #tpu.dot_dimension_numbers<[1], [0], [0], [1], [0, 0, 1, 1], [], []>} : vector<128x4xbf16>, vector<4x8xbf16>, vector<128x8xf32> -> vector<128x8xf32>
    %c0_55 = arith.constant 0 : index
    %c0_56 = arith.constant 0 : index
    %39 = vector.load %arg10[%c0_55, %c0_56] : memref<128x72xbf16, #tpu.memory_space<vmem>>, vector<128x36xbf16>
    %c0_57 = arith.constant 0 : index
    %c0_58 = arith.constant 0 : index
    %40 = vector.load %arg2[%c0_57, %c0_58] : memref<36x8xbf16, #tpu.memory_space<vmem>>, vector<36x8xbf16>
    %cst_59 = arith.constant dense<0.000000e+00> : vector<128x8xf32>
    %41 = tpu.matmul %39, %40, %cst_59 {dimension_numbers = #tpu.dot_dimension_numbers<[1], [0], [0], [1], [0, 0, 1, 1], [], []>} : vector<128x36xbf16>, vector<36x8xbf16>, vector<128x8xf32> -> vector<128x8xf32>
    %c0_60 = arith.constant 0 : index
    %c0_61 = arith.constant 0 : index
    %42 = vector.load %arg3[%c0_60, %c0_61] : memref<1x8xf32, #tpu.memory_space<vmem>>, vector<1x8xf32>
    %43 = vector.broadcast %42 : vector<1x8xf32> to vector<128x8xf32>
    %44 = arith.mulf %41, %43 : vector<128x8xf32>
    %c0_62 = arith.constant 0 : index
    %c0_63 = arith.constant 0 : index
    %45 = vector.load %arg4[%c0_62, %c0_63] : memref<1x8xf32, #tpu.memory_space<vmem>>, vector<1x8xf32>
    %46 = vector.broadcast %45 : vector<1x8xf32> to vector<128x8xf32>
    %47 = arith.addf %44, %46 : vector<128x8xf32>
    %cst_64 = arith.constant 0.000000e+00 : f32
    %48 = vector.broadcast %cst_64 : f32 to vector<128x8xf32>
    %49 = arith.maximumf %47, %48 : vector<128x8xf32>
    %cst_65 = arith.constant 0.000000e+00 : bf16
    %50 = vector.broadcast %cst_65 : bf16 to vector<2x1x10x8xbf16>
    %cst_66 = arith.constant 0.000000e+00 : bf16
    %51 = vector.broadcast %cst_66 : bf16 to vector<2x8x1x8xbf16>
    %c0_67 = arith.constant 0 : index
    %c0_68 = arith.constant 0 : index
    %c0_69 = arith.constant 0 : index
    %c0_70 = arith.constant 0 : index
    %52 = vector.load %arg11[%c0_67, %c0_68, %c0_69, %c0_70] : memref<2x10x10x8xbf16, #tpu.memory_space<vmem>>, vector<2x1x10x8xbf16>
    tpu.vector_store %arg11[%c0_67, %c0_68, %c0_69, %c0_70], %50 {strides = array<i32>} : memref<2x10x10x8xbf16, #tpu.memory_space<vmem>>, vector<2x1x10x8xbf16>,
    %c0_71 = arith.constant 0 : index
    %c9 = arith.constant 9 : index
    %c0_72 = arith.constant 0 : index
    %c0_73 = arith.constant 0 : index
    %53 = vector.load %arg11[%c0_71, %c9, %c0_72, %c0_73] : memref<2x10x10x8xbf16, #tpu.memory_space<vmem>>, vector<2x1x10x8xbf16>
    tpu.vector_store %arg11[%c0_71, %c9, %c0_72, %c0_73], %50 {strides = array<i32>} : memref<2x10x10x8xbf16, #tpu.memory_space<vmem>>, vector<2x1x10x8xbf16>,
    %c0_74 = arith.constant 0 : index
    %c1_75 = arith.constant 1 : index
    %c0_76 = arith.constant 0 : index
    %c0_77 = arith.constant 0 : index
    %54 = vector.load %arg11[%c0_74, %c1_75, %c0_76, %c0_77] : memref<2x10x10x8xbf16, #tpu.memory_space<vmem>>, vector<2x8x1x8xbf16>
    tpu.vector_store %arg11[%c0_74, %c1_75, %c0_76, %c0_77], %51 {strides = array<i32>} : memref<2x10x10x8xbf16, #tpu.memory_space<vmem>>, vector<2x8x1x8xbf16>,
    %c0_78 = arith.constant 0 : index
    %c1_79 = arith.constant 1 : index
    %c9_80 = arith.constant 9 : index
    %c0_81 = arith.constant 0 : index
    %55 = vector.load %arg11[%c0_78, %c1_79, %c9_80, %c0_81] : memref<2x10x10x8xbf16, #tpu.memory_space<vmem>>, vector<2x8x1x8xbf16>
    tpu.vector_store %arg11[%c0_78, %c1_79, %c9_80, %c0_81], %51 {strides = array<i32>} : memref<2x10x10x8xbf16, #tpu.memory_space<vmem>>, vector<2x8x1x8xbf16>,
    %56 = vector.shape_cast %49 : vector<128x8xf32> to vector<2x8x8x8xf32>
    %57 = arith.truncf %56 : vector<2x8x8x8xf32> to vector<2x8x8x8xbf16>
    %c0_82 = arith.constant 0 : index
    %c1_83 = arith.constant 1 : index
    %c1_84 = arith.constant 1 : index
    %c0_85 = arith.constant 0 : index
    %58 = vector.load %arg11[%c0_82, %c1_83, %c1_84, %c0_85] : memref<2x10x10x8xbf16, #tpu.memory_space<vmem>>, vector<2x8x8x8xbf16>
    tpu.vector_store %arg11[%c0_82, %c1_83, %c1_84, %c0_85], %57 {strides = array<i32>} : memref<2x10x10x8xbf16, #tpu.memory_space<vmem>>, vector<2x8x8x8xbf16>,
    %c0_86 = arith.constant 0 : index
    %c0_87 = arith.constant 0 : index
    %c0_88 = arith.constant 0 : index
    %c0_89 = arith.constant 0 : index
    %59 = vector.load %arg11[%c0_86, %c0_87, %c0_88, %c0_89] : memref<2x10x10x8xbf16, #tpu.memory_space<vmem>>, vector<2x8x8x8xbf16>
    %60 = vector.shape_cast %59 : vector<2x8x8x8xbf16> to vector<128x8xbf16>
    %c0_90 = arith.constant 0 : index
    %c0_91 = arith.constant 0 : index
    %61 = vector.load %arg10[%c0_90, %c0_91] : memref<128x72xbf16, #tpu.memory_space<vmem>>, vector<128x8xbf16>
    tpu.vector_store %arg10[%c0_90, %c0_91], %60 {strides = array<i32>} : memref<128x72xbf16, #tpu.memory_space<vmem>>, vector<128x8xbf16>,
    %c0_92 = arith.constant 0 : index
    %c0_93 = arith.constant 0 : index
    %c1_94 = arith.constant 1 : index
    %c0_95 = arith.constant 0 : index
    %62 = vector.load %arg11[%c0_92, %c0_93, %c1_94, %c0_95] : memref<2x10x10x8xbf16, #tpu.memory_space<vmem>>, vector<2x8x8x8xbf16>
    %63 = vector.shape_cast %62 : vector<2x8x8x8xbf16> to vector<128x8xbf16>
    %c0_96 = arith.constant 0 : index
    %c8_97 = arith.constant 8 : index
    %64 = vector.load %arg10[%c0_96, %c8_97] : memref<128x72xbf16, #tpu.memory_space<vmem>>, vector<128x8xbf16>
    tpu.vector_store %arg10[%c0_96, %c8_97], %63 {strides = array<i32>} : memref<128x72xbf16, #tpu.memory_space<vmem>>, vector<128x8xbf16>,
    %c0_98 = arith.constant 0 : index
    %c0_99 = arith.constant 0 : index
    %c2_100 = arith.constant 2 : index
    %c0_101 = arith.constant 0 : index
    %65 = vector.load %arg11[%c0_98, %c0_99, %c2_100, %c0_101] : memref<2x10x10x8xbf16, #tpu.memory_space<vmem>>, vector<2x8x8x8xbf16>
    %66 = vector.shape_cast %65 : vector<2x8x8x8xbf16> to vector<128x8xbf16>
    %c0_102 = arith.constant 0 : index
    %c16_103 = arith.constant 16 : index
    %67 = vector.load %arg10[%c0_102, %c16_103] : memref<128x72xbf16, #tpu.memory_space<vmem>>, vector<128x8xbf16>
    tpu.vector_store %arg10[%c0_102, %c16_103], %66 {strides = array<i32>} : memref<128x72xbf16, #tpu.memory_space<vmem>>, vector<128x8xbf16>,
    %c0_104 = arith.constant 0 : index
    %c1_105 = arith.constant 1 : index
    %c0_106 = arith.constant 0 : index
    %c0_107 = arith.constant 0 : index
    %68 = vector.load %arg11[%c0_104, %c1_105, %c0_106, %c0_107] : memref<2x10x10x8xbf16, #tpu.memory_space<vmem>>, vector<2x8x8x8xbf16>
    %69 = vector.shape_cast %68 : vector<2x8x8x8xbf16> to vector<128x8xbf16>
    %c0_108 = arith.constant 0 : index
    %c24_109 = arith.constant 24 : index
    %70 = vector.load %arg10[%c0_108, %c24_109] : memref<128x72xbf16, #tpu.memory_space<vmem>>, vector<128x8xbf16>
    tpu.vector_store %arg10[%c0_108, %c24_109], %69 {strides = array<i32>} : memref<128x72xbf16, #tpu.memory_space<vmem>>, vector<128x8xbf16>,
    %c0_110 = arith.constant 0 : index
    %c1_111 = arith.constant 1 : index
    %c1_112 = arith.constant 1 : index
    %c0_113 = arith.constant 0 : index
    %71 = vector.load %arg11[%c0_110, %c1_111, %c1_112, %c0_113] : memref<2x10x10x8xbf16, #tpu.memory_space<vmem>>, vector<2x8x8x8xbf16>
    %72 = vector.shape_cast %71 : vector<2x8x8x8xbf16> to vector<128x8xbf16>
    %c0_114 = arith.constant 0 : index
    %c32_115 = arith.constant 32 : index
    %73 = vector.load %arg10[%c0_114, %c32_115] : memref<128x72xbf16, #tpu.memory_space<vmem>>, vector<128x8xbf16>
    tpu.vector_store %arg10[%c0_114, %c32_115], %72 {strides = array<i32>} : memref<128x72xbf16, #tpu.memory_space<vmem>>, vector<128x8xbf16>,
    %c0_116 = arith.constant 0 : index
    %c1_117 = arith.constant 1 : index
    %c2_118 = arith.constant 2 : index
    %c0_119 = arith.constant 0 : index
    %74 = vector.load %arg11[%c0_116, %c1_117, %c2_118, %c0_119] : memref<2x10x10x8xbf16, #tpu.memory_space<vmem>>, vector<2x8x8x8xbf16>
    %75 = vector.shape_cast %74 : vector<2x8x8x8xbf16> to vector<128x8xbf16>
    %c0_120 = arith.constant 0 : index
    %c40 = arith.constant 40 : index
    %76 = vector.load %arg10[%c0_120, %c40] : memref<128x72xbf16, #tpu.memory_space<vmem>>, vector<128x8xbf16>
    tpu.vector_store %arg10[%c0_120, %c40], %75 {strides = array<i32>} : memref<128x72xbf16, #tpu.memory_space<vmem>>, vector<128x8xbf16>,
    %c0_121 = arith.constant 0 : index
    %c2_122 = arith.constant 2 : index
    %c0_123 = arith.constant 0 : index
    %c0_124 = arith.constant 0 : index
    %77 = vector.load %arg11[%c0_121, %c2_122, %c0_123, %c0_124] : memref<2x10x10x8xbf16, #tpu.memory_space<vmem>>, vector<2x8x8x8xbf16>
    %78 = vector.shape_cast %77 : vector<2x8x8x8xbf16> to vector<128x8xbf16>
    %c0_125 = arith.constant 0 : index
    %c48 = arith.constant 48 : index
    %79 = vector.load %arg10[%c0_125, %c48] : memref<128x72xbf16, #tpu.memory_space<vmem>>, vector<128x8xbf16>
    tpu.vector_store %arg10[%c0_125, %c48], %78 {strides = array<i32>} : memref<128x72xbf16, #tpu.memory_space<vmem>>, vector<128x8xbf16>,
    %c0_126 = arith.constant 0 : index
    %c2_127 = arith.constant 2 : index
    %c1_128 = arith.constant 1 : index
    %c0_129 = arith.constant 0 : index
    %80 = vector.load %arg11[%c0_126, %c2_127, %c1_128, %c0_129] : memref<2x10x10x8xbf16, #tpu.memory_space<vmem>>, vector<2x8x8x8xbf16>
    %81 = vector.shape_cast %80 : vector<2x8x8x8xbf16> to vector<128x8xbf16>
    %c0_130 = arith.constant 0 : index
    %c56 = arith.constant 56 : index
    %82 = vector.load %arg10[%c0_130, %c56] : memref<128x72xbf16, #tpu.memory_space<vmem>>, vector<128x8xbf16>
    tpu.vector_store %arg10[%c0_130, %c56], %81 {strides = array<i32>} : memref<128x72xbf16, #tpu.memory_space<vmem>>, vector<128x8xbf16>,
    %c0_131 = arith.constant 0 : index
    %c2_132 = arith.constant 2 : index
    %c2_133 = arith.constant 2 : index
    %c0_134 = arith.constant 0 : index
    %83 = vector.load %arg11[%c0_131, %c2_132, %c2_133, %c0_134] : memref<2x10x10x8xbf16, #tpu.memory_space<vmem>>, vector<2x8x8x8xbf16>
    %84 = vector.shape_cast %83 : vector<2x8x8x8xbf16> to vector<128x8xbf16>
    %c0_135 = arith.constant 0 : index
    %c64 = arith.constant 64 : index
    %85 = vector.load %arg10[%c0_135, %c64] : memref<128x72xbf16, #tpu.memory_space<vmem>>, vector<128x8xbf16>
    tpu.vector_store %arg10[%c0_135, %c64], %84 {strides = array<i32>} : memref<128x72xbf16, #tpu.memory_space<vmem>>, vector<128x8xbf16>,
    %c0_136 = arith.constant 0 : index
    %c0_137 = arith.constant 0 : index
    %86 = vector.load %arg10[%c0_136, %c0_137] : memref<128x72xbf16, #tpu.memory_space<vmem>>, vector<128x72xbf16>
    %c0_138 = arith.constant 0 : index
    %c0_139 = arith.constant 0 : index
    %87 = vector.load %arg5[%c0_138, %c0_139] : memref<72x8xbf16, #tpu.memory_space<vmem>>, vector<72x8xbf16>
    %cst_140 = arith.constant dense<0.000000e+00> : vector<128x8xf32>
    %88 = tpu.matmul %86, %87, %cst_140 {dimension_numbers = #tpu.dot_dimension_numbers<[1], [0], [0], [1], [0, 0, 1, 1], [], []>} : vector<128x72xbf16>, vector<72x8xbf16>, vector<128x8xf32> -> vector<128x8xf32>
    %c0_141 = arith.constant 0 : index
    %c0_142 = arith.constant 0 : index
    %89 = vector.load %arg6[%c0_141, %c0_142] : memref<1x8xf32, #tpu.memory_space<vmem>>, vector<1x8xf32>
    %90 = vector.broadcast %89 : vector<1x8xf32> to vector<128x8xf32>
    %91 = arith.mulf %88, %90 : vector<128x8xf32>
    %c0_143 = arith.constant 0 : index
    %c0_144 = arith.constant 0 : index
    %92 = vector.load %arg7[%c0_143, %c0_144] : memref<1x8xf32, #tpu.memory_space<vmem>>, vector<1x8xf32>
    %93 = vector.broadcast %92 : vector<1x8xf32> to vector<128x8xf32>
    %94 = arith.addf %91, %93 : vector<128x8xf32>
    %95 = arith.addf %94, %38 : vector<128x8xf32>
    %cst_145 = arith.constant 0.000000e+00 : f32
    %96 = vector.broadcast %cst_145 : f32 to vector<128x8xf32>
    %97 = arith.maximumf %95, %96 : vector<128x8xf32>
    %c0_146 = arith.constant 0 : index
    %c0_147 = arith.constant 0 : index
    %98 = vector.load %arg9[%c0_146, %c0_147] : memref<128x8xf32, #tpu.memory_space<vmem>>, vector<128x8xf32>
    tpu.vector_store %arg9[%c0_146, %c0_147], %97 {strides = array<i32>} : memref<128x8xf32, #tpu.memory_space<vmem>>, vector<128x8xf32>,
    return
  }
  func.func @transform_0(%arg0: i32) -> (i32, i32, i32, i32, i32) {
    %c0_i32 = arith.constant 0 : i32
    %c0_i32_0 = arith.constant 0 : i32
    %c0_i32_1 = arith.constant 0 : i32
    %c0_i32_2 = arith.constant 0 : i32
    %c0_i32_3 = arith.constant 0 : i32
    return %c0_i32, %arg0, %c0_i32_0, %c0_i32_1, %c0_i32_2 : i32, i32, i32, i32, i32
  }
  func.func @transform_1(%arg0: i32) -> (i32, i32) {
    %c0_i32 = arith.constant 0 : i32
    %c0_i32_0 = arith.constant 0 : i32
    %c0_i32_1 = arith.constant 0 : i32
    return %c0_i32, %c0_i32_0 : i32, i32
  }
  func.func @transform_2(%arg0: i32) -> (i32, i32) {
    %c0_i32 = arith.constant 0 : i32
    %c0_i32_0 = arith.constant 0 : i32
    %c0_i32_1 = arith.constant 0 : i32
    return %c0_i32, %c0_i32_0 : i32, i32
  }
  func.func @transform_3(%arg0: i32) -> (i32, i32) {
    %c0_i32 = arith.constant 0 : i32
    %c0_i32_0 = arith.constant 0 : i32
    %c0_i32_1 = arith.constant 0 : i32
    return %c0_i32, %c0_i32_0 : i32, i32
  }
  func.func @transform_4(%arg0: i32) -> (i32, i32) {
    %c0_i32 = arith.constant 0 : i32
    %c0_i32_0 = arith.constant 0 : i32
    %c0_i32_1 = arith.constant 0 : i32
    return %c0_i32, %c0_i32_0 : i32, i32
  }
  func.func @transform_5(%arg0: i32) -> (i32, i32) {
    %c0_i32 = arith.constant 0 : i32
    %c0_i32_0 = arith.constant 0 : i32
    %c0_i32_1 = arith.constant 0 : i32
    return %c0_i32, %c0_i32_0 : i32, i32
  }
  func.func @transform_6(%arg0: i32) -> (i32, i32) {
    %c0_i32 = arith.constant 0 : i32
    %c0_i32_0 = arith.constant 0 : i32
    %c0_i32_1 = arith.constant 0 : i32
    return %c0_i32, %c0_i32_0 : i32, i32
  }
  func.func @transform_7(%arg0: i32) -> (i32, i32) {
    %c0_i32 = arith.constant 0 : i32
    %c0_i32_0 = arith.constant 0 : i32
    %c0_i32_1 = arith.constant 0 : i32
    return %c0_i32, %c0_i32_0 : i32, i32
  }
  func.func @transform_8(%arg0: i32) -> (i32, i32) {
    %c0_i32 = arith.constant 0 : i32
    %c0_i32_0 = arith.constant 0 : i32
    return %arg0, %c0_i32 : i32, i32
  }
}

</mosaic_0001>

<llo_original>
// kernel: tpu_custom_call.1
$region0: #{tpu_custom_call.1}
  #allocation0 [shape = 'u32[]', space=smem, size = 0x4, offset = 0x4, fixed_abs, tag = 'smem constant byte address 0x4 - core index']
  #allocation1 [shape = 'u32[144,128]{1,0:T(1,128)}', space=vmem, size = 0x12000, scoped, tag = 'internal scratch']
  #allocation2 [shape = 'bf16[128,72]{1,0:T(16,128)(2,1)}', space=vmem, size = 0x8000, scoped, tag = 'scratch operand']
  #allocation3 [shape = 'bf16[2,10,10,8]{3,2,1,0:T(8,128)(2,1)}', space=vmem, size = 0x14000, scoped, tag = 'scratch operand']
  %s0 = inlined_call_operand.vmem [shape: bf16[4,2,9,9,4], index: 0, kind: input, shape index: {}]
  %s1 = inlined_call_operand.vmem [shape: bf16[36,8], index: 1, kind: input, shape index: {}]
  %s2 = inlined_call_operand.vmem [shape: f32[1,8], index: 2, kind: input, shape index: {}]
  %s3 = inlined_call_operand.vmem [shape: f32[1,8], index: 3, kind: input, shape index: {}]
  %s4 = inlined_call_operand.vmem [shape: bf16[72,8], index: 4, kind: input, shape index: {}]
  %s5 = inlined_call_operand.vmem [shape: f32[1,8], index: 5, kind: input, shape index: {}]
  %s6 = inlined_call_operand.vmem [shape: f32[1,8], index: 6, kind: input, shape index: {}]
  %s7 = inlined_call_operand.vmem [shape: bf16[4,8], index: 7, kind: input, shape index: {}]
  %s8 = inlined_call_operand.vmem [shape: f32[128,8], index: 8, kind: output, shape index: {}]
  %s9 = sld [smem:[#allocation0]]
  $region42: #{tpu_custom_call.1} parent=0
    _
  %s11 = ssub.s32 1, %s9
  %s12 = scalar_select 0, %s11, %s9
  // Predicated region
  $region2: #{tpu_custom_call.1} parent=0 // pred_check
    _
  $region3: #{tpu_custom_call.1} parent=0 // pred_check_branch
    %14 = sbr.rel (0) target = $region5
  $region4: #{tpu_custom_call.1} parent=0 // pred_region
    _
  $region5: #{tpu_custom_call.1} parent=0 // pred_fallthru
    _
  // Predicated region
  $region6: #{tpu_custom_call.1} parent=0 // pred_check
    _
  $region7: #{tpu_custom_call.1} parent=0 // pred_check_branch
    %16 = sbr.rel (0) target = $region9
  $region8: #{tpu_custom_call.1} parent=0 // pred_region
    _
  $region9: #{tpu_custom_call.1} parent=0 // pred_fallthru
    _
  // Predicated region
  $region10: #{tpu_custom_call.1} parent=0 // pred_check
    _
  $region11: #{tpu_custom_call.1} parent=0 // pred_check_branch
    %18 = sbr.rel (0) target = $region13
  $region12: #{tpu_custom_call.1} parent=0 // pred_region
    _
  $region13: #{tpu_custom_call.1} parent=0 // pred_fallthru
    _
  // Predicated region
  $region14: #{tpu_custom_call.1} parent=0 // pred_check
    _
  $region15: #{tpu_custom_call.1} parent=0 // pred_check_branch
    %20 = sbr.rel (0) target = $region17
  $region16: #{tpu_custom_call.1} parent=0 // pred_region
    _
  $region17: #{tpu_custom_call.1} parent=0 // pred_fallthru
    _
  // Predicated region
  $region18: #{tpu_custom_call.1} parent=0 // pred_check
    _
  $region19: #{tpu_custom_call.1} parent=0 // pred_check_branch
    %22 = sbr.rel (0) target = $region21
  $region20: #{tpu_custom_call.1} parent=0 // pred_region
    _
  $region21: #{tpu_custom_call.1} parent=0 // pred_fallthru
    _
  // Predicated region
  $region22: #{tpu_custom_call.1} parent=0 // pred_check
    _
  $region23: #{tpu_custom_call.1} parent=0 // pred_check_branch
    %24 = sbr.rel (0) target = $region25
  $region24: #{tpu_custom_call.1} parent=0 // pred_region
    _
  $region25: #{tpu_custom_call.1} parent=0 // pred_fallthru
    _
  // Predicated region
  $region26: #{tpu_custom_call.1} parent=0 // pred_check
    _
  $region27: #{tpu_custom_call.1} parent=0 // pred_check_branch
    %26 = sbr.rel (0) target = $region29
  $region28: #{tpu_custom_call.1} parent=0 // pred_region
    _
  $region29: #{tpu_custom_call.1} parent=0 // pred_fallthru
    _
  // Predicated region
  $region30: #{tpu_custom_call.1} parent=0 // pred_check
    _
  $region31: #{tpu_custom_call.1} parent=0 // pred_check_branch
    %28 = sbr.rel (0) target = $region33
  $region32: #{tpu_custom_call.1} parent=0 // pred_region
    _
  $region33: #{tpu_custom_call.1} parent=0 // pred_fallthru
    _
  %v30 = vld [vmem:[%s0] sm:$0xf]
  %v31 = vld [vmem:[%s0 + $0x8] sm:$0xf]
  %v32 = vld [vmem:[%s0 + $0x10] sm:$0xf]
  %v33 = vld [vmem:[%s0 + $0x18] sm:$0xf]
  %v34 = vld [vmem:[%s0 + $0x20] sm:$0xf]
  %v35 = vld [vmem:[%s0 + $0x28] sm:$0xf]
  %v36 = vld [vmem:[%s0 + $0x30] sm:$0xf]
  %v37 = vld [vmem:[%s0 + $0x38] sm:$0xf]
  %v38 = vld [vmem:[%s0 + $0x48] sm:$0xf]
  %v39 = vld [vmem:[%s0 + $0x50] sm:$0xf]
  %v40 = vld [vmem:[%s0 + $0x58] sm:$0xf]
  %v41 = vld [vmem:[%s0 + $0x60] sm:$0xf]
  %v42 = vld [vmem:[%s0 + $0x68] sm:$0xf]
  %v43 = vld [vmem:[%s0 + $0x70] sm:$0xf]
  %v44 = vld [vmem:[%s0 + $0x78] sm:$0xf]
  %v45 = vld [vmem:[%s0 + $0x80] sm:$0xf]
  %v62 = vunpack.c.l.b16 %v30
  %v63 = vunpack.c.l.b16 %v31
  %v64 = vunpack.c.l.b16 %v32
  %v65 = vunpack.c.l.b16 %v33
  %v66 = vunpack.c.l.b16 %v34
  %v67 = vunpack.c.l.b16 %v35
  %v68 = vunpack.c.l.b16 %v36
  %v69 = vunpack.c.l.b16 %v37
  %v70 = vunpack.c.l.b16 %v38
  %v71 = vunpack.c.l.b16 %v39
  %v72 = vunpack.c.l.b16 %v40
  %v73 = vunpack.c.l.b16 %v41
  %v74 = vunpack.c.l.b16 %v42
  %v75 = vunpack.c.l.b16 %v43
  %v76 = vunpack.c.l.b16 %v44
  %v77 = vunpack.c.l.b16 %v45
  %v78 = vpack.c.b16 %v63, %v62
  %v79 = vpack.c.b16 %v65, %v64
  %v80 = vpack.c.b16 %v67, %v66
  %v81 = vpack.c.b16 %v69, %v68
  %v82 = vpack.c.b16 %v71, %v70
  %v83 = vpack.c.b16 %v73, %v72
  %v84 = vpack.c.b16 %v75, %v74
  %v85 = vpack.c.b16 %v77, %v76
  %vm94 = vcmask 31744
  %95 = vst.msk [vmem:[#allocation2] sm:$0xff] %vm94, %v78
  %96 = vst.msk [vmem:[#allocation2 + $0x8] sm:$0xff] %vm94, %v79
  %97 = vst.msk [vmem:[#allocation2 + $0x10] sm:$0xff] %vm94, %v80
  %98 = vst.msk [vmem:[#allocation2 + $0x18] sm:$0xff] %vm94, %v81
  %99 = vst.msk [vmem:[#allocation2 + $0x20] sm:$0xff] %vm94, %v82
  %100 = vst.msk [vmem:[#allocation2 + $0x28] sm:$0xff] %vm94, %v83
  %101 = vst.msk [vmem:[#allocation2 + $0x30] sm:$0xff] %vm94, %v84
  %102 = vst.msk [vmem:[#allocation2 + $0x38] sm:$0xff] %vm94, %v85
  %s103 = scalar_lea.vmem %s0, 144
  %v104 = vld [vmem:[%s103] sm:$0xf]
  %v105 = vld [vmem:[%s103 + $0x8] sm:$0xf]
  %v106 = vld [vmem:[%s103 + $0x10] sm:$0xf]
  %v107 = vld [vmem:[%s103 + $0x18] sm:$0xf]
  %v108 = vld [vmem:[%s103 + $0x20] sm:$0xf]
  %v109 = vld [vmem:[%s103 + $0x28] sm:$0xf]
  %v110 = vld [vmem:[%s103 + $0x30] sm:$0xf]
  %v111 = vld [vmem:[%s103 + $0x38] sm:$0xf]
  %v112 = vld [vmem:[%s103 + $0x48] sm:$0xf]
  %v113 = vld [vmem:[%s103 + $0x50] sm:$0xf]
  %v114 = vld [vmem:[%s103 + $0x58] sm:$0xf]
  %v115 = vld [vmem:[%s103 + $0x60] sm:$0xf]
  %v116 = vld [vmem:[%s103 + $0x68] sm:$0xf]
  %v117 = vld [vmem:[%s103 + $0x70] sm:$0xf]
  %v118 = vld [vmem:[%s103 + $0x78] sm:$0xf]
  %v119 = vld [vmem:[%s103 + $0x80] sm:$0xf]
  %v136 = vunpack.c.l.b16 %v104
  %v137 = vunpack.c.l.b16 %v105
  %v138 = vunpack.c.l.b16 %v106
  %v139 = vunpack.c.l.b16 %v107
  %v140 = vunpack.c.l.b16 %v108
  %v141 = vunpack.c.l.b16 %v109
  %v142 = vunpack.c.l.b16 %v110
  %v143 = vunpack.c.l.b16 %v111
  %v144 = vunpack.c.l.b16 %v112
  %v145 = vunpack.c.l.b16 %v113
  %v146 = vunpack.c.l.b16 %v114
  %v147 = vunpack.c.l.b16 %v115
  %v148 = vunpack.c.l.b16 %v116
  %v149 = vunpack.c.l.b16 %v117
  %v150 = vunpack.c.l.b16 %v118
  %v151 = vunpack.c.l.b16 %v119
  %v152 = vpack.c.b16 %v137, %v136
  %v153 = vpack.c.b16 %v139, %v138
  %v154 = vpack.c.b16 %v141, %v140
  %v155 = vpack.c.b16 %v143, %v142
  %v156 = vpack.c.b16 %v145, %v144
  %v157 = vpack.c.b16 %v147, %v146
  %v158 = vpack.c.b16 %v149, %v148
  %v159 = vpack.c.b16 %v151, %v150
  %160 = vrot.lane.b32.xlu0 %v152, 4
  %v161 = vpop.permute.xlu0 %160
  %162 = vrot.lane.b32.xlu0 %v153, 4
  %v163 = vpop.permute.xlu0 %162
  %164 = vrot.lane.b32.xlu0 %v154, 4
  %v165 = vpop.permute.xlu0 %164
  %166 = vrot.lane.b32.xlu0 %v155, 4
  %v167 = vpop.permute.xlu0 %166
  %168 = vrot.lane.b32.xlu0 %v156, 4
  %v169 = vpop.permute.xlu0 %168
  %170 = vrot.lane.b32.xlu0 %v157, 4
  %v171 = vpop.permute.xlu0 %170
  %172 = vrot.lane.b32.xlu0 %v158, 4
  %v173 = vpop.permute.xlu0 %172
  %174 = vrot.lane.b32.xlu0 %v159, 4
  %v175 = vpop.permute.xlu0 %174
  %vm184 = vcmask 64544
  %185 = vst.msk [vmem:[#allocation2] sm:$0xff] %vm184, %v161
  %186 = vst.msk [vmem:[#allocation2 + $0x8] sm:$0xff] %vm184, %v163
  %187 = vst.msk [vmem:[#allocation2 + $0x10] sm:$0xff] %vm184, %v165
  %188 = vst.msk [vmem:[#allocation2 + $0x18] sm:$0xff] %vm184, %v167
  %189 = vst.msk [vmem:[#allocation2 + $0x20] sm:$0xff] %vm184, %v169
  %190 = vst.msk [vmem:[#allocation2 + $0x28] sm:$0xff] %vm184, %v171
  %191 = vst.msk [vmem:[#allocation2 + $0x30] sm:$0xff] %vm184, %v173
  %192 = vst.msk [vmem:[#allocation2 + $0x38] sm:$0xff] %vm184, %v175
  %v193 = vld [vmem:[%s0] sm:$0xf]
  %v194 = vld [vmem:[%s0 + $0x4] sm:$0x1]
  %v195 = vld [vmem:[%s0 + $0x8] sm:$0xf]
  %v196 = vld [vmem:[%s0 + $0xc] sm:$0x1]
  %v197 = vld [vmem:[%s0 + $0x10] sm:$0xf]
  %v198 = vld [vmem:[%s0 + $0x14] sm:$0x1]
  %v199 = vld [vmem:[%s0 + $0x18] sm:$0xf]
  %v200 = vld [vmem:[%s0 + $0x1c] sm:$0x1]
  %v201 = vld [vmem:[%s0 + $0x20] sm:$0xf]
  %v202 = vld [vmem:[%s0 + $0x24] sm:$0x1]
  %v203 = vld [vmem:[%s0 + $0x28] sm:$0xf]
  %v204 = vld [vmem:[%s0 + $0x2c] sm:$0x1]
  %v205 = vld [vmem:[%s0 + $0x30] sm:$0xf]
  %v206 = vld [vmem:[%s0 + $0x34] sm:$0x1]
  %v207 = vld [vmem:[%s0 + $0x38] sm:$0xf]
  %v208 = vld [vmem:[%s0 + $0x3c] sm:$0x1]
  %v209 = vld [vmem:[%s0 + $0x48] sm:$0xf]
  %v210 = vld [vmem:[%s0 + $0x4c] sm:$0x1]
  %v211 = vld [vmem:[%s0 + $0x50] sm:$0xf]
  %v212 = vld [vmem:[%s0 + $0x54] sm:$0x1]
  %v213 = vld [vmem:[%s0 + $0x58] sm:$0xf]
  %v214 = vld [vmem:[%s0 + $0x5c] sm:$0x1]
  %v215 = vld [vmem:[%s0 + $0x60] sm:$0xf]
  %v216 = vld [vmem:[%s0 + $0x64] sm:$0x1]
  %v217 = vld [vmem:[%s0 + $0x68] sm:$0xf]
  %v218 = vld [vmem:[%s0 + $0x6c] sm:$0x1]
  %v219 = vld [vmem:[%s0 + $0x70] sm:$0xf]
  %v220 = vld [vmem:[%s0 + $0x74] sm:$0x1]
  %v221 = vld [vmem:[%s0 + $0x78] sm:$0xf]
  %v222 = vld [vmem:[%s0 + $0x7c] sm:$0x1]
  %v223 = vld [vmem:[%s0 + $0x80] sm:$0xf]
  %v224 = vld [vmem:[%s0 + $0x84] sm:$0x1]
  %vm225 = vsmask.f32 3328
  %vm226 = vsmask.f32 7440
  %vm227 = vmor %vm225, %vm226
  %v229 = vshrl.u32 %v193, 16
  %v231 = vrot.slane %v229, 4
  %v232 = vshll.u32 %v193, 16
  %v234 = vrot.slane %v232, 5
  %v235 = vor.u32 %v231, %v234
  %v236 = vrot.slane %v235, 4
  %v238 = vshll.u32 %v194, 16
  %v240 = vrot.slane %v238, 5
  %v241 = vsel %vm227, %v236, %v240
  %v243 = vshrl.u32 %v195, 16
  %v245 = vrot.slane %v243, 4
  %v246 = vshll.u32 %v195, 16
  %v248 = vrot.slane %v246, 5
  %v249 = vor.u32 %v245, %v248
  %v250 = vrot.slane %v249, 4
  %v252 = vshll.u32 %v196, 16
  %v254 = vrot.slane %v252, 5
  %v255 = vsel %vm227, %v250, %v254
  %v257 = vshrl.u32 %v197, 16
  %v259 = vrot.slane %v257, 4
  %v260 = vshll.u32 %v197, 16
  %v262 = vrot.slane %v260, 5
  %v263 = vor.u32 %v259, %v262
  %v264 = vrot.slane %v263, 4
  %v266 = vshll.u32 %v198, 16
  %v268 = vrot.slane %v266, 5
  %v269 = vsel %vm227, %v264, %v268
  %v271 = vshrl.u32 %v199, 16
  %v273 = vrot.slane %v271, 4
  %v274 = vshll.u32 %v199, 16
  %v276 = vrot.slane %v274, 5
  %v277 = vor.u32 %v273, %v276
  %v278 = vrot.slane %v277, 4
  %v280 = vshll.u32 %v200, 16
  %v282 = vrot.slane %v280, 5
  %v283 = vsel %vm227, %v278, %v282
  %v285 = vshrl.u32 %v201, 16
  %v287 = vrot.slane %v285, 4
  %v288 = vshll.u32 %v201, 16
  %v290 = vrot.slane %v288, 5
  %v291 = vor.u32 %v287, %v290
  %v292 = vrot.slane %v291, 4
  %v294 = vshll.u32 %v202, 16
  %v296 = vrot.slane %v294, 5
  %v297 = vsel %vm227, %v292, %v296
  %v299 = vshrl.u32 %v203, 16
  %v301 = vrot.slane %v299, 4
  %v302 = vshll.u32 %v203, 16
  %v304 = vrot.slane %v302, 5
  %v305 = vor.u32 %v301, %v304
  %v306 = vrot.slane %v305, 4
  %v308 = vshll.u32 %v204, 16
  %v310 = vrot.slane %v308, 5
  %v311 = vsel %vm227, %v306, %v310
  %v313 = vshrl.u32 %v205, 16
  %v315 = vrot.slane %v313, 4
  %v316 = vshll.u32 %v205, 16
  %v318 = vrot.slane %v316, 5
  %v319 = vor.u32 %v315, %v318
  %v320 = vrot.slane %v319, 4
  %v322 = vshll.u32 %v206, 16
  %v324 = vrot.slane %v322, 5
  %v325 = vsel %vm227, %v320, %v324
  %v327 = vshrl.u32 %v207, 16
  %v329 = vrot.slane %v327, 4
  %v330 = vshll.u32 %v207, 16
  %v332 = vrot.slane %v330, 5
  %v333 = vor.u32 %v329, %v332
  %v334 = vrot.slane %v333, 4
  %v336 = vshll.u32 %v208, 16
  %v338 = vrot.slane %v336, 5
  %v339 = vsel %vm227, %v334, %v338
  %v341 = vshrl.u32 %v209, 16
  %v343 = vrot.slane %v341, 4
  %v344 = vshll.u32 %v209, 16
  %v346 = vrot.slane %v344, 5
  %v347 = vor.u32 %v343, %v346
  %v348 = vrot.slane %v347, 4
  %v350 = vshll.u32 %v210, 16
  %v352 = vrot.slane %v350, 5
  %v353 = vsel %vm227, %v348, %v352
  %v355 = vshrl.u32 %v211, 16
  %v357 = vrot.slane %v355, 4
  %v358 = vshll.u32 %v211, 16
  %v360 = vrot.slane %v358, 5
  %v361 = vor.u32 %v357, %v360
  %v362 = vrot.slane %v361, 4
  %v364 = vshll.u32 %v212, 16
  %v366 = vrot.slane %v364, 5
  %v367 = vsel %vm227, %v362, %v366
  %v369 = vshrl.u32 %v213, 16
  %v371 = vrot.slane %v369, 4
  %v372 = vshll.u32 %v213, 16
  %v374 = vrot.slane %v372, 5
  %v375 = vor.u32 %v371, %v374
  %v376 = vrot.slane %v375, 4
  %v378 = vshll.u32 %v214, 16
  %v380 = vrot.slane %v378, 5
  %v381 = vsel %vm227, %v376, %v380
  %v383 = vshrl.u32 %v215, 16
  %v385 = vrot.slane %v383, 4
  %v386 = vshll.u32 %v215, 16
  %v388 = vrot.slane %v386, 5
  %v389 = vor.u32 %v385, %v388
  %v390 = vrot.slane %v389, 4
  %v392 = vshll.u32 %v216, 16
  %v394 = vrot.slane %v392, 5
  %v395 = vsel %vm227, %v390, %v394
  %v397 = vshrl.u32 %v217, 16
  %v399 = vrot.slane %v397, 4
  %v400 = vshll.u32 %v217, 16
  %v402 = vrot.slane %v400, 5
  %v403 = vor.u32 %v399, %v402
  %v404 = vrot.slane %v403, 4
  %v406 = vshll.u32 %v218, 16
  %v408 = vrot.slane %v406, 5
  %v409 = vsel %vm227, %v404, %v408
  %v411 = vshrl.u32 %v219, 16
  %v413 = vrot.slane %v411, 4
  %v414 = vshll.u32 %v219, 16
  %v416 = vrot.slane %v414, 5
  %v417 = vor.u32 %v413, %v416
  %v418 = vrot.slane %v417, 4
  %v420 = vshll.u32 %v220, 16
  %v422 = vrot.slane %v420, 5
  %v423 = vsel %vm227, %v418, %v422
  %v425 = vshrl.u32 %v221, 16
  %v427 = vrot.slane %v425, 4
  %v428 = vshll.u32 %v221, 16
  %v430 = vrot.slane %v428, 5
  %v431 = vor.u32 %v427, %v430
  %v432 = vrot.slane %v431, 4
  %v434 = vshll.u32 %v222, 16
  %v436 = vrot.slane %v434, 5
  %v437 = vsel %vm227, %v432, %v436
  %v439 = vshrl.u32 %v223, 16
  %v441 = vrot.slane %v439, 4
  %v442 = vshll.u32 %v223, 16
  %v444 = vrot.slane %v442, 5
  %v445 = vor.u32 %v441, %v444
  %v446 = vrot.slane %v445, 4
  %v448 = vshll.u32 %v224, 16
  %v450 = vrot.slane %v448, 5
  %v451 = vsel %vm227, %v446, %v450
  %v452 = vunpack.c.l.b16 %v241
  %v453 = vunpack.c.l.b16 %v255
  %v454 = vunpack.c.l.b16 %v269
  %v455 = vunpack.c.l.b16 %v283
  %v456 = vunpack.c.l.b16 %v297
  %v457 = vunpack.c.l.b16 %v311
  %v458 = vunpack.c.l.b16 %v325
  %v459 = vunpack.c.l.b16 %v339
  %v460 = vunpack.c.l.b16 %v353
  %v461 = vunpack.c.l.b16 %v367
  %v462 = vunpack.c.l.b16 %v381
  %v463 = vunpack.c.l.b16 %v395
  %v464 = vunpack.c.l.b16 %v409
  %v465 = vunpack.c.l.b16 %v423
  %v466 = vunpack.c.l.b16 %v437
  %v467 = vunpack.c.l.b16 %v451
  %v468 = vpack.c.b16 %v453, %v452
  %v469 = vpack.c.b16 %v455, %v454
  %v470 = vpack.c.b16 %v457, %v456
  %v471 = vpack.c.b16 %v459, %v458
  %v472 = vpack.c.b16 %v461, %v460
  %v473 = vpack.c.b16 %v463, %v462
  %v474 = vpack.c.b16 %v465, %v464
  %v475 = vpack.c.b16 %v467, %v466
  %476 = vrot.lane.b32.xlu0 %v468, 8
  %v477 = vpop.permute.xlu0 %476
  %478 = vrot.lane.b32.xlu0 %v469, 8
  %v479 = vpop.permute.xlu0 %478
  %480 = vrot.lane.b32.xlu0 %v470, 8
  %v481 = vpop.permute.xlu0 %480
  %482 = vrot.lane.b32.xlu0 %v471, 8
  %v483 = vpop.permute.xlu0 %482
  %484 = vrot.lane.b32.xlu0 %v472, 8
  %v485 = vpop.permute.xlu0 %484
  %486 = vrot.lane.b32.xlu0 %v473, 8
  %v487 = vpop.permute.xlu0 %486
  %488 = vrot.lane.b32.xlu0 %v474, 8
  %v489 = vpop.permute.xlu0 %488
  %490 = vrot.lane.b32.xlu0 %v475, 8
  %v491 = vpop.permute.xlu0 %490
  %vm500 = vcmask 97344
  %501 = vst.msk [vmem:[#allocation2] sm:$0xff] %vm500, %v477
  %502 = vst.msk [vmem:[#allocation2 + $0x8] sm:$0xff] %vm500, %v479
  %503 = vst.msk [vmem:[#allocation2 + $0x10] sm:$0xff] %vm500, %v481
  %504 = vst.msk [vmem:[#allocation2 + $0x18] sm:$0xff] %vm500, %v483
  %505 = vst.msk [vmem:[#allocation2 + $0x20] sm:$0xff] %vm500, %v485
  %506 = vst.msk [vmem:[#allocation2 + $0x28] sm:$0xff] %vm500, %v487
  %507 = vst.msk [vmem:[#allocation2 + $0x30] sm:$0xff] %vm500, %v489
  %508 = vst.msk [vmem:[#allocation2 + $0x38] sm:$0xff] %vm500, %v491
  %s509 = scalar_lea.vmem %s0, 288
  %v510 = vld [vmem:[%s509] sm:$0xf]
  %v511 = vld [vmem:[%s509 + $0x8] sm:$0xf]
  %v512 = vld [vmem:[%s509 + $0x10] sm:$0xf]
  %v513 = vld [vmem:[%s509 + $0x18] sm:$0xf]
  %v514 = vld [vmem:[%s509 + $0x20] sm:$0xf]
  %v515 = vld [vmem:[%s509 + $0x28] sm:$0xf]
  %v516 = vld [vmem:[%s509 + $0x30] sm:$0xf]
  %v517 = vld [vmem:[%s509 + $0x38] sm:$0xf]
  %v518 = vld [vmem:[%s509 + $0x48] sm:$0xf]
  %v519 = vld [vmem:[%s509 + $0x50] sm:$0xf]
  %v520 = vld [vmem:[%s509 + $0x58] sm:$0xf]
  %v521 = vld [vmem:[%s509 + $0x60] sm:$0xf]
  %v522 = vld [vmem:[%s509 + $0x68] sm:$0xf]
  %v523 = vld [vmem:[%s509 + $0x70] sm:$0xf]
  %v524 = vld [vmem:[%s509 + $0x78] sm:$0xf]
  %v525 = vld [vmem:[%s509 + $0x80] sm:$0xf]
  %v542 = vunpack.c.l.b16 %v510
  %v543 = vunpack.c.l.b16 %v511
  %v544 = vunpack.c.l.b16 %v512
  %v545 = vunpack.c.l.b16 %v513
  %v546 = vunpack.c.l.b16 %v514
  %v547 = vunpack.c.l.b16 %v515
  %v548 = vunpack.c.l.b16 %v516
  %v549 = vunpack.c.l.b16 %v517
  %v550 = vunpack.c.l.b16 %v518
  %v551 = vunpack.c.l.b16 %v519
  %v552 = vunpack.c.l.b16 %v520
  %v553 = vunpack.c.l.b16 %v521
  %v554 = vunpack.c.l.b16 %v522
  %v555 = vunpack.c.l.b16 %v523
  %v556 = vunpack.c.l.b16 %v524
  %v557 = vunpack.c.l.b16 %v525
  %v558 = vpack.c.b16 %v543, %v542
  %v559 = vpack.c.b16 %v545, %v544
  %v560 = vpack.c.b16 %v547, %v546
  %v561 = vpack.c.b16 %v549, %v548
  %v562 = vpack.c.b16 %v551, %v550
  %v563 = vpack.c.b16 %v553, %v552
  %v564 = vpack.c.b16 %v555, %v554
  %v565 = vpack.c.b16 %v557, %v556
  %566 = vrot.lane.b32.xlu0 %v558, 12
  %v567 = vpop.permute.xlu0 %566
  %568 = vrot.lane.b32.xlu0 %v559, 12
  %v569 = vpop.permute.xlu0 %568
  %570 = vrot.lane.b32.xlu0 %v560, 12
  %v571 = vpop.permute.xlu0 %570
  %572 = vrot.lane.b32.xlu0 %v561, 12
  %v573 = vpop.permute.xlu0 %572
  %574 = vrot.lane.b32.xlu0 %v562, 12
  %v575 = vpop.permute.xlu0 %574
  %576 = vrot.lane.b32.xlu0 %v563, 12
  %v577 = vpop.permute.xlu0 %576
  %578 = vrot.lane.b32.xlu0 %v564, 12
  %v579 = vpop.permute.xlu0 %578
  %580 = vrot.lane.b32.xlu0 %v565, 12
  %v581 = vpop.permute.xlu0 %580
  %vm590 = vcmask 130144
  %591 = vst.msk [vmem:[#allocation2] sm:$0xff] %vm590, %v567
  %592 = vst.msk [vmem:[#allocation2 + $0x8] sm:$0xff] %vm590, %v569
  %593 = vst.msk [vmem:[#allocation2 + $0x10] sm:$0xff] %vm590, %v571
  %594 = vst.msk [vmem:[#allocation2 + $0x18] sm:$0xff] %vm590, %v573
  %595 = vst.msk [vmem:[#allocation2 + $0x20] sm:$0xff] %vm590, %v575
  %596 = vst.msk [vmem:[#allocation2 + $0x28] sm:$0xff] %vm590, %v577
  %597 = vst.msk [vmem:[#allocation2 + $0x30] sm:$0xff] %vm590, %v579
  %598 = vst.msk [vmem:[#allocation2 + $0x38] sm:$0xff] %vm590, %v581
  %s599 = scalar_lea.vmem %s0, 432
  %v600 = vld [vmem:[%s599] sm:$0xf]
  %v601 = vld [vmem:[%s599 + $0x8] sm:$0xf]
  %v602 = vld [vmem:[%s599 + $0x10] sm:$0xf]
  %v603 = vld [vmem:[%s599 + $0x18] sm:$0xf]
  %v604 = vld [vmem:[%s599 + $0x20] sm:$0xf]
  %v605 = vld [vmem:[%s599 + $0x28] sm:$0xf]
  %v606 = vld [vmem:[%s599 + $0x30] sm:$0xf]
  %v607 = vld [vmem:[%s599 + $0x38] sm:$0xf]
  %v608 = vld [vmem:[%s599 + $0x48] sm:$0xf]
  %v609 = vld [vmem:[%s599 + $0x50] sm:$0xf]
  %v610 = vld [vmem:[%s599 + $0x58] sm:$0xf]
  %v611 = vld [vmem:[%s599 + $0x60] sm:$0xf]
  %v612 = vld [vmem:[%s599 + $0x68] sm:$0xf]
  %v613 = vld [vmem:[%s599 + $0x70] sm:$0xf]
  %v614 = vld [vmem:[%s599 + $0x78] sm:$0xf]
  %v615 = vld [vmem:[%s599 + $0x80] sm:$0xf]
  %v632 = vunpack.c.l.b16 %v600
  %v633 = vunpack.c.l.b16 %v601
  %v634 = vunpack.c.l.b16 %v602
  %v635 = vunpack.c.l.b16 %v603
  %v636 = vunpack.c.l.b16 %v604
  %v637 = vunpack.c.l.b16 %v605
  %v638 = vunpack.c.l.b16 %v606
  %v639 = vunpack.c.l.b16 %v607
  %v640 = vunpack.c.l.b16 %v608
  %v641 = vunpack.c.l.b16 %v609
  %v642 = vunpack.c.l.b16 %v610
  %v643 = vunpack.c.l.b16 %v611
  %v644 = vunpack.c.l.b16 %v612
  %v645 = vunpack.c.l.b16 %v613
  %v646 = vunpack.c.l.b16 %v614
  %v647 = vunpack.c.l.b16 %v615
  %v648 = vpack.c.b16 %v633, %v632
  %v649 = vpack.c.b16 %v635, %v634
  %v650 = vpack.c.b16 %v637, %v636
  %v651 = vpack.c.b16 %v639, %v638
  %v652 = vpack.c.b16 %v641, %v640
  %v653 = vpack.c.b16 %v643, %v642
  %v654 = vpack.c.b16 %v645, %v644
  %v655 = vpack.c.b16 %v647, %v646
  %656 = vrot.lane.b32.xlu0 %v648, 16
  %v657 = vpop.permute.xlu0 %656
  %658 = vrot.lane.b32.xlu0 %v649, 16
  %v659 = vpop.permute.xlu0 %658
  %660 = vrot.lane.b32.xlu0 %v650, 16
  %v661 = vpop.permute.xlu0 %660
  %662 = vrot.lane.b32.xlu0 %v651, 16
  %v663 = vpop.permute.xlu0 %662
  %664 = vrot.lane.b32.xlu0 %v652, 16
  %v665 = vpop.permute.xlu0 %664
  %666 = vrot.lane.b32.xlu0 %v653, 16
  %v667 = vpop.permute.xlu0 %666
  %668 = vrot.lane.b32.xlu0 %v654, 16
  %v669 = vpop.permute.xlu0 %668
  %670 = vrot.lane.b32.xlu0 %v655, 16
  %v671 = vpop.permute.xlu0 %670
  %vm680 = vcmask 162944
  %681 = vst.msk [vmem:[#allocation2] sm:$0xff] %vm680, %v657
  %682 = vst.msk [vmem:[#allocation2 + $0x8] sm:$0xff] %vm680, %v659
  %683 = vst.msk [vmem:[#allocation2 + $0x10] sm:$0xff] %vm680, %v661
  %684 = vst.msk [vmem:[#allocation2 + $0x18] sm:$0xff] %vm680, %v663
  %685 = vst.msk [vmem:[#allocation2 + $0x20] sm:$0xff] %vm680, %v665
  %686 = vst.msk [vmem:[#allocation2 + $0x28] sm:$0xff] %vm680, %v667
  %687 = vst.msk [vmem:[#allocation2 + $0x30] sm:$0xff] %vm680, %v669
  %688 = vst.msk [vmem:[#allocation2 + $0x38] sm:$0xff] %vm680, %v671
  %v689 = vld [vmem:[%s509] sm:$0xf]
  %v690 = vld [vmem:[%s509 + $0x4] sm:$0x1]
  %v691 = vld [vmem:[%s509 + $0x8] sm:$0xf]
  %v692 = vld [vmem:[%s509 + $0xc] sm:$0x1]
  %v693 = vld [vmem:[%s509 + $0x10] sm:$0xf]
  %v694 = vld [vmem:[%s509 + $0x14] sm:$0x1]
  %v695 = vld [vmem:[%s509 + $0x18] sm:$0xf]
  %v696 = vld [vmem:[%s509 + $0x1c] sm:$0x1]
  %v697 = vld [vmem:[%s509 + $0x20] sm:$0xf]
  %v698 = vld [vmem:[%s509 + $0x24] sm:$0x1]
  %v699 = vld [vmem:[%s509 + $0x28] sm:$0xf]
  %v700 = vld [vmem:[%s509 + $0x2c] sm:$0x1]
  %v701 = vld [vmem:[%s509 + $0x30] sm:$0xf]
  %v702 = vld [vmem:[%s509 + $0x34] sm:$0x1]
  %v703 = vld [vmem:[%s509 + $0x38] sm:$0xf]
  %v704 = vld [vmem:[%s509 + $0x3c] sm:$0x1]
  %v705 = vld [vmem:[%s509 + $0x48] sm:$0xf]
  %v706 = vld [vmem:[%s509 + $0x4c] sm:$0x1]
  %v707 = vld [vmem:[%s509 + $0x50] sm:$0xf]
  %v708 = vld [vmem:[%s509 + $0x54] sm:$0x1]
  %v709 = vld [vmem:[%s509 + $0x58] sm:$0xf]
  %v710 = vld [vmem:[%s509 + $0x5c] sm:$0x1]
  %v711 = vld [vmem:[%s509 + $0x60] sm:$0xf]
  %v712 = vld [vmem:[%s509 + $0x64] sm:$0x1]
  %v713 = vld [vmem:[%s509 + $0x68] sm:$0xf]
  %v714 = vld [vmem:[%s509 + $0x6c] sm:$0x1]
  %v715 = vld [vmem:[%s509 + $0x70] sm:$0xf]
  %v716 = vld [vmem:[%s509 + $0x74] sm:$0x1]
  %v717 = vld [vmem:[%s509 + $0x78] sm:$0xf]
  %v718 = vld [vmem:[%s509 + $0x7c] sm:$0x1]
  %v719 = vld [vmem:[%s509 + $0x80] sm:$0xf]
  %v720 = vld [vmem:[%s509 + $0x84] sm:$0x1]
  %v722 = vshrl.u32 %v689, 16
  %v724 = vrot.slane %v722, 4
  %v725 = vshll.u32 %v689, 16
  %v727 = vrot.slane %v725, 5
  %v728 = vor.u32 %v724, %v727
  %v729 = vrot.slane %v728, 4
  %v731 = vshll.u32 %v690, 16
  %v733 = vrot.slane %v731, 5
  %v734 = vsel %vm227, %v729, %v733
  %v736 = vshrl.u32 %v691, 16
  %v738 = vrot.slane %v736, 4
  %v739 = vshll.u32 %v691, 16
  %v741 = vrot.slane %v739, 5
  %v742 = vor.u32 %v738, %v741
  %v743 = vrot.slane %v742, 4
  %v745 = vshll.u32 %v692, 16
  %v747 = vrot.slane %v745, 5
  %v748 = vsel %vm227, %v743, %v747
  %v750 = vshrl.u32 %v693, 16
  %v752 = vrot.slane %v750, 4
  %v753 = vshll.u32 %v693, 16
  %v755 = vrot.slane %v753, 5
  %v756 = vor.u32 %v752, %v755
  %v757 = vrot.slane %v756, 4
  %v759 = vshll.u32 %v694, 16
  %v761 = vrot.slane %v759, 5
  %v762 = vsel %vm227, %v757, %v761
  %v764 = vshrl.u32 %v695, 16
  %v766 = vrot.slane %v764, 4
  %v767 = vshll.u32 %v695, 16
  %v769 = vrot.slane %v767, 5
  %v770 = vor.u32 %v766, %v769
  %v771 = vrot.slane %v770, 4
  %v773 = vshll.u32 %v696, 16
  %v775 = vrot.slane %v773, 5
  %v776 = vsel %vm227, %v771, %v775
  %v778 = vshrl.u32 %v697, 16
  %v780 = vrot.slane %v778, 4
  %v781 = vshll.u32 %v697, 16
  %v783 = vrot.slane %v781, 5
  %v784 = vor.u32 %v780, %v783
  %v785 = vrot.slane %v784, 4
  %v787 = vshll.u32 %v698, 16
  %v789 = vrot.slane %v787, 5
  %v790 = vsel %vm227, %v785, %v789
  %v792 = vshrl.u32 %v699, 16
  %v794 = vrot.slane %v792, 4
  %v795 = vshll.u32 %v699, 16
  %v797 = vrot.slane %v795, 5
  %v798 = vor.u32 %v794, %v797
  %v799 = vrot.slane %v798, 4
  %v801 = vshll.u32 %v700, 16
  %v803 = vrot.slane %v801, 5
  %v804 = vsel %vm227, %v799, %v803
  %v806 = vshrl.u32 %v701, 16
  %v808 = vrot.slane %v806, 4
  %v809 = vshll.u32 %v701, 16
  %v811 = vrot.slane %v809, 5
  %v812 = vor.u32 %v808, %v811
  %v813 = vrot.slane %v812, 4
  %v815 = vshll.u32 %v702, 16
  %v817 = vrot.slane %v815, 5
  %v818 = vsel %vm227, %v813, %v817
  %v820 = vshrl.u32 %v703, 16
  %v822 = vrot.slane %v820, 4
  %v823 = vshll.u32 %v703, 16
  %v825 = vrot.slane %v823, 5
  %v826 = vor.u32 %v822, %v825
  %v827 = vrot.slane %v826, 4
  %v829 = vshll.u32 %v704, 16
  %v831 = vrot.slane %v829, 5
  %v832 = vsel %vm227, %v827, %v831
  %v834 = vshrl.u32 %v705, 16
  %v836 = vrot.slane %v834, 4
  %v837 = vshll.u32 %v705, 16
  %v839 = vrot.slane %v837, 5
  %v840 = vor.u32 %v836, %v839
  %v841 = vrot.slane %v840, 4
  %v843 = vshll.u32 %v706, 16
  %v845 = vrot.slane %v843, 5
  %v846 = vsel %vm227, %v841, %v845
  %v848 = vshrl.u32 %v707, 16
  %v850 = vrot.slane %v848, 4
  %v851 = vshll.u32 %v707, 16
  %v853 = vrot.slane %v851, 5
  %v854 = vor.u32 %v850, %v853
  %v855 = vrot.slane %v854, 4
  %v857 = vshll.u32 %v708, 16
  %v859 = vrot.slane %v857, 5
  %v860 = vsel %vm227, %v855, %v859
  %v862 = vshrl.u32 %v709, 16
  %v864 = vrot.slane %v862, 4
  %v865 = vshll.u32 %v709, 16
  %v867 = vrot.slane %v865, 5
  %v868 = vor.u32 %v864, %v867
  %v869 = vrot.slane %v868, 4
  %v871 = vshll.u32 %v710, 16
  %v873 = vrot.slane %v871, 5
  %v874 = vsel %vm227, %v869, %v873
  %v876 = vshrl.u32 %v711, 16
  %v878 = vrot.slane %v876, 4
  %v879 = vshll.u32 %v711, 16
  %v881 = vrot.slane %v879, 5
  %v882 = vor.u32 %v878, %v881
  %v883 = vrot.slane %v882, 4
  %v885 = vshll.u32 %v712, 16
  %v887 = vrot.slane %v885, 5
  %v888 = vsel %vm227, %v883, %v887
  %v890 = vshrl.u32 %v713, 16
  %v892 = vrot.slane %v890, 4
  %v893 = vshll.u32 %v713, 16
  %v895 = vrot.slane %v893, 5
  %v896 = vor.u32 %v892, %v895
  %v897 = vrot.slane %v896, 4
  %v899 = vshll.u32 %v714, 16
  %v901 = vrot.slane %v899, 5
  %v902 = vsel %vm227, %v897, %v901
  %v904 = vshrl.u32 %v715, 16
  %v906 = vrot.slane %v904, 4
  %v907 = vshll.u32 %v715, 16
  %v909 = vrot.slane %v907, 5
  %v910 = vor.u32 %v906, %v909
  %v911 = vrot.slane %v910, 4
  %v913 = vshll.u32 %v716, 16
  %v915 = vrot.slane %v913, 5
  %v916 = vsel %vm227, %v911, %v915
  %v918 = vshrl.u32 %v717, 16
  %v920 = vrot.slane %v918, 4
  %v921 = vshll.u32 %v717, 16
  %v923 = vrot.slane %v921, 5
  %v924 = vor.u32 %v920, %v923
  %v925 = vrot.slane %v924, 4
  %v927 = vshll.u32 %v718, 16
  %v929 = vrot.slane %v927, 5
  %v930 = vsel %vm227, %v925, %v929
  %v932 = vshrl.u32 %v719, 16
  %v934 = vrot.slane %v932, 4
  %v935 = vshll.u32 %v719, 16
  %v937 = vrot.slane %v935, 5
  %v938 = vor.u32 %v934, %v937
  %v939 = vrot.slane %v938, 4
  %v941 = vshll.u32 %v720, 16
  %v943 = vrot.slane %v941, 5
  %v944 = vsel %vm227, %v939, %v943
  %v945 = vunpack.c.l.b16 %v734
  %v946 = vunpack.c.l.b16 %v748
  %v947 = vunpack.c.l.b16 %v762
  %v948 = vunpack.c.l.b16 %v776
  %v949 = vunpack.c.l.b16 %v790
  %v950 = vunpack.c.l.b16 %v804
  %v951 = vunpack.c.l.b16 %v818
  %v952 = vunpack.c.l.b16 %v832
  %v953 = vunpack.c.l.b16 %v846
  %v954 = vunpack.c.l.b16 %v860
  %v955 = vunpack.c.l.b16 %v874
  %v956 = vunpack.c.l.b16 %v888
  %v957 = vunpack.c.l.b16 %v902
  %v958 = vunpack.c.l.b16 %v916
  %v959 = vunpack.c.l.b16 %v930
  %v960 = vunpack.c.l.b16 %v944
  %v961 = vpack.c.b16 %v946, %v945
  %v962 = vpack.c.b16 %v948, %v947
  %v963 = vpack.c.b16 %v950, %v949
  %v964 = vpack.c.b16 %v952, %v951
  %v965 = vpack.c.b16 %v954, %v953
  %v966 = vpack.c.b16 %v956, %v955
  %v967 = vpack.c.b16 %v958, %v957
  %v968 = vpack.c.b16 %v960, %v959
  %969 = vrot.lane.b32.xlu0 %v961, 20
  %v970 = vpop.permute.xlu0 %969
  %971 = vrot.lane.b32.xlu0 %v962, 20
  %v972 = vpop.permute.xlu0 %971
  %973 = vrot.lane.b32.xlu0 %v963, 20
  %v974 = vpop.permute.xlu0 %973
  %975 = vrot.lane.b32.xlu0 %v964, 20
  %v976 = vpop.permute.xlu0 %975
  %977 = vrot.lane.b32.xlu0 %v965, 20
  %v978 = vpop.permute.xlu0 %977
  %979 = vrot.lane.b32.xlu0 %v966, 20
  %v980 = vpop.permute.xlu0 %979
  %981 = vrot.lane.b32.xlu0 %v967, 20
  %v982 = vpop.permute.xlu0 %981
  %983 = vrot.lane.b32.xlu0 %v968, 20
  %v984 = vpop.permute.xlu0 %983
  %vm993 = vcmask 195744
  %994 = vst.msk [vmem:[#allocation2] sm:$0xff] %vm993, %v970
  %995 = vst.msk [vmem:[#allocation2 + $0x8] sm:$0xff] %vm993, %v972
  %996 = vst.msk [vmem:[#allocation2 + $0x10] sm:$0xff] %vm993, %v974
  %997 = vst.msk [vmem:[#allocation2 + $0x18] sm:$0xff] %vm993, %v976
  %998 = vst.msk [vmem:[#allocation2 + $0x20] sm:$0xff] %vm993, %v978
  %999 = vst.msk [vmem:[#allocation2 + $0x28] sm:$0xff] %vm993, %v980
  %1000 = vst.msk [vmem:[#allocation2 + $0x30] sm:$0xff] %vm993, %v982
  %1001 = vst.msk [vmem:[#allocation2 + $0x38] sm:$0xff] %vm993, %v984
  %s1002 = scalar_lea.vmem %s0, 8
  %v1003 = vld [vmem:[%s1002] sm:$0xf]
  %v1004 = vld [vmem:[%s1002 + $0x8] sm:$0xf]
  %v1005 = vld [vmem:[%s1002 + $0x10] sm:$0xf]
  %v1006 = vld [vmem:[%s1002 + $0x18] sm:$0xf]
  %v1007 = vld [vmem:[%s1002 + $0x20] sm:$0xf]
  %v1008 = vld [vmem:[%s1002 + $0x28] sm:$0xf]
  %v1009 = vld [vmem:[%s1002 + $0x30] sm:$0xf]
  %v1010 = vld [vmem:[%s1002 + $0x38] sm:$0xf]
  %v1011 = vld [vmem:[%s1002 + $0x48] sm:$0xf]
  %v1012 = vld [vmem:[%s1002 + $0x50] sm:$0xf]
  %v1013 = vld [vmem:[%s1002 + $0x58] sm:$0xf]
  %v1014 = vld [vmem:[%s1002 + $0x60] sm:$0xf]
  %v1015 = vld [vmem:[%s1002 + $0x68] sm:$0xf]
  %v1016 = vld [vmem:[%s1002 + $0x70] sm:$0xf]
  %v1017 = vld [vmem:[%s1002 + $0x78] sm:$0xf]
  %v1018 = vld [vmem:[%s1002 + $0x80] sm:$0xf]
  %v1035 = vunpack.c.l.b16 %v1003
  %v1036 = vunpack.c.l.b16 %v1004
  %v1037 = vunpack.c.l.b16 %v1005
  %v1038 = vunpack.c.l.b16 %v1006
  %v1039 = vunpack.c.l.b16 %v1007
  %v1040 = vunpack.c.l.b16 %v1008
  %v1041 = vunpack.c.l.b16 %v1009
  %v1042 = vunpack.c.l.b16 %v1010
  %v1043 = vunpack.c.l.b16 %v1011
  %v1044 = vunpack.c.l.b16 %v1012
  %v1045 = vunpack.c.l.b16 %v1013
  %v1046 = vunpack.c.l.b16 %v1014
  %v1047 = vunpack.c.l.b16 %v1015
  %v1048 = vunpack.c.l.b16 %v1016
  %v1049 = vunpack.c.l.b16 %v1017
  %v1050 = vunpack.c.l.b16 %v1018
  %v1051 = vpack.c.b16 %v1036, %v1035
  %v1052 = vpack.c.b16 %v1038, %v1037
  %v1053 = vpack.c.b16 %v1040, %v1039
  %v1054 = vpack.c.b16 %v1042, %v1041
  %v1055 = vpack.c.b16 %v1044, %v1043
  %v1056 = vpack.c.b16 %v1046, %v1045
  %v1057 = vpack.c.b16 %v1048, %v1047
  %v1058 = vpack.c.b16 %v1050, %v1049
  %1059 = vrot.lane.b32.xlu0 %v1051, 24
  %v1060 = vpop.permute.xlu0 %1059
  %1061 = vrot.lane.b32.xlu0 %v1052, 24
  %v1062 = vpop.permute.xlu0 %1061
  %1063 = vrot.lane.b32.xlu0 %v1053, 24
  %v1064 = vpop.permute.xlu0 %1063
  %1065 = vrot.lane.b32.xlu0 %v1054, 24
  %v1066 = vpop.permute.xlu0 %1065
  %1067 = vrot.lane.b32.xlu0 %v1055, 24
  %v1068 = vpop.permute.xlu0 %1067
  %1069 = vrot.lane.b32.xlu0 %v1056, 24
  %v1070 = vpop.permute.xlu0 %1069
  %1071 = vrot.lane.b32.xlu0 %v1057, 24
  %v1072 = vpop.permute.xlu0 %1071
  %1073 = vrot.lane.b32.xlu0 %v1058, 24
  %v1074 = vpop.permute.xlu0 %1073
  %vm1083 = vcmask 228544
  %1084 = vst.msk [vmem:[#allocation2] sm:$0xff] %vm1083, %v1060
  %1085 = vst.msk [vmem:[#allocation2 + $0x8] sm:$0xff] %vm1083, %v1062
  %1086 = vst.msk [vmem:[#allocation2 + $0x10] sm:$0xff] %vm1083, %v1064
  %1087 = vst.msk [vmem:[#allocation2 + $0x18] sm:$0xff] %vm1083, %v1066
  %1088 = vst.msk [vmem:[#allocation2 + $0x20] sm:$0xff] %vm1083, %v1068
  %1089 = vst.msk [vmem:[#allocation2 + $0x28] sm:$0xff] %vm1083, %v1070
  %1090 = vst.msk [vmem:[#allocation2 + $0x30] sm:$0xff] %vm1083, %v1072
  %1091 = vst.msk [vmem:[#allocation2 + $0x38] sm:$0xff] %vm1083, %v1074
  %s1092 = scalar_lea.vmem %s0, 152
  %v1093 = vld [vmem:[%s1092] sm:$0xf]
  %v1094 = vld [vmem:[%s1092 + $0x8] sm:$0xf]
  %v1095 = vld [vmem:[%s1092 + $0x10] sm:$0xf]
  %v1096 = vld [vmem:[%s1092 + $0x18] sm:$0xf]
  %v1097 = vld [vmem:[%s1092 + $0x20] sm:$0xf]
  %v1098 = vld [vmem:[%s1092 + $0x28] sm:$0xf]
  %v1099 = vld [vmem:[%s1092 + $0x30] sm:$0xf]
  %v1100 = vld [vmem:[%s1092 + $0x38] sm:$0xf]
  %v1101 = vld [vmem:[%s1092 + $0x48] sm:$0xf]
  %v1102 = vld [vmem:[%s1092 + $0x50] sm:$0xf]
  %v1103 = vld [vmem:[%s1092 + $0x58] sm:$0xf]
  %v1104 = vld [vmem:[%s1092 + $0x60] sm:$0xf]
  %v1105 = vld [vmem:[%s1092 + $0x68] sm:$0xf]
  %v1106 = vld [vmem:[%s1092 + $0x70] sm:$0xf]
  %v1107 = vld [vmem:[%s1092 + $0x78] sm:$0xf]
  %v1108 = vld [vmem:[%s1092 + $0x80] sm:$0xf]
  %v1125 = vunpack.c.l.b16 %v1093
  %v1126 = vunpack.c.l.b16 %v1094
  %v1127 = vunpack.c.l.b16 %v1095
  %v1128 = vunpack.c.l.b16 %v1096
  %v1129 = vunpack.c.l.b16 %v1097
  %v1130 = vunpack.c.l.b16 %v1098
  %v1131 = vunpack.c.l.b16 %v1099
  %v1132 = vunpack.c.l.b16 %v1100
  %v1133 = vunpack.c.l.b16 %v1101
  %v1134 = vunpack.c.l.b16 %v1102
  %v1135 = vunpack.c.l.b16 %v1103
  %v1136 = vunpack.c.l.b16 %v1104
  %v1137 = vunpack.c.l.b16 %v1105
  %v1138 = vunpack.c.l.b16 %v1106
  %v1139 = vunpack.c.l.b16 %v1107
  %v1140 = vunpack.c.l.b16 %v1108
  %v1141 = vpack.c.b16 %v1126, %v1125
  %v1142 = vpack.c.b16 %v1128, %v1127
  %v1143 = vpack.c.b16 %v1130, %v1129
  %v1144 = vpack.c.b16 %v1132, %v1131
  %v1145 = vpack.c.b16 %v1134, %v1133
  %v1146 = vpack.c.b16 %v1136, %v1135
  %v1147 = vpack.c.b16 %v1138, %v1137
  %v1148 = vpack.c.b16 %v1140, %v1139
  %1149 = vrot.lane.b32.xlu0 %v1141, 28
  %v1150 = vpop.permute.xlu0 %1149
  %1151 = vrot.lane.b32.xlu0 %v1142, 28
  %v1152 = vpop.permute.xlu0 %1151
  %1153 = vrot.lane.b32.xlu0 %v1143, 28
  %v1154 = vpop.permute.xlu0 %1153
  %1155 = vrot.lane.b32.xlu0 %v1144, 28
  %v1156 = vpop.permute.xlu0 %1155
  %1157 = vrot.lane.b32.xlu0 %v1145, 28
  %v1158 = vpop.permute.xlu0 %1157
  %1159 = vrot.lane.b32.xlu0 %v1146, 28
  %v1160 = vpop.permute.xlu0 %1159
  %1161 = vrot.lane.b32.xlu0 %v1147, 28
  %v1162 = vpop.permute.xlu0 %1161
  %1163 = vrot.lane.b32.xlu0 %v1148, 28
  %v1164 = vpop.permute.xlu0 %1163
  %vm1173 = vcmask 261344
  %1174 = vst.msk [vmem:[#allocation2] sm:$0xff] %vm1173, %v1150
  %1175 = vst.msk [vmem:[#allocation2 + $0x8] sm:$0xff] %vm1173, %v1152
  %1176 = vst.msk [vmem:[#allocation2 + $0x10] sm:$0xff] %vm1173, %v1154
  %1177 = vst.msk [vmem:[#allocation2 + $0x18] sm:$0xff] %vm1173, %v1156
  %1178 = vst.msk [vmem:[#allocation2 + $0x20] sm:$0xff] %vm1173, %v1158
  %1179 = vst.msk [vmem:[#allocation2 + $0x28] sm:$0xff] %vm1173, %v1160
  %1180 = vst.msk [vmem:[#allocation2 + $0x30] sm:$0xff] %vm1173, %v1162
  %1181 = vst.msk [vmem:[#allocation2 + $0x38] sm:$0xff] %vm1173, %v1164
  %v1182 = vld [vmem:[%s1002] sm:$0xf]
  %v1183 = vld [vmem:[%s1002 + $0x4] sm:$0x1]
  %v1184 = vld [vmem:[%s1002 + $0x8] sm:$0xf]
  %v1185 = vld [vmem:[%s1002 + $0xc] sm:$0x1]
  %v1186 = vld [vmem:[%s1002 + $0x10] sm:$0xf]
  %v1187 = vld [vmem:[%s1002 + $0x14] sm:$0x1]
  %v1188 = vld [vmem:[%s1002 + $0x18] sm:$0xf]
  %v1189 = vld [vmem:[%s1002 + $0x1c] sm:$0x1]
  %v1190 = vld [vmem:[%s1002 + $0x20] sm:$0xf]
  %v1191 = vld [vmem:[%s1002 + $0x24] sm:$0x1]
  %v1192 = vld [vmem:[%s1002 + $0x28] sm:$0xf]
  %v1193 = vld [vmem:[%s1002 + $0x2c] sm:$0x1]
  %v1194 = vld [vmem:[%s1002 + $0x30] sm:$0xf]
  %v1195 = vld [vmem:[%s1002 + $0x34] sm:$0x1]
  %v1196 = vld [vmem:[%s1002 + $0x38] sm:$0xf]
  %v1197 = vld [vmem:[%s1002 + $0x3c] sm:$0x1]
  %v1198 = vld [vmem:[%s1002 + $0x48] sm:$0xf]
  %v1199 = vld [vmem:[%s1002 + $0x4c] sm:$0x1]
  %v1200 = vld [vmem:[%s1002 + $0x50] sm:$0xf]
  %v1201 = vld [vmem:[%s1002 + $0x54] sm:$0x1]
  %v1202 = vld [vmem:[%s1002 + $0x58] sm:$0xf]
  %v1203 = vld [vmem:[%s1002 + $0x5c] sm:$0x1]
  %v1204 = vld [vmem:[%s1002 + $0x60] sm:$0xf]
  %v1205 = vld [vmem:[%s1002 + $0x64] sm:$0x1]
  %v1206 = vld [vmem:[%s1002 + $0x68] sm:$0xf]
  %v1207 = vld [vmem:[%s1002 + $0x6c] sm:$0x1]
  %v1208 = vld [vmem:[%s1002 + $0x70] sm:$0xf]
  %v1209 = vld [vmem:[%s1002 + $0x74] sm:$0x1]
  %v1210 = vld [vmem:[%s1002 + $0x78] sm:$0xf]
  %v1211 = vld [vmem:[%s1002 + $0x7c] sm:$0x1]
  %v1212 = vld [vmem:[%s1002 + $0x80] sm:$0xf]
  %v1213 = vld [vmem:[%s1002 + $0x84] sm:$0x1]
  %v1215 = vshrl.u32 %v1182, 16
  %v1217 = vrot.slane %v1215, 4
  %v1218 = vshll.u32 %v1182, 16
  %v1220 = vrot.slane %v1218, 5
  %v1221 = vor.u32 %v1217, %v1220
  %v1222 = vrot.slane %v1221, 4
  %v1224 = vshll.u32 %v1183, 16
  %v1226 = vrot.slane %v1224, 5
  %v1227 = vsel %vm227, %v1222, %v1226
  %v1229 = vshrl.u32 %v1184, 16
  %v1231 = vrot.slane %v1229, 4
  %v1232 = vshll.u32 %v1184, 16
  %v1234 = vrot.slane %v1232, 5
  %v1235 = vor.u32 %v1231, %v1234
  %v1236 = vrot.slane %v1235, 4
  %v1238 = vshll.u32 %v1185, 16
  %v1240 = vrot.slane %v1238, 5
  %v1241 = vsel %vm227, %v1236, %v1240
  %v1243 = vshrl.u32 %v1186, 16
  %v1245 = vrot.slane %v1243, 4
  %v1246 = vshll.u32 %v1186, 16
  %v1248 = vrot.slane %v1246, 5
  %v1249 = vor.u32 %v1245, %v1248
  %v1250 = vrot.slane %v1249, 4
  %v1252 = vshll.u32 %v1187, 16
  %v1254 = vrot.slane %v1252, 5
  %v1255 = vsel %vm227, %v1250, %v1254
  %v1257 = vshrl.u32 %v1188, 16
  %v1259 = vrot.slane %v1257, 4
  %v1260 = vshll.u32 %v1188, 16
  %v1262 = vrot.slane %v1260, 5
  %v1263 = vor.u32 %v1259, %v1262
  %v1264 = vrot.slane %v1263, 4
  %v1266 = vshll.u32 %v1189, 16
  %v1268 = vrot.slane %v1266, 5
  %v1269 = vsel %vm227, %v1264, %v1268
  %v1271 = vshrl.u32 %v1190, 16
  %v1273 = vrot.slane %v1271, 4
  %v1274 = vshll.u32 %v1190, 16
  %v1276 = vrot.slane %v1274, 5
  %v1277 = vor.u32 %v1273, %v1276
  %v1278 = vrot.slane %v1277, 4
  %v1280 = vshll.u32 %v1191, 16
  %v1282 = vrot.slane %v1280, 5
  %v1283 = vsel %vm227, %v1278, %v1282
  %v1285 = vshrl.u32 %v1192, 16
  %v1287 = vrot.slane %v1285, 4
  %v1288 = vshll.u32 %v1192, 16
  %v1290 = vrot.slane %v1288, 5
  %v1291 = vor.u32 %v1287, %v1290
  %v1292 = vrot.slane %v1291, 4
  %v1294 = vshll.u32 %v1193, 16
  %v1296 = vrot.slane %v1294, 5
  %v1297 = vsel %vm227, %v1292, %v1296
  %v1299 = vshrl.u32 %v1194, 16
  %v1301 = vrot.slane %v1299, 4
  %v1302 = vshll.u32 %v1194, 16
  %v1304 = vrot.slane %v1302, 5
  %v1305 = vor.u32 %v1301, %v1304
  %v1306 = vrot.slane %v1305, 4
  %v1308 = vshll.u32 %v1195, 16
  %v1310 = vrot.slane %v1308, 5
  %v1311 = vsel %vm227, %v1306, %v1310
  %v1313 = vshrl.u32 %v1196, 16
  %v1315 = vrot.slane %v1313, 4
  %v1316 = vshll.u32 %v1196, 16
  %v1318 = vrot.slane %v1316, 5
  %v1319 = vor.u32 %v1315, %v1318
  %v1320 = vrot.slane %v1319, 4
  %v1322 = vshll.u32 %v1197, 16
  %v1324 = vrot.slane %v1322, 5
  %v1325 = vsel %vm227, %v1320, %v1324
  %v1327 = vshrl.u32 %v1198, 16
  %v1329 = vrot.slane %v1327, 4
  %v1330 = vshll.u32 %v1198, 16
  %v1332 = vrot.slane %v1330, 5
  %v1333 = vor.u32 %v1329, %v1332
  %v1334 = vrot.slane %v1333, 4
  %v1336 = vshll.u32 %v1199, 16
  %v1338 = vrot.slane %v1336, 5
  %v1339 = vsel %vm227, %v1334, %v1338
  %v1341 = vshrl.u32 %v1200, 16
  %v1343 = vrot.slane %v1341, 4
  %v1344 = vshll.u32 %v1200, 16
  %v1346 = vrot.slane %v1344, 5
  %v1347 = vor.u32 %v1343, %v1346
  %v1348 = vrot.slane %v1347, 4
  %v1350 = vshll.u32 %v1201, 16
  %v1352 = vrot.slane %v1350, 5
  %v1353 = vsel %vm227, %v1348, %v1352
  %v1355 = vshrl.u32 %v1202, 16
  %v1357 = vrot.slane %v1355, 4
  %v1358 = vshll.u32 %v1202, 16
  %v1360 = vrot.slane %v1358, 5
  %v1361 = vor.u32 %v1357, %v1360
  %v1362 = vrot.slane %v1361, 4
  %v1364 = vshll.u32 %v1203, 16
  %v1366 = vrot.slane %v1364, 5
  %v1367 = vsel %vm227, %v1362, %v1366
  %v1369 = vshrl.u32 %v1204, 16
  %v1371 = vrot.slane %v1369, 4
  %v1372 = vshll.u32 %v1204, 16
  %v1374 = vrot.slane %v1372, 5
  %v1375 = vor.u32 %v1371, %v1374
  %v1376 = vrot.slane %v1375, 4
  %v1378 = vshll.u32 %v1205, 16
  %v1380 = vrot.slane %v1378, 5
  %v1381 = vsel %vm227, %v1376, %v1380
  %v1383 = vshrl.u32 %v1206, 16
  %v1385 = vrot.slane %v1383, 4
  %v1386 = vshll.u32 %v1206, 16
  %v1388 = vrot.slane %v1386, 5
  %v1389 = vor.u32 %v1385, %v1388
  %v1390 = vrot.slane %v1389, 4
  %v1392 = vshll.u32 %v1207, 16
  %v1394 = vrot.slane %v1392, 5
  %v1395 = vsel %vm227, %v1390, %v1394
  %v1397 = vshrl.u32 %v1208, 16
  %v1399 = vrot.slane %v1397, 4
  %v1400 = vshll.u32 %v1208, 16
  %v1402 = vrot.slane %v1400, 5
  %v1403 = vor.u32 %v1399, %v1402
  %v1404 = vrot.slane %v1403, 4
  %v1406 = vshll.u32 %v1209, 16
  %v1408 = vrot.slane %v1406, 5
  %v1409 = vsel %vm227, %v1404, %v1408
  %v1411 = vshrl.u32 %v1210, 16
  %v1413 = vrot.slane %v1411, 4
  %v1414 = vshll.u32 %v1210, 16
  %v1416 = vrot.slane %v1414, 5
  %v1417 = vor.u32 %v1413, %v1416
  %v1418 = vrot.slane %v1417, 4
  %v1420 = vshll.u32 %v1211, 16
  %v1422 = vrot.slane %v1420, 5
  %v1423 = vsel %vm227, %v1418, %v1422
  %v1425 = vshrl.u32 %v1212, 16
  %v1427 = vrot.slane %v1425, 4
  %v1428 = vshll.u32 %v1212, 16
  %v1430 = vrot.slane %v1428, 5
  %v1431 = vor.u32 %v1427, %v1430
  %v1432 = vrot.slane %v1431, 4
  %v1434 = vshll.u32 %v1213, 16
  %v1436 = vrot.slane %v1434, 5
  %v1437 = vsel %vm227, %v1432, %v1436
  %v1438 = vunpack.c.l.b16 %v1227
  %v1439 = vunpack.c.l.b16 %v1241
  %v1440 = vunpack.c.l.b16 %v1255
  %v1441 = vunpack.c.l.b16 %v1269
  %v1442 = vunpack.c.l.b16 %v1283
  %v1443 = vunpack.c.l.b16 %v1297
  %v1444 = vunpack.c.l.b16 %v1311
  %v1445 = vunpack.c.l.b16 %v1325
  %v1446 = vunpack.c.l.b16 %v1339
  %v1447 = vunpack.c.l.b16 %v1353
  %v1448 = vunpack.c.l.b16 %v1367
  %v1449 = vunpack.c.l.b16 %v1381
  %v1450 = vunpack.c.l.b16 %v1395
  %v1451 = vunpack.c.l.b16 %v1409
  %v1452 = vunpack.c.l.b16 %v1423
  %v1453 = vunpack.c.l.b16 %v1437
  %v1454 = vpack.c.b16 %v1439, %v1438
  %v1455 = vpack.c.b16 %v1441, %v1440
  %v1456 = vpack.c.b16 %v1443, %v1442
  %v1457 = vpack.c.b16 %v1445, %v1444
  %v1458 = vpack.c.b16 %v1447, %v1446
  %v1459 = vpack.c.b16 %v1449, %v1448
  %v1460 = vpack.c.b16 %v1451, %v1450
  %v1461 = vpack.c.b16 %v1453, %v1452
  %1462 = vrot.lane.b32.xlu0 %v1454, 32
  %v1463 = vpop.permute.xlu0 %1462
  %1464 = vrot.lane.b32.xlu0 %v1455, 32
  %v1465 = vpop.permute.xlu0 %1464
  %1466 = vrot.lane.b32.xlu0 %v1456, 32
  %v1467 = vpop.permute.xlu0 %1466
  %1468 = vrot.lane.b32.xlu0 %v1457, 32
  %v1469 = vpop.permute.xlu0 %1468
  %1470 = vrot.lane.b32.xlu0 %v1458, 32
  %v1471 = vpop.permute.xlu0 %1470
  %1472 = vrot.lane.b32.xlu0 %v1459, 32
  %v1473 = vpop.permute.xlu0 %1472
  %1474 = vrot.lane.b32.xlu0 %v1460, 32
  %v1475 = vpop.permute.xlu0 %1474
  %1476 = vrot.lane.b32.xlu0 %v1461, 32
  %v1477 = vpop.permute.xlu0 %1476
  %vm1486 = vcmask 294144
  %1487 = vst.msk [vmem:[#allocation2] sm:$0xff] %vm1486, %v1463
  %1488 = vst.msk [vmem:[#allocation2 + $0x8] sm:$0xff] %vm1486, %v1465
  %1489 = vst.msk [vmem:[#allocation2 + $0x10] sm:$0xff] %vm1486, %v1467
  %1490 = vst.msk [vmem:[#allocation2 + $0x18] sm:$0xff] %vm1486, %v1469
  %1491 = vst.msk [vmem:[#allocation2 + $0x20] sm:$0xff] %vm1486, %v1471
  %1492 = vst.msk [vmem:[#allocation2 + $0x28] sm:$0xff] %vm1486, %v1473
  %1493 = vst.msk [vmem:[#allocation2 + $0x30] sm:$0xff] %vm1486, %v1475
  %1494 = vst.msk [vmem:[#allocation2 + $0x38] sm:$0xff] %vm1486, %v1477
  %v1495 = vld [vmem:[#allocation2] sm:$0xff]
  %v1496 = vld [vmem:[#allocation2 + $0x8] sm:$0xff]
  %v1497 = vld [vmem:[#allocation2 + $0x10] sm:$0xff]
  %v1498 = vld [vmem:[#allocation2 + $0x18] sm:$0xff]
  %v1499 = vld [vmem:[#allocation2 + $0x20] sm:$0xff]
  %v1500 = vld [vmem:[#allocation2 + $0x28] sm:$0xff]
  %v1501 = vld [vmem:[#allocation2 + $0x30] sm:$0xff]
  %v1502 = vld [vmem:[#allocation2 + $0x38] sm:$0xff]
  %v1503 = vld [vmem:[%s7] sm:$0x3]
  %1512 = vrot.lane.b32.xlu0 %v1495, 112
  %v1513 = vpop.permute.xlu0 %1512
  %1514 = vrot.lane.b32.xlu0 %v1496, 112
  %v1515 = vpop.permute.xlu0 %1514
  %1516 = vrot.lane.b32.xlu0 %v1497, 112
  %v1517 = vpop.permute.xlu0 %1516
  %1518 = vrot.lane.b32.xlu0 %v1498, 112
  %v1519 = vpop.permute.xlu0 %1518
  %1520 = vrot.lane.b32.xlu0 %v1499, 112
  %v1521 = vpop.permute.xlu0 %1520
  %1522 = vrot.lane.b32.xlu0 %v1500, 112
  %v1523 = vpop.permute.xlu0 %1522
  %1524 = vrot.lane.b32.xlu0 %v1501, 112
  %v1525 = vpop.permute.xlu0 %1524
  %1526 = vrot.lane.b32.xlu0 %v1502, 112
  %v1527 = vpop.permute.xlu0 %1526
  %v1529 = vsel %vm94, %v1513, 0
  %v1532 = vsel %vm94, %v1515, 0
  %v1535 = vsel %vm94, %v1517, 0
  %v1538 = vsel %vm94, %v1519, 0
  %v1541 = vsel %vm94, %v1521, 0
  %v1544 = vsel %vm94, %v1523, 0
  %v1547 = vsel %vm94, %v1525, 0
  %v1550 = vsel %vm94, %v1527, 0
  %vm1552 = vcmask 1041408
  %v1554 = vsel %vm1552, %v1503, 0
  %1556 = vmatprep.subr.bf16.mxu0 0
  %1557 = vmatpush1.bf16.msra.mxu0 %v1554
  %1558 = vmatprep.subr.bf16.mxu0 0
  %1559 = vmatpush1.bf16.msra.mxu0 0
  %1560 = vmatprep.subr.bf16.mxu0 0
  %1561 = vmatpush1.bf16.msra.mxu0 0
  %1562 = vmatprep.subr.bf16.mxu0 0
  %1563 = vmatpush1.bf16.msra.mxu0 0
  %1564 = vmatprep.subr.bf16.mxu0 0
  %1565 = vmatpush1.bf16.msra.mxu0 0
  %1566 = vmatprep.subr.bf16.mxu0 0
  %1567 = vmatpush1.bf16.msra.mxu0 0
  %1568 = vmatprep.subr.bf16.mxu0 0
  %1569 = vmatpush1.bf16.msra.mxu0 0
  %1570 = vmatprep.subr.bf16.mxu0 0
  %1571 = vmatpush1.bf16.msra.mxu0 0
  %1572 = vmatprep.subr.bf16.mxu0 0
  %1573 = vmatpush1.bf16.msra.mxu0 0
  %1574 = vmatprep.subr.bf16.mxu0 0
  %1575 = vmatpush1.bf16.msra.mxu0 0
  %1576 = vmatprep.subr.bf16.mxu0 0
  %1577 = vmatpush1.bf16.msra.mxu0 0
  %1578 = vmatprep.subr.bf16.mxu0 0
  %1579 = vmatpush1.bf16.msra.mxu0 0
  %1580 = vmatprep.subr.bf16.mxu0 0
  %1581 = vmatpush1.bf16.msra.mxu0 0
  %1582 = vmatprep.subr.bf16.mxu0 0
  %1583 = vmatpush1.bf16.msra.mxu0 0
  %1584 = vmatprep.subr.bf16.mxu0 0
  %1585 = vmatpush1.bf16.msra.mxu0 0
  %1586 = vmatprep.subr.bf16.mxu0 0
  %1587 = vmatpush1.bf16.msra.mxu0 0
  %1588 = vmatprep.mubr.bf16.mxu0 0
  %1589 = vmatmul.mubr.bf16.gmra.mrb[0].mxu0 %v1529
  %v1590 = vpop.f32.mrb[0].mxu0
  %v1591 = vadd.f32 0.0, %v1590
  %v1592 = vpop.f32.mrb[0].mxu0
  %v1593 = vpop.f32.mrb[0].mxu0
  %v1594 = vadd.f32 0.0, %v1593
  %v1595 = vpop.f32.mrb[0].mxu0
  %1596 = vmatprep.mubr.bf16.mxu0 0
  %1597 = vmatmul.mubr.bf16.gmra.mrb[0].mxu0 %v1532
  %v1598 = vpop.f32.mrb[0].mxu0
  %v1599 = vadd.f32 0.0, %v1598
  %v1600 = vpop.f32.mrb[0].mxu0
  %v1601 = vpop.f32.mrb[0].mxu0
  %v1602 = vadd.f32 0.0, %v1601
  %v1603 = vpop.f32.mrb[0].mxu0
  %1604 = vmatprep.mubr.bf16.mxu0 0
  %1605 = vmatmul.mubr.bf16.gmra.mrb[0].mxu0 %v1535
  %v1606 = vpop.f32.mrb[0].mxu0
  %v1607 = vadd.f32 0.0, %v1606
  %v1608 = vpop.f32.mrb[0].mxu0
  %v1609 = vpop.f32.mrb[0].mxu0
  %v1610 = vadd.f32 0.0, %v1609
  %v1611 = vpop.f32.mrb[0].mxu0
  %1612 = vmatprep.mubr.bf16.mxu0 0
  %1613 = vmatmul.mubr.bf16.gmra.mrb[0].mxu0 %v1538
  %v1614 = vpop.f32.mrb[0].mxu0
  %v1615 = vadd.f32 0.0, %v1614
  %v1616 = vpop.f32.mrb[0].mxu0
  %v1617 = vpop.f32.mrb[0].mxu0
  %v1618 = vadd.f32 0.0, %v1617
  %v1619 = vpop.f32.mrb[0].mxu0
  %1620 = vmatprep.mubr.bf16.mxu0 0
  %1621 = vmatmul.mubr.bf16.gmra.mrb[0].mxu0 %v1541
  %v1622 = vpop.f32.mrb[0].mxu0
  %v1623 = vadd.f32 0.0, %v1622
  %v1624 = vpop.f32.mrb[0].mxu0
  %v1625 = vpop.f32.mrb[0].mxu0
  %v1626 = vadd.f32 0.0, %v1625
  %v1627 = vpop.f32.mrb[0].mxu0
  %1628 = vmatprep.mubr.bf16.mxu0 0
  %1629 = vmatmul.mubr.bf16.gmra.mrb[0].mxu0 %v1544
  %v1630 = vpop.f32.mrb[0].mxu0
  %v1631 = vadd.f32 0.0, %v1630
  %v1632 = vpop.f32.mrb[0].mxu0
  %v1633 = vpop.f32.mrb[0].mxu0
  %v1634 = vadd.f32 0.0, %v1633
  %v1635 = vpop.f32.mrb[0].mxu0
  %1636 = vmatprep.mubr.bf16.mxu0 0
  %1637 = vmatmul.mubr.bf16.gmra.mrb[0].mxu0 %v1547
  %v1638 = vpop.f32.mrb[0].mxu0
  %v1639 = vadd.f32 0.0, %v1638
  %v1640 = vpop.f32.mrb[0].mxu0
  %v1641 = vpop.f32.mrb[0].mxu0
  %v1642 = vadd.f32 0.0, %v1641
  %v1643 = vpop.f32.mrb[0].mxu0
  %1644 = vmatprep.mubr.bf16.mxu0 0
  %1645 = vmatmul.mubr.bf16.gmra.mrb[0].mxu0 %v1550
  %v1646 = vpop.f32.mrb[0].mxu0
  %v1647 = vadd.f32 0.0, %v1646
  %v1648 = vpop.f32.mrb[0].mxu0
  %v1649 = vpop.f32.mrb[0].mxu0
  %v1650 = vadd.f32 0.0, %v1649
  %v1651 = vpop.f32.mrb[0].mxu0
  %1652 = vdwg.mxu0
  %v1653 = vld [vmem:[%s1] sm:$0xf]
  %v1654 = vld [vmem:[%s1 + $0x4] sm:$0xf]
  %v1655 = vld [vmem:[%s1 + $0x8] sm:$0xf]
  %v1656 = vld [vmem:[%s1 + $0xc] sm:$0xf]
  %v1657 = vld [vmem:[%s1 + $0x10] sm:$0x3]
  %v1663 = vunpack.c.l.b16 %v1653
  %v1664 = vunpack.c.l.b16 %v1654
  %v1665 = vunpack.c.l.b16 %v1655
  %v1666 = vunpack.c.l.b16 %v1656
  %v1667 = vunpack.c.l.b16 %v1657
  %v1668 = vpack.c.b16 %v1664, %v1663
  %v1669 = vpack.c.b16 %v1666, %v1665
  %v1670 = vpack.c.b16 %v1667, %v1667
  %vm1673 = vcmask 293888
  %v1675 = vsel %vm1673, %v1495, 0
  %v1678 = vsel %vm1673, %v1496, 0
  %v1681 = vsel %vm1673, %v1497, 0
  %v1684 = vsel %vm1673, %v1498, 0
  %v1687 = vsel %vm1673, %v1499, 0
  %v1690 = vsel %vm1673, %v1500, 0
  %v1693 = vsel %vm1673, %v1501, 0
  %v1696 = vsel %vm1673, %v1502, 0
  %v1699 = vsel %vm1552, %v1670, 0
  %1701 = vmatprep.subr.bf16.mxu0 0
  %1702 = vmatpush1.bf16.msra.mxu0 %v1668
  %1703 = vmatprep.subr.bf16.mxu0 0
  %1704 = vmatpush1.bf16.msra.mxu0 %v1669
  %1705 = vmatprep.subr.bf16.mxu0 0
  %1706 = vmatpush1.bf16.msra.mxu0 %v1699
  %1707 = vmatprep.subr.bf16.mxu0 0
  %1708 = vmatpush1.bf16.msra.mxu0 0
  %1709 = vmatprep.subr.bf16.mxu0 0
  %1710 = vmatpush1.bf16.msra.mxu0 0
  %1711 = vmatprep.subr.bf16.mxu0 0
  %1712 = vmatpush1.bf16.msra.mxu0 0
  %1713 = vmatprep.subr.bf16.mxu0 0
  %1714 = vmatpush1.bf16.msra.mxu0 0
  %1715 = vmatprep.subr.bf16.mxu0 0
  %1716 = vmatpush1.bf16.msra.mxu0 0
  %1717 = vmatprep.subr.bf16.mxu0 0
  %1718 = vmatpush1.bf16.msra.mxu0 0
  %1719 = vmatprep.subr.bf16.mxu0 0
  %1720 = vmatpush1.bf16.msra.mxu0 0
  %1721 = vmatprep.subr.bf16.mxu0 0
  %1722 = vmatpush1.bf16.msra.mxu0 0
  %1723 = vmatprep.subr.bf16.mxu0 0
  %1724 = vmatpush1.bf16.msra.mxu0 0
  %1725 = vmatprep.subr.bf16.mxu0 0
  %1726 = vmatpush1.bf16.msra.mxu0 0
  %1727 = vmatprep.subr.bf16.mxu0 0
  %1728 = vmatpush1.bf16.msra.mxu0 0
  %1729 = vmatprep.subr.bf16.mxu0 0
  %1730 = vmatpush1.bf16.msra.mxu0 0
  %1731 = vmatprep.subr.bf16.mxu0 0
  %1732 = vmatpush1.bf16.msra.mxu0 0
  %1733 = vmatprep.mubr.bf16.mxu0 0
  %1734 = vmatmul.mubr.bf16.gmra.mrb[0].mxu0 %v1675
  %v1735 = vpop.f32.mrb[0].mxu0
  %v1736 = vadd.f32 0.0, %v1735
  %v1737 = vpop.f32.mrb[0].mxu0
  %v1738 = vpop.f32.mrb[0].mxu0
  %v1739 = vadd.f32 0.0, %v1738
  %v1740 = vpop.f32.mrb[0].mxu0
  %1741 = vmatprep.mubr.bf16.mxu0 0
  %1742 = vmatmul.mubr.bf16.gmra.mrb[0].mxu0 %v1678
  %v1743 = vpop.f32.mrb[0].mxu0
  %v1744 = vadd.f32 0.0, %v1743
  %v1745 = vpop.f32.mrb[0].mxu0
  %v1746 = vpop.f32.mrb[0].mxu0
  %v1747 = vadd.f32 0.0, %v1746
  %v1748 = vpop.f32.mrb[0].mxu0
  %1749 = vmatprep.mubr.bf16.mxu0 0
  %1750 = vmatmul.mubr.bf16.gmra.mrb[0].mxu0 %v1681
  %v1751 = vpop.f32.mrb[0].mxu0
  %v1752 = vadd.f32 0.0, %v1751
  %v1753 = vpop.f32.mrb[0].mxu0
  %v1754 = vpop.f32.mrb[0].mxu0
  %v1755 = vadd.f32 0.0, %v1754
  %v1756 = vpop.f32.mrb[0].mxu0
  %1757 = vmatprep.mubr.bf16.mxu0 0
  %1758 = vmatmul.mubr.bf16.gmra.mrb[0].mxu0 %v1684
  %v1759 = vpop.f32.mrb[0].mxu0
  %v1760 = vadd.f32 0.0, %v1759
  %v1761 = vpop.f32.mrb[0].mxu0
  %v1762 = vpop.f32.mrb[0].mxu0
  %v1763 = vadd.f32 0.0, %v1762
  %v1764 = vpop.f32.mrb[0].mxu0
  %1765 = vmatprep.mubr.bf16.mxu0 0
  %1766 = vmatmul.mubr.bf16.gmra.mrb[0].mxu0 %v1687
  %v1767 = vpop.f32.mrb[0].mxu0
  %v1768 = vadd.f32 0.0, %v1767
  %v1769 = vpop.f32.mrb[0].mxu0
  %v1770 = vpop.f32.mrb[0].mxu0
  %v1771 = vadd.f32 0.0, %v1770
  %v1772 = vpop.f32.mrb[0].mxu0
  %1773 = vmatprep.mubr.bf16.mxu0 0
  %1774 = vmatmul.mubr.bf16.gmra.mrb[0].mxu0 %v1690
  %v1775 = vpop.f32.mrb[0].mxu0
  %v1776 = vadd.f32 0.0, %v1775
  %v1777 = vpop.f32.mrb[0].mxu0
  %v1778 = vpop.f32.mrb[0].mxu0
  %v1779 = vadd.f32 0.0, %v1778
  %v1780 = vpop.f32.mrb[0].mxu0
  %1781 = vmatprep.mubr.bf16.mxu0 0
  %1782 = vmatmul.mubr.bf16.gmra.mrb[0].mxu0 %v1693
  %v1783 = vpop.f32.mrb[0].mxu0
  %v1784 = vadd.f32 0.0, %v1783
  %v1785 = vpop.f32.mrb[0].mxu0
  %v1786 = vpop.f32.mrb[0].mxu0
  %v1787 = vadd.f32 0.0, %v1786
  %v1788 = vpop.f32.mrb[0].mxu0
  %1789 = vmatprep.mubr.bf16.mxu0 0
  %1790 = vmatmul.mubr.bf16.gmra.mrb[0].mxu0 %v1696
  %v1791 = vpop.f32.mrb[0].mxu0
  %v1792 = vadd.f32 0.0, %v1791
  %v1793 = vpop.f32.mrb[0].mxu0
  %v1794 = vpop.f32.mrb[0].mxu0
  %v1795 = vadd.f32 0.0, %v1794
  %v1796 = vpop.f32.mrb[0].mxu0
  %1797 = vdwg.mxu0
  %v1798 = vld [vmem:[%s2] sm:$0x1]
  %v1800 = vlaneseq
  %v1801 = vshrl.u32 %v1800, 7
  %v1802 = vsub.s32 0, %v1801
  %v1803 = vrot.slane %v1798, %v1802
  %v1805 = vmul.f32 %v1736, %v1803
  %v1806 = vmul.f32 %v1739, %v1803
  %v1807 = vmul.f32 %v1744, %v1803
  %v1808 = vmul.f32 %v1747, %v1803
  %v1809 = vmul.f32 %v1752, %v1803
  %v1810 = vmul.f32 %v1755, %v1803
  %v1811 = vmul.f32 %v1760, %v1803
  %v1812 = vmul.f32 %v1763, %v1803
  %v1813 = vmul.f32 %v1768, %v1803
  %v1814 = vmul.f32 %v1771, %v1803
  %v1815 = vmul.f32 %v1776, %v1803
  %v1816 = vmul.f32 %v1779, %v1803
  %v1817 = vmul.f32 %v1784, %v1803
  %v1818 = vmul.f32 %v1787, %v1803
  %v1819 = vmul.f32 %v1792, %v1803
  %v1820 = vmul.f32 %v1795, %v1803
  %v1821 = vld [vmem:[%s3] sm:$0x1]
  %v1823 = vlaneseq
  %v1824 = vshrl.u32 %v1823, 7
  %v1825 = vsub.s32 0, %v1824
  %v1826 = vrot.slane %v1821, %v1825
  %v1828 = vadd.f32 %v1805, %v1826
  %v1829 = vadd.f32 %v1806, %v1826
  %v1830 = vadd.f32 %v1807, %v1826
  %v1831 = vadd.f32 %v1808, %v1826
  %v1832 = vadd.f32 %v1809, %v1826
  %v1833 = vadd.f32 %v1810, %v1826
  %v1834 = vadd.f32 %v1811, %v1826
  %v1835 = vadd.f32 %v1812, %v1826
  %v1836 = vadd.f32 %v1813, %v1826
  %v1837 = vadd.f32 %v1814, %v1826
  %v1838 = vadd.f32 %v1815, %v1826
  %v1839 = vadd.f32 %v1816, %v1826
  %v1840 = vadd.f32 %v1817, %v1826
  %v1841 = vadd.f32 %v1818, %v1826
  %v1842 = vadd.f32 %v1819, %v1826
  %v1843 = vadd.f32 %v1820, %v1826
  %v1844 = vmax.f32 %v1828, 0.0
  %v1845 = vmax.f32 %v1829, 0.0
  %v1846 = vmax.f32 %v1830, 0.0
  %v1847 = vmax.f32 %v1831, 0.0
  %v1848 = vmax.f32 %v1832, 0.0
  %v1849 = vmax.f32 %v1833, 0.0
  %v1850 = vmax.f32 %v1834, 0.0
  %v1851 = vmax.f32 %v1835, 0.0
  %v1852 = vmax.f32 %v1836, 0.0
  %v1853 = vmax.f32 %v1837, 0.0
  %v1854 = vmax.f32 %v1838, 0.0
  %v1855 = vmax.f32 %v1839, 0.0
  %v1856 = vmax.f32 %v1840, 0.0
  %v1857 = vmax.f32 %v1841, 0.0
  %v1858 = vmax.f32 %v1842, 0.0
  %v1859 = vmax.f32 %v1843, 0.0
  %vm1860 = vcmask 60416
  %1861 = vst.msk [vmem:[#allocation3] sm:$0xf] %vm1860, 0
  %vm1862 = vcmask 57344
  %1863 = vst.msk [vmem:[#allocation3 + $0x4] sm:$0x1] %vm1862, 0
  %1864 = vst.msk [vmem:[#allocation3 + $0x50] sm:$0xf] %vm1860, 0
  %1865 = vst.msk [vmem:[#allocation3 + $0x54] sm:$0x1] %vm1862, 0
  %s1866 = scalar_lea.vmem [#allocation3], 72
  %1867 = vst.msk [vmem:[%s1866] sm:$0xf] %vm1860, 0
  %1868 = vst.msk [vmem:[%s1866 + $0x4] sm:$0x1] %vm1862, 0
  %1869 = vst.msk [vmem:[%s1866 + $0x50] sm:$0xf] %vm1860, 0
  %1870 = vst.msk [vmem:[%s1866 + $0x54] sm:$0x1] %vm1862, 0
  %s1871 = scalar_lea.vmem [#allocation3], 8
  %vm1872 = vcmask 57344
  %vm1873 = vsmask.f32 256
  %vm1874 = vmand %vm1872, %vm1873
  %v1875 = vld [vmem:[%s1871] sm:$0x1]
  %v1876 = vsel %vm1874, 0, %v1875
  %1877 = vst [vmem:[%s1871] sm:$0x1] %v1876
  %v1878 = vld [vmem:[%s1871 + $0x8] sm:$0x1]
  %v1879 = vsel %vm1874, 0, %v1878
  %1880 = vst [vmem:[%s1871 + $0x8] sm:$0x1] %v1879
  %v1881 = vld [vmem:[%s1871 + $0x10] sm:$0x1]
  %v1882 = vsel %vm1874, 0, %v1881
  %1883 = vst [vmem:[%s1871 + $0x10] sm:$0x1] %v1882
  %v1884 = vld [vmem:[%s1871 + $0x18] sm:$0x1]
  %v1885 = vsel %vm1874, 0, %v1884
  %1886 = vst [vmem:[%s1871 + $0x18] sm:$0x1] %v1885
  %v1887 = vld [vmem:[%s1871 + $0x20] sm:$0x1]
  %v1888 = vsel %vm1874, 0, %v1887
  %1889 = vst [vmem:[%s1871 + $0x20] sm:$0x1] %v1888
  %v1890 = vld [vmem:[%s1871 + $0x28] sm:$0x1]
  %v1891 = vsel %vm1874, 0, %v1890
  %1892 = vst [vmem:[%s1871 + $0x28] sm:$0x1] %v1891
  %v1893 = vld [vmem:[%s1871 + $0x30] sm:$0x1]
  %v1894 = vsel %vm1874, 0, %v1893
  %1895 = vst [vmem:[%s1871 + $0x30] sm:$0x1] %v1894
  %v1896 = vld [vmem:[%s1871 + $0x38] sm:$0x1]
  %v1897 = vsel %vm1874, 0, %v1896
  %1898 = vst [vmem:[%s1871 + $0x38] sm:$0x1] %v1897
  %v1899 = vld [vmem:[%s1871 + $0x50] sm:$0x1]
  %v1900 = vsel %vm1874, 0, %v1899
  %1901 = vst [vmem:[%s1871 + $0x50] sm:$0x1] %v1900
  %v1902 = vld [vmem:[%s1871 + $0x58] sm:$0x1]
  %v1903 = vsel %vm1874, 0, %v1902
  %1904 = vst [vmem:[%s1871 + $0x58] sm:$0x1] %v1903
  %v1905 = vld [vmem:[%s1871 + $0x60] sm:$0x1]
  %v1906 = vsel %vm1874, 0, %v1905
  %1907 = vst [vmem:[%s1871 + $0x60] sm:$0x1] %v1906
  %v1908 = vld [vmem:[%s1871 + $0x68] sm:$0x1]
  %v1909 = vsel %vm1874, 0, %v1908
  %1910 = vst [vmem:[%s1871 + $0x68] sm:$0x1] %v1909
  %v1911 = vld [vmem:[%s1871 + $0x70] sm:$0x1]
  %v1912 = vsel %vm1874, 0, %v1911
  %1913 = vst [vmem:[%s1871 + $0x70] sm:$0x1] %v1912
  %v1914 = vld [vmem:[%s1871 + $0x78] sm:$0x1]
  %v1915 = vsel %vm1874, 0, %v1914
  %1916 = vst [vmem:[%s1871 + $0x78] sm:$0x1] %v1915
  %v1917 = vld [vmem:[%s1871 + $0x80] sm:$0x1]
  %v1918 = vsel %vm1874, 0, %v1917
  %1919 = vst [vmem:[%s1871 + $0x80] sm:$0x1] %v1918
  %v1920 = vld [vmem:[%s1871 + $0x88] sm:$0x1]
  %v1921 = vsel %vm1874, 0, %v1920
  %1922 = vst [vmem:[%s1871 + $0x88] sm:$0x1] %v1921
  %vm1923 = vsmask.f32 7938
  %vm1924 = vmand %vm1872, %vm1923
  %v1925 = vld [vmem:[%s1871 + $0x4] sm:$0x1]
  %v1926 = vsel %vm1924, 0, %v1925
  %1927 = vst [vmem:[%s1871 + $0x4] sm:$0x1] %v1926
  %v1928 = vld [vmem:[%s1871 + $0xc] sm:$0x1]
  %v1929 = vsel %vm1924, 0, %v1928
  %1930 = vst [vmem:[%s1871 + $0xc] sm:$0x1] %v1929
  %v1931 = vld [vmem:[%s1871 + $0x14] sm:$0x1]
  %v1932 = vsel %vm1924, 0, %v1931
  %1933 = vst [vmem:[%s1871 + $0x14] sm:$0x1] %v1932
  %v1934 = vld [vmem:[%s1871 + $0x1c] sm:$0x1]
  %v1935 = vsel %vm1924, 0, %v1934
  %1936 = vst [vmem:[%s1871 + $0x1c] sm:$0x1] %v1935
  %v1937 = vld [vmem:[%s1871 + $0x24] sm:$0x1]
  %v1938 = vsel %vm1924, 0, %v1937
  %1939 = vst [vmem:[%s1871 + $0x24] sm:$0x1] %v1938
  %v1940 = vld [vmem:[%s1871 + $0x2c] sm:$0x1]
  %v1941 = vsel %vm1924, 0, %v1940
  %1942 = vst [vmem:[%s1871 + $0x2c] sm:$0x1] %v1941
  %v1943 = vld [vmem:[%s1871 + $0x34] sm:$0x1]
  %v1944 = vsel %vm1924, 0, %v1943
  %1945 = vst [vmem:[%s1871 + $0x34] sm:$0x1] %v1944
  %v1946 = vld [vmem:[%s1871 + $0x3c] sm:$0x1]
  %v1947 = vsel %vm1924, 0, %v1946
  %1948 = vst [vmem:[%s1871 + $0x3c] sm:$0x1] %v1947
  %v1949 = vld [vmem:[%s1871 + $0x54] sm:$0x1]
  %v1950 = vsel %vm1924, 0, %v1949
  %1951 = vst [vmem:[%s1871 + $0x54] sm:$0x1] %v1950
  %v1952 = vld [vmem:[%s1871 + $0x5c] sm:$0x1]
  %v1953 = vsel %vm1924, 0, %v1952
  %1954 = vst [vmem:[%s1871 + $0x5c] sm:$0x1] %v1953
  %v1955 = vld [vmem:[%s1871 + $0x64] sm:$0x1]
  %v1956 = vsel %vm1924, 0, %v1955
  %1957 = vst [vmem:[%s1871 + $0x64] sm:$0x1] %v1956
  %v1958 = vld [vmem:[%s1871 + $0x6c] sm:$0x1]
  %v1959 = vsel %vm1924, 0, %v1958
  %1960 = vst [vmem:[%s1871 + $0x6c] sm:$0x1] %v1959
  %v1961 = vld [vmem:[%s1871 + $0x74] sm:$0x1]
  %v1962 = vsel %vm1924, 0, %v1961
  %1963 = vst [vmem:[%s1871 + $0x74] sm:$0x1] %v1962
  %v1964 = vld [vmem:[%s1871 + $0x7c] sm:$0x1]
  %v1965 = vsel %vm1924, 0, %v1964
  %1966 = vst [vmem:[%s1871 + $0x7c] sm:$0x1] %v1965
  %v1967 = vld [vmem:[%s1871 + $0x84] sm:$0x1]
  %v1968 = vsel %vm1924, 0, %v1967
  %1969 = vst [vmem:[%s1871 + $0x84] sm:$0x1] %v1968
  %v1970 = vld [vmem:[%s1871 + $0x8c] sm:$0x1]
  %v1971 = vsel %vm1924, 0, %v1970
  %1972 = vst [vmem:[%s1871 + $0x8c] sm:$0x1] %v1971
  %v1973 = vpack.c.bf16 %v1844, %v1844
  %v1974 = vpack.c.bf16 %v1845, %v1845
  %v1975 = vpack.c.bf16 %v1846, %v1846
  %v1976 = vpack.c.bf16 %v1847, %v1847
  %v1977 = vpack.c.bf16 %v1848, %v1848
  %v1978 = vpack.c.bf16 %v1849, %v1849
  %v1979 = vpack.c.bf16 %v1850, %v1850
  %v1980 = vpack.c.bf16 %v1851, %v1851
  %v1981 = vpack.c.bf16 %v1852, %v1852
  %v1982 = vpack.c.bf16 %v1853, %v1853
  %v1983 = vpack.c.bf16 %v1854, %v1854
  %v1984 = vpack.c.bf16 %v1855, %v1855
  %v1985 = vpack.c.bf16 %v1856, %v1856
  %v1986 = vpack.c.bf16 %v1857, %v1857
  %v1987 = vpack.c.bf16 %v1858, %v1858
  %v1988 = vpack.c.bf16 %v1859, %v1859
  %v2005 = vunpack.c.l.b16 %v1973
  %v2006 = vunpack.c.l.b16 %v1974
  %v2007 = vunpack.c.l.b16 %v1975
  %v2008 = vunpack.c.l.b16 %v1976
  %v2009 = vunpack.c.l.b16 %v1977
  %v2010 = vunpack.c.l.b16 %v1978
  %v2011 = vunpack.c.l.b16 %v1979
  %v2012 = vunpack.c.l.b16 %v1980
  %v2013 = vunpack.c.l.b16 %v1981
  %v2014 = vunpack.c.l.b16 %v1982
  %v2015 = vunpack.c.l.b16 %v1983
  %v2016 = vunpack.c.l.b16 %v1984
  %v2017 = vunpack.c.l.b16 %v1985
  %v2018 = vunpack.c.l.b16 %v1986
  %v2019 = vunpack.c.l.b16 %v1987
  %v2020 = vunpack.c.l.b16 %v1988
  %v2021 = vpack.c.b16 %v2005, %v2005
  %v2022 = vpack.c.b16 %v2006, %v2006
  %v2023 = vpack.c.b16 %v2007, %v2007
  %v2024 = vpack.c.b16 %v2008, %v2008
  %v2025 = vpack.c.b16 %v2009, %v2009
  %v2026 = vpack.c.b16 %v2010, %v2010
  %v2027 = vpack.c.b16 %v2011, %v2011
  %v2028 = vpack.c.b16 %v2012, %v2012
  %v2029 = vpack.c.b16 %v2013, %v2013
  %v2030 = vpack.c.b16 %v2014, %v2014
  %v2031 = vpack.c.b16 %v2015, %v2015
  %v2032 = vpack.c.b16 %v2016, %v2016
  %v2033 = vpack.c.b16 %v2017, %v2017
  %v2034 = vpack.c.b16 %v2018, %v2018
  %v2035 = vpack.c.b16 %v2019, %v2019
  %v2036 = vpack.c.b16 %v2020, %v2020
  %v2038 = vshrl.u32 %v2021, 16
  %v2040 = vrot.slane %v2038, 7
  %v2041 = vshll.u32 %v2021, 16
  %v2043 = vor.u32 %v2040, %v2041
  %v2044 = vrot.slane %v2040, 4
  %v2046 = vshrl.u32 %v2022, 16
  %v2048 = vrot.slane %v2046, 7
  %v2049 = vshll.u32 %v2022, 16
  %v2051 = vor.u32 %v2048, %v2049
  %v2052 = vrot.slane %v2048, 4
  %v2054 = vshrl.u32 %v2023, 16
  %v2056 = vrot.slane %v2054, 7
  %v2057 = vshll.u32 %v2023, 16
  %v2059 = vor.u32 %v2056, %v2057
  %v2060 = vrot.slane %v2056, 4
  %v2062 = vshrl.u32 %v2024, 16
  %v2064 = vrot.slane %v2062, 7
  %v2065 = vshll.u32 %v2024, 16
  %v2067 = vor.u32 %v2064, %v2065
  %v2068 = vrot.slane %v2064, 4
  %v2070 = vshrl.u32 %v2025, 16
  %v2072 = vrot.slane %v2070, 7
  %v2073 = vshll.u32 %v2025, 16
  %v2075 = vor.u32 %v2072, %v2073
  %v2076 = vrot.slane %v2072, 4
  %v2078 = vshrl.u32 %v2026, 16
  %v2080 = vrot.slane %v2078, 7
  %v2081 = vshll.u32 %v2026, 16
  %v2083 = vor.u32 %v2080, %v2081
  %v2084 = vrot.slane %v2080, 4
  %v2086 = vshrl.u32 %v2027, 16
  %v2088 = vrot.slane %v2086, 7
  %v2089 = vshll.u32 %v2027, 16
  %v2091 = vor.u32 %v2088, %v2089
  %v2092 = vrot.slane %v2088, 4
  %v2094 = vshrl.u32 %v2028, 16
  %v2096 = vrot.slane %v2094, 7
  %v2097 = vshll.u32 %v2028, 16
  %v2099 = vor.u32 %v2096, %v2097
  %v2100 = vrot.slane %v2096, 4
  %v2102 = vshrl.u32 %v2029, 16
  %v2104 = vrot.slane %v2102, 7
  %v2105 = vshll.u32 %v2029, 16
  %v2107 = vor.u32 %v2104, %v2105
  %v2108 = vrot.slane %v2104, 4
  %v2110 = vshrl.u32 %v2030, 16
  %v2112 = vrot.slane %v2110, 7
  %v2113 = vshll.u32 %v2030, 16
  %v2115 = vor.u32 %v2112, %v2113
  %v2116 = vrot.slane %v2112, 4
  %v2118 = vshrl.u32 %v2031, 16
  %v2120 = vrot.slane %v2118, 7
  %v2121 = vshll.u32 %v2031, 16
  %v2123 = vor.u32 %v2120, %v2121
  %v2124 = vrot.slane %v2120, 4
  %v2126 = vshrl.u32 %v2032, 16
  %v2128 = vrot.slane %v2126, 7
  %v2129 = vshll.u32 %v2032, 16
  %v2131 = vor.u32 %v2128, %v2129
  %v2132 = vrot.slane %v2128, 4
  %v2134 = vshrl.u32 %v2033, 16
  %v2136 = vrot.slane %v2134, 7
  %v2137 = vshll.u32 %v2033, 16
  %v2139 = vor.u32 %v2136, %v2137
  %v2140 = vrot.slane %v2136, 4
  %v2142 = vshrl.u32 %v2034, 16
  %v2144 = vrot.slane %v2142, 7
  %v2145 = vshll.u32 %v2034, 16
  %v2147 = vor.u32 %v2144, %v2145
  %v2148 = vrot.slane %v2144, 4
  %v2150 = vshrl.u32 %v2035, 16
  %v2152 = vrot.slane %v2150, 7
  %v2153 = vshll.u32 %v2035, 16
  %v2155 = vor.u32 %v2152, %v2153
  %v2156 = vrot.slane %v2152, 4
  %v2158 = vshrl.u32 %v2036, 16
  %v2160 = vrot.slane %v2158, 7
  %v2161 = vshll.u32 %v2036, 16
  %v2163 = vor.u32 %v2160, %v2161
  %v2164 = vrot.slane %v2160, 4
  %vm2197 = vcmask 60416
  %vm2198 = vmand %vm2197, %vm1923
  %v2199 = vld [vmem:[%s1871] sm:$0xf]
  %v2200 = vsel %vm2198, %v2043, %v2199
  %2201 = vst [vmem:[%s1871] sm:$0xf] %v2200
  %v2202 = vld [vmem:[%s1871 + $0x4] sm:$0x1]
  %v2203 = vsel %vm1874, %v2044, %v2202
  %2204 = vst [vmem:[%s1871 + $0x4] sm:$0x1] %v2203
  %v2205 = vld [vmem:[%s1871 + $0x8] sm:$0xf]
  %v2206 = vsel %vm2198, %v2051, %v2205
  %2207 = vst [vmem:[%s1871 + $0x8] sm:$0xf] %v2206
  %v2208 = vld [vmem:[%s1871 + $0xc] sm:$0x1]
  %v2209 = vsel %vm1874, %v2052, %v2208
  %2210 = vst [vmem:[%s1871 + $0xc] sm:$0x1] %v2209
  %v2211 = vld [vmem:[%s1871 + $0x10] sm:$0xf]
  %v2212 = vsel %vm2198, %v2059, %v2211
  %2213 = vst [vmem:[%s1871 + $0x10] sm:$0xf] %v2212
  %v2214 = vld [vmem:[%s1871 + $0x14] sm:$0x1]
  %v2215 = vsel %vm1874, %v2060, %v2214
  %2216 = vst [vmem:[%s1871 + $0x14] sm:$0x1] %v2215
  %v2217 = vld [vmem:[%s1871 + $0x18] sm:$0xf]
  %v2218 = vsel %vm2198, %v2067, %v2217
  %2219 = vst [vmem:[%s1871 + $0x18] sm:$0xf] %v2218
  %v2220 = vld [vmem:[%s1871 + $0x1c] sm:$0x1]
  %v2221 = vsel %vm1874, %v2068, %v2220
  %2222 = vst [vmem:[%s1871 + $0x1c] sm:$0x1] %v2221
  %v2223 = vld [vmem:[%s1871 + $0x20] sm:$0xf]
  %v2224 = vsel %vm2198, %v2075, %v2223
  %2225 = vst [vmem:[%s1871 + $0x20] sm:$0xf] %v2224
  %v2226 = vld [vmem:[%s1871 + $0x24] sm:$0x1]
  %v2227 = vsel %vm1874, %v2076, %v2226
  %2228 = vst [vmem:[%s1871 + $0x24] sm:$0x1] %v2227
  %v2229 = vld [vmem:[%s1871 + $0x28] sm:$0xf]
  %v2230 = vsel %vm2198, %v2083, %v2229
  %2231 = vst [vmem:[%s1871 + $0x28] sm:$0xf] %v2230
  %v2232 = vld [vmem:[%s1871 + $0x2c] sm:$0x1]
  %v2233 = vsel %vm1874, %v2084, %v2232
  %2234 = vst [vmem:[%s1871 + $0x2c] sm:$0x1] %v2233
  %v2235 = vld [vmem:[%s1871 + $0x30] sm:$0xf]
  %v2236 = vsel %vm2198, %v2091, %v2235
  %2237 = vst [vmem:[%s1871 + $0x30] sm:$0xf] %v2236
  %v2238 = vld [vmem:[%s1871 + $0x34] sm:$0x1]
  %v2239 = vsel %vm1874, %v2092, %v2238
  %2240 = vst [vmem:[%s1871 + $0x34] sm:$0x1] %v2239
  %v2241 = vld [vmem:[%s1871 + $0x38] sm:$0xf]
  %v2242 = vsel %vm2198, %v2099, %v2241
  %2243 = vst [vmem:[%s1871 + $0x38] sm:$0xf] %v2242
  %v2244 = vld [vmem:[%s1871 + $0x3c] sm:$0x1]
  %v2245 = vsel %vm1874, %v2100, %v2244
  %2246 = vst [vmem:[%s1871 + $0x3c] sm:$0x1] %v2245
  %v2247 = vld [vmem:[%s1871 + $0x50] sm:$0xf]
  %v2248 = vsel %vm2198, %v2107, %v2247
  %2249 = vst [vmem:[%s1871 + $0x50] sm:$0xf] %v2248
  %v2250 = vld [vmem:[%s1871 + $0x54] sm:$0x1]
  %v2251 = vsel %vm1874, %v2108, %v2250
  %2252 = vst [vmem:[%s1871 + $0x54] sm:$0x1] %v2251
  %v2253 = vld [vmem:[%s1871 + $0x58] sm:$0xf]
  %v2254 = vsel %vm2198, %v2115, %v2253
  %2255 = vst [vmem:[%s1871 + $0x58] sm:$0xf] %v2254
  %v2256 = vld [vmem:[%s1871 + $0x5c] sm:$0x1]
  %v2257 = vsel %vm1874, %v2116, %v2256
  %2258 = vst [vmem:[%s1871 + $0x5c] sm:$0x1] %v2257
  %v2259 = vld [vmem:[%s1871 + $0x60] sm:$0xf]
  %v2260 = vsel %vm2198, %v2123, %v2259
  %2261 = vst [vmem:[%s1871 + $0x60] sm:$0xf] %v2260
  %v2262 = vld [vmem:[%s1871 + $0x64] sm:$0x1]
  %v2263 = vsel %vm1874, %v2124, %v2262
  %2264 = vst [vmem:[%s1871 + $0x64] sm:$0x1] %v2263
  %v2265 = vld [vmem:[%s1871 + $0x68] sm:$0xf]
  %v2266 = vsel %vm2198, %v2131, %v2265
  %2267 = vst [vmem:[%s1871 + $0x68] sm:$0xf] %v2266
  %v2268 = vld [vmem:[%s1871 + $0x6c] sm:$0x1]
  %v2269 = vsel %vm1874, %v2132, %v2268
  %2270 = vst [vmem:[%s1871 + $0x6c] sm:$0x1] %v2269
  %v2271 = vld [vmem:[%s1871 + $0x70] sm:$0xf]
  %v2272 = vsel %vm2198, %v2139, %v2271
  %2273 = vst [vmem:[%s1871 + $0x70] sm:$0xf] %v2272
  %v2274 = vld [vmem:[%s1871 + $0x74] sm:$0x1]
  %v2275 = vsel %vm1874, %v2140, %v2274
  %2276 = vst [vmem:[%s1871 + $0x74] sm:$0x1] %v2275
  %v2277 = vld [vmem:[%s1871 + $0x78] sm:$0xf]
  %v2278 = vsel %vm2198, %v2147, %v2277
  %2279 = vst [vmem:[%s1871 + $0x78] sm:$0xf] %v2278
  %v2280 = vld [vmem:[%s1871 + $0x7c] sm:$0x1]
  %v2281 = vsel %vm1874, %v2148, %v2280
  %2282 = vst [vmem:[%s1871 + $0x7c] sm:$0x1] %v2281
  %v2283 = vld [vmem:[%s1871 + $0x80] sm:$0xf]
  %v2284 = vsel %vm2198, %v2155, %v2283
  %2285 = vst [vmem:[%s1871 + $0x80] sm:$0xf] %v2284
  %v2286 = vld [vmem:[%s1871 + $0x84] sm:$0x1]
  %v2287 = vsel %vm1874, %v2156, %v2286
  %2288 = vst [vmem:[%s1871 + $0x84] sm:$0x1] %v2287
  %v2289 = vld [vmem:[%s1871 + $0x88] sm:$0xf]
  %v2290 = vsel %vm2198, %v2163, %v2289
  %2291 = vst [vmem:[%s1871 + $0x88] sm:$0xf] %v2290
  %v2292 = vld [vmem:[%s1871 + $0x8c] sm:$0x1]
  %v2293 = vsel %vm1874, %v2164, %v2292
  %2294 = vst [vmem:[%s1871 + $0x8c] sm:$0x1] %v2293
  %v2295 = vld [vmem:[#allocation3] sm:$0xf]
  %v2296 = vld [vmem:[#allocation3 + $0x8] sm:$0xf]
  %v2297 = vld [vmem:[#allocation3 + $0x10] sm:$0xf]
  %v2298 = vld [vmem:[#allocation3 + $0x18] sm:$0xf]
  %v2299 = vld [vmem:[#allocation3 + $0x20] sm:$0xf]
  %v2300 = vld [vmem:[#allocation3 + $0x28] sm:$0xf]
  %v2301 = vld [vmem:[#allocation3 + $0x30] sm:$0xf]
  %v2302 = vld [vmem:[#allocation3 + $0x38] sm:$0xf]
  %v2303 = vld [vmem:[#allocation3 + $0x50] sm:$0xf]
  %v2304 = vld [vmem:[#allocation3 + $0x58] sm:$0xf]
  %v2305 = vld [vmem:[#allocation3 + $0x60] sm:$0xf]
  %v2306 = vld [vmem:[#allocation3 + $0x68] sm:$0xf]
  %v2307 = vld [vmem:[#allocation3 + $0x70] sm:$0xf]
  %v2308 = vld [vmem:[#allocation3 + $0x78] sm:$0xf]
  %v2309 = vld [vmem:[#allocation3 + $0x80] sm:$0xf]
  %v2310 = vld [vmem:[#allocation3 + $0x88] sm:$0xf]
  %v2327 = vunpack.c.l.b16 %v2295
  %v2328 = vunpack.c.l.b16 %v2296
  %v2329 = vunpack.c.l.b16 %v2297
  %v2330 = vunpack.c.l.b16 %v2298
  %v2331 = vunpack.c.l.b16 %v2299
  %v2332 = vunpack.c.l.b16 %v2300
  %v2333 = vunpack.c.l.b16 %v2301
  %v2334 = vunpack.c.l.b16 %v2302
  %v2335 = vunpack.c.l.b16 %v2303
  %v2336 = vunpack.c.l.b16 %v2304
  %v2337 = vunpack.c.l.b16 %v2305
  %v2338 = vunpack.c.l.b16 %v2306
  %v2339 = vunpack.c.l.b16 %v2307
  %v2340 = vunpack.c.l.b16 %v2308
  %v2341 = vunpack.c.l.b16 %v2309
  %v2342 = vunpack.c.l.b16 %v2310
  %v2343 = vpack.c.b16 %v2328, %v2327
  %v2344 = vpack.c.b16 %v2330, %v2329
  %v2345 = vpack.c.b16 %v2332, %v2331
  %v2346 = vpack.c.b16 %v2334, %v2333
  %v2347 = vpack.c.b16 %v2336, %v2335
  %v2348 = vpack.c.b16 %v2338, %v2337
  %v2349 = vpack.c.b16 %v2340, %v2339
  %v2350 = vpack.c.b16 %v2342, %v2341
  %vm2359 = vcmask 64512
  %2360 = vst.msk [vmem:[#allocation2] sm:$0xff] %vm2359, %v2343
  %2361 = vst.msk [vmem:[#allocation2 + $0x8] sm:$0xff] %vm2359, %v2344
  %2362 = vst.msk [vmem:[#allocation2 + $0x10] sm:$0xff] %vm2359, %v2345
  %2363 = vst.msk [vmem:[#allocation2 + $0x18] sm:$0xff] %vm2359, %v2346
  %2364 = vst.msk [vmem:[#allocation2 + $0x20] sm:$0xff] %vm2359, %v2347
  %2365 = vst.msk [vmem:[#allocation2 + $0x28] sm:$0xff] %vm2359, %v2348
  %2366 = vst.msk [vmem:[#allocation2 + $0x30] sm:$0xff] %vm2359, %v2349
  %2367 = vst.msk [vmem:[#allocation2 + $0x38] sm:$0xff] %vm2359, %v2350
  %v2368 = vld [vmem:[#allocation3] sm:$0xf]
  %v2369 = vld [vmem:[#allocation3 + $0x4] sm:$0x1]
  %v2370 = vld [vmem:[#allocation3 + $0x8] sm:$0xf]
  %v2371 = vld [vmem:[#allocation3 + $0xc] sm:$0x1]
  %v2372 = vld [vmem:[#allocation3 + $0x10] sm:$0xf]
  %v2373 = vld [vmem:[#allocation3 + $0x14] sm:$0x1]
  %v2374 = vld [vmem:[#allocation3 + $0x18] sm:$0xf]
  %v2375 = vld [vmem:[#allocation3 + $0x1c] sm:$0x1]
  %v2376 = vld [vmem:[#allocation3 + $0x20] sm:$0xf]
  %v2377 = vld [vmem:[#allocation3 + $0x24] sm:$0x1]
  %v2378 = vld [vmem:[#allocation3 + $0x28] sm:$0xf]
  %v2379 = vld [vmem:[#allocation3 + $0x2c] sm:$0x1]
  %v2380 = vld [vmem:[#allocation3 + $0x30] sm:$0xf]
  %v2381 = vld [vmem:[#allocation3 + $0x34] sm:$0x1]
  %v2382 = vld [vmem:[#allocation3 + $0x38] sm:$0xf]
  %v2383 = vld [vmem:[#allocation3 + $0x3c] sm:$0x1]
  %v2384 = vld [vmem:[#allocation3 + $0x50] sm:$0xf]
  %v2385 = vld [vmem:[#allocation3 + $0x54] sm:$0x1]
  %v2386 = vld [vmem:[#allocation3 + $0x58] sm:$0xf]
  %v2387 = vld [vmem:[#allocation3 + $0x5c] sm:$0x1]
  %v2388 = vld [vmem:[#allocation3 + $0x60] sm:$0xf]
  %v2389 = vld [vmem:[#allocation3 + $0x64] sm:$0x1]
  %v2390 = vld [vmem:[#allocation3 + $0x68] sm:$0xf]
  %v2391 = vld [vmem:[#allocation3 + $0x6c] sm:$0x1]
  %v2392 = vld [vmem:[#allocation3 + $0x70] sm:$0xf]
  %v2393 = vld [vmem:[#allocation3 + $0x74] sm:$0x1]
  %v2394 = vld [vmem:[#allocation3 + $0x78] sm:$0xf]
  %v2395 = vld [vmem:[#allocation3 + $0x7c] sm:$0x1]
  %v2396 = vld [vmem:[#allocation3 + $0x80] sm:$0xf]
  %v2397 = vld [vmem:[#allocation3 + $0x84] sm:$0x1]
  %v2398 = vld [vmem:[#allocation3 + $0x88] sm:$0xf]
  %v2399 = vld [vmem:[#allocation3 + $0x8c] sm:$0x1]
  %v2401 = vshrl.u32 %v2368, 16
  %v2403 = vrot.slane %v2401, 4
  %v2404 = vshll.u32 %v2368, 16
  %v2406 = vrot.slane %v2404, 5
  %v2407 = vor.u32 %v2403, %v2406
  %v2408 = vrot.slane %v2407, 4
  %v2410 = vshll.u32 %v2369, 16
  %v2412 = vrot.slane %v2410, 5
  %v2413 = vsel %vm227, %v2408, %v2412
  %v2415 = vshrl.u32 %v2370, 16
  %v2417 = vrot.slane %v2415, 4
  %v2418 = vshll.u32 %v2370, 16
  %v2420 = vrot.slane %v2418, 5
  %v2421 = vor.u32 %v2417, %v2420
  %v2422 = vrot.slane %v2421, 4
  %v2424 = vshll.u32 %v2371, 16
  %v2426 = vrot.slane %v2424, 5
  %v2427 = vsel %vm227, %v2422, %v2426
  %v2429 = vshrl.u32 %v2372, 16
  %v2431 = vrot.slane %v2429, 4
  %v2432 = vshll.u32 %v2372, 16
  %v2434 = vrot.slane %v2432, 5
  %v2435 = vor.u32 %v2431, %v2434
  %v2436 = vrot.slane %v2435, 4
  %v2438 = vshll.u32 %v2373, 16
  %v2440 = vrot.slane %v2438, 5
  %v2441 = vsel %vm227, %v2436, %v2440
  %v2443 = vshrl.u32 %v2374, 16
  %v2445 = vrot.slane %v2443, 4
  %v2446 = vshll.u32 %v2374, 16
  %v2448 = vrot.slane %v2446, 5
  %v2449 = vor.u32 %v2445, %v2448
  %v2450 = vrot.slane %v2449, 4
  %v2452 = vshll.u32 %v2375, 16
  %v2454 = vrot.slane %v2452, 5
  %v2455 = vsel %vm227, %v2450, %v2454
  %v2457 = vshrl.u32 %v2376, 16
  %v2459 = vrot.slane %v2457, 4
  %v2460 = vshll.u32 %v2376, 16
  %v2462 = vrot.slane %v2460, 5
  %v2463 = vor.u32 %v2459, %v2462
  %v2464 = vrot.slane %v2463, 4
  %v2466 = vshll.u32 %v2377, 16
  %v2468 = vrot.slane %v2466, 5
  %v2469 = vsel %vm227, %v2464, %v2468
  %v2471 = vshrl.u32 %v2378, 16
  %v2473 = vrot.slane %v2471, 4
  %v2474 = vshll.u32 %v2378, 16
  %v2476 = vrot.slane %v2474, 5
  %v2477 = vor.u32 %v2473, %v2476
  %v2478 = vrot.slane %v2477, 4
  %v2480 = vshll.u32 %v2379, 16
  %v2482 = vrot.slane %v2480, 5
  %v2483 = vsel %vm227, %v2478, %v2482
  %v2485 = vshrl.u32 %v2380, 16
  %v2487 = vrot.slane %v2485, 4
  %v2488 = vshll.u32 %v2380, 16
  %v2490 = vrot.slane %v2488, 5
  %v2491 = vor.u32 %v2487, %v2490
  %v2492 = vrot.slane %v2491, 4
  %v2494 = vshll.u32 %v2381, 16
  %v2496 = vrot.slane %v2494, 5
  %v2497 = vsel %vm227, %v2492, %v2496
  %v2499 = vshrl.u32 %v2382, 16
  %v2501 = vrot.slane %v2499, 4
  %v2502 = vshll.u32 %v2382, 16
  %v2504 = vrot.slane %v2502, 5
  %v2505 = vor.u32 %v2501, %v2504
  %v2506 = vrot.slane %v2505, 4
  %v2508 = vshll.u32 %v2383, 16
  %v2510 = vrot.slane %v2508, 5
  %v2511 = vsel %vm227, %v2506, %v2510
  %v2513 = vshrl.u32 %v2384, 16
  %v2515 = vrot.slane %v2513, 4
  %v2516 = vshll.u32 %v2384, 16
  %v2518 = vrot.slane %v2516, 5
  %v2519 = vor.u32 %v2515, %v2518
  %v2520 = vrot.slane %v2519, 4
  %v2522 = vshll.u32 %v2385, 16
  %v2524 = vrot.slane %v2522, 5
  %v2525 = vsel %vm227, %v2520, %v2524
  %v2527 = vshrl.u32 %v2386, 16
  %v2529 = vrot.slane %v2527, 4
  %v2530 = vshll.u32 %v2386, 16
  %v2532 = vrot.slane %v2530, 5
  %v2533 = vor.u32 %v2529, %v2532
  %v2534 = vrot.slane %v2533, 4
  %v2536 = vshll.u32 %v2387, 16
  %v2538 = vrot.slane %v2536, 5
  %v2539 = vsel %vm227, %v2534, %v2538
  %v2541 = vshrl.u32 %v2388, 16
  %v2543 = vrot.slane %v2541, 4
  %v2544 = vshll.u32 %v2388, 16
  %v2546 = vrot.slane %v2544, 5
  %v2547 = vor.u32 %v2543, %v2546
  %v2548 = vrot.slane %v2547, 4
  %v2550 = vshll.u32 %v2389, 16
  %v2552 = vrot.slane %v2550, 5
  %v2553 = vsel %vm227, %v2548, %v2552
  %v2555 = vshrl.u32 %v2390, 16
  %v2557 = vrot.slane %v2555, 4
  %v2558 = vshll.u32 %v2390, 16
  %v2560 = vrot.slane %v2558, 5
  %v2561 = vor.u32 %v2557, %v2560
  %v2562 = vrot.slane %v2561, 4
  %v2564 = vshll.u32 %v2391, 16
  %v2566 = vrot.slane %v2564, 5
  %v2567 = vsel %vm227, %v2562, %v2566
  %v2569 = vshrl.u32 %v2392, 16
  %v2571 = vrot.slane %v2569, 4
  %v2572 = vshll.u32 %v2392, 16
  %v2574 = vrot.slane %v2572, 5
  %v2575 = vor.u32 %v2571, %v2574
  %v2576 = vrot.slane %v2575, 4
  %v2578 = vshll.u32 %v2393, 16
  %v2580 = vrot.slane %v2578, 5
  %v2581 = vsel %vm227, %v2576, %v2580
  %v2583 = vshrl.u32 %v2394, 16
  %v2585 = vrot.slane %v2583, 4
  %v2586 = vshll.u32 %v2394, 16
  %v2588 = vrot.slane %v2586, 5
  %v2589 = vor.u32 %v2585, %v2588
  %v2590 = vrot.slane %v2589, 4
  %v2592 = vshll.u32 %v2395, 16
  %v2594 = vrot.slane %v2592, 5
  %v2595 = vsel %vm227, %v2590, %v2594
  %v2597 = vshrl.u32 %v2396, 16
  %v2599 = vrot.slane %v2597, 4
  %v2600 = vshll.u32 %v2396, 16
  %v2602 = vrot.slane %v2600, 5
  %v2603 = vor.u32 %v2599, %v2602
  %v2604 = vrot.slane %v2603, 4
  %v2606 = vshll.u32 %v2397, 16
  %v2608 = vrot.slane %v2606, 5
  %v2609 = vsel %vm227, %v2604, %v2608
  %v2611 = vshrl.u32 %v2398, 16
  %v2613 = vrot.slane %v2611, 4
  %v2614 = vshll.u32 %v2398, 16
  %v2616 = vrot.slane %v2614, 5
  %v2617 = vor.u32 %v2613, %v2616
  %v2618 = vrot.slane %v2617, 4
  %v2620 = vshll.u32 %v2399, 16
  %v2622 = vrot.slane %v2620, 5
  %v2623 = vsel %vm227, %v2618, %v2622
  %v2624 = vunpack.c.l.b16 %v2413
  %v2625 = vunpack.c.l.b16 %v2427
  %v2626 = vunpack.c.l.b16 %v2441
  %v2627 = vunpack.c.l.b16 %v2455
  %v2628 = vunpack.c.l.b16 %v2469
  %v2629 = vunpack.c.l.b16 %v2483
  %v2630 = vunpack.c.l.b16 %v2497
  %v2631 = vunpack.c.l.b16 %v2511
  %v2632 = vunpack.c.l.b16 %v2525
  %v2633 = vunpack.c.l.b16 %v2539
  %v2634 = vunpack.c.l.b16 %v2553
  %v2635 = vunpack.c.l.b16 %v2567
  %v2636 = vunpack.c.l.b16 %v2581
  %v2637 = vunpack.c.l.b16 %v2595
  %v2638 = vunpack.c.l.b16 %v2609
  %v2639 = vunpack.c.l.b16 %v2623
  %v2640 = vpack.c.b16 %v2625, %v2624
  %v2641 = vpack.c.b16 %v2627, %v2626
  %v2642 = vpack.c.b16 %v2629, %v2628
  %v2643 = vpack.c.b16 %v2631, %v2630
  %v2644 = vpack.c.b16 %v2633, %v2632
  %v2645 = vpack.c.b16 %v2635, %v2634
  %v2646 = vpack.c.b16 %v2637, %v2636
  %v2647 = vpack.c.b16 %v2639, %v2638
  %2648 = vrot.lane.b32.xlu0 %v2640, 8
  %v2649 = vpop.permute.xlu0 %2648
  %2650 = vrot.lane.b32.xlu0 %v2641, 8
  %v2651 = vpop.permute.xlu0 %2650
  %2652 = vrot.lane.b32.xlu0 %v2642, 8
  %v2653 = vpop.permute.xlu0 %2652
  %2654 = vrot.lane.b32.xlu0 %v2643, 8
  %v2655 = vpop.permute.xlu0 %2654
  %2656 = vrot.lane.b32.xlu0 %v2644, 8
  %v2657 = vpop.permute.xlu0 %2656
  %2658 = vrot.lane.b32.xlu0 %v2645, 8
  %v2659 = vpop.permute.xlu0 %2658
  %2660 = vrot.lane.b32.xlu0 %v2646, 8
  %v2661 = vpop.permute.xlu0 %2660
  %2662 = vrot.lane.b32.xlu0 %v2647, 8
  %v2663 = vpop.permute.xlu0 %2662
  %vm2672 = vcmask 130112
  %2673 = vst.msk [vmem:[#allocation2] sm:$0xff] %vm2672, %v2649
  %2674 = vst.msk [vmem:[#allocation2 + $0x8] sm:$0xff] %vm2672, %v2651
  %2675 = vst.msk [vmem:[#allocation2 + $0x10] sm:$0xff] %vm2672, %v2653
  %2676 = vst.msk [vmem:[#allocation2 + $0x18] sm:$0xff] %vm2672, %v2655
  %2677 = vst.msk [vmem:[#allocation2 + $0x20] sm:$0xff] %vm2672, %v2657
  %2678 = vst.msk [vmem:[#allocation2 + $0x28] sm:$0xff] %vm2672, %v2659
  %2679 = vst.msk [vmem:[#allocation2 + $0x30] sm:$0xff] %vm2672, %v2661
  %2680 = vst.msk [vmem:[#allocation2 + $0x38] sm:$0xff] %vm2672, %v2663
  %v2681 = vld [vmem:[#allocation3] sm:$0xe]
  %v2682 = vld [vmem:[#allocation3 + $0x4] sm:$0x1]
  %v2683 = vld [vmem:[#allocation3 + $0x8] sm:$0xe]
  %v2684 = vld [vmem:[#allocation3 + $0xc] sm:$0x1]
  %v2685 = vld [vmem:[#allocation3 + $0x10] sm:$0xe]
  %v2686 = vld [vmem:[#allocation3 + $0x14] sm:$0x1]
  %v2687 = vld [vmem:[#allocation3 + $0x18] sm:$0xe]
  %v2688 = vld [vmem:[#allocation3 + $0x1c] sm:$0x1]
  %v2689 = vld [vmem:[#allocation3 + $0x20] sm:$0xe]
  %v2690 = vld [vmem:[#allocation3 + $0x24] sm:$0x1]
  %v2691 = vld [vmem:[#allocation3 + $0x28] sm:$0xe]
  %v2692 = vld [vmem:[#allocation3 + $0x2c] sm:$0x1]
  %v2693 = vld [vmem:[#allocation3 + $0x30] sm:$0xe]
  %v2694 = vld [vmem:[#allocation3 + $0x34] sm:$0x1]
  %v2695 = vld [vmem:[#allocation3 + $0x38] sm:$0xe]
  %v2696 = vld [vmem:[#allocation3 + $0x3c] sm:$0x1]
  %v2697 = vld [vmem:[#allocation3 + $0x50] sm:$0xe]
  %v2698 = vld [vmem:[#allocation3 + $0x54] sm:$0x1]
  %v2699 = vld [vmem:[#allocation3 + $0x58] sm:$0xe]
  %v2700 = vld [vmem:[#allocation3 + $0x5c] sm:$0x1]
  %v2701 = vld [vmem:[#allocation3 + $0x60] sm:$0xe]
  %v2702 = vld [vmem:[#allocation3 + $0x64] sm:$0x1]
  %v2703 = vld [vmem:[#allocation3 + $0x68] sm:$0xe]
  %v2704 = vld [vmem:[#allocation3 + $0x6c] sm:$0x1]
  %v2705 = vld [vmem:[#allocation3 + $0x70] sm:$0xe]
  %v2706 = vld [vmem:[#allocation3 + $0x74] sm:$0x1]
  %v2707 = vld [vmem:[#allocation3 + $0x78] sm:$0xe]
  %v2708 = vld [vmem:[#allocation3 + $0x7c] sm:$0x1]
  %v2709 = vld [vmem:[#allocation3 + $0x80] sm:$0xe]
  %v2710 = vld [vmem:[#allocation3 + $0x84] sm:$0x1]
  %v2711 = vld [vmem:[#allocation3 + $0x88] sm:$0xe]
  %v2712 = vld [vmem:[#allocation3 + $0x8c] sm:$0x1]
  %vm2745 = vcmask 1042432
  %vm2746 = vcmask 1046532
  %vm2747 = vmor %vm2745, %vm2746
  %v2748 = vrot.slane %v2681, 5
  %v2749 = vrot.slane %v2748, 4
  %v2750 = vrot.slane %v2682, 5
  %v2751 = vsel %vm2747, %v2749, %v2750
  %v2752 = vrot.slane %v2683, 5
  %v2753 = vrot.slane %v2752, 4
  %v2754 = vrot.slane %v2684, 5
  %v2755 = vsel %vm2747, %v2753, %v2754
  %v2756 = vrot.slane %v2685, 5
  %v2757 = vrot.slane %v2756, 4
  %v2758 = vrot.slane %v2686, 5
  %v2759 = vsel %vm2747, %v2757, %v2758
  %v2760 = vrot.slane %v2687, 5
  %v2761 = vrot.slane %v2760, 4
  %v2762 = vrot.slane %v2688, 5
  %v2763 = vsel %vm2747, %v2761, %v2762
  %v2764 = vrot.slane %v2689, 5
  %v2765 = vrot.slane %v2764, 4
  %v2766 = vrot.slane %v2690, 5
  %v2767 = vsel %vm2747, %v2765, %v2766
  %v2768 = vrot.slane %v2691, 5
  %v2769 = vrot.slane %v2768, 4
  %v2770 = vrot.slane %v2692, 5
  %v2771 = vsel %vm2747, %v2769, %v2770
  %v2772 = vrot.slane %v2693, 5
  %v2773 = vrot.slane %v2772, 4
  %v2774 = vrot.slane %v2694, 5
  %v2775 = vsel %vm2747, %v2773, %v2774
  %v2776 = vrot.slane %v2695, 5
  %v2777 = vrot.slane %v2776, 4
  %v2778 = vrot.slane %v2696, 5
  %v2779 = vsel %vm2747, %v2777, %v2778
  %v2780 = vrot.slane %v2697, 5
  %v2781 = vrot.slane %v2780, 4
  %v2782 = vrot.slane %v2698, 5
  %v2783 = vsel %vm2747, %v2781, %v2782
  %v2784 = vrot.slane %v2699, 5
  %v2785 = vrot.slane %v2784, 4
  %v2786 = vrot.slane %v2700, 5
  %v2787 = vsel %vm2747, %v2785, %v2786
  %v2788 = vrot.slane %v2701, 5
  %v2789 = vrot.slane %v2788, 4
  %v2790 = vrot.slane %v2702, 5
  %v2791 = vsel %vm2747, %v2789, %v2790
  %v2792 = vrot.slane %v2703, 5
  %v2793 = vrot.slane %v2792, 4
  %v2794 = vrot.slane %v2704, 5
  %v2795 = vsel %vm2747, %v2793, %v2794
  %v2796 = vrot.slane %v2705, 5
  %v2797 = vrot.slane %v2796, 4
  %v2798 = vrot.slane %v2706, 5
  %v2799 = vsel %vm2747, %v2797, %v2798
  %v2800 = vrot.slane %v2707, 5
  %v2801 = vrot.slane %v2800, 4
  %v2802 = vrot.slane %v2708, 5
  %v2803 = vsel %vm2747, %v2801, %v2802
  %v2804 = vrot.slane %v2709, 5
  %v2805 = vrot.slane %v2804, 4
  %v2806 = vrot.slane %v2710, 5
  %v2807 = vsel %vm2747, %v2805, %v2806
  %v2808 = vrot.slane %v2711, 5
  %v2809 = vrot.slane %v2808, 4
  %v2810 = vrot.slane %v2712, 5
  %v2811 = vsel %vm2747, %v2809, %v2810
  %v2812 = vunpack.c.l.b16 %v2751
  %v2813 = vunpack.c.l.b16 %v2755
  %v2814 = vunpack.c.l.b16 %v2759
  %v2815 = vunpack.c.l.b16 %v2763
  %v2816 = vunpack.c.l.b16 %v2767
  %v2817 = vunpack.c.l.b16 %v2771
  %v2818 = vunpack.c.l.b16 %v2775
  %v2819 = vunpack.c.l.b16 %v2779
  %v2820 = vunpack.c.l.b16 %v2783
  %v2821 = vunpack.c.l.b16 %v2787
  %v2822 = vunpack.c.l.b16 %v2791
  %v2823 = vunpack.c.l.b16 %v2795
  %v2824 = vunpack.c.l.b16 %v2799
  %v2825 = vunpack.c.l.b16 %v2803
  %v2826 = vunpack.c.l.b16 %v2807
  %v2827 = vunpack.c.l.b16 %v2811
  %v2828 = vpack.c.b16 %v2813, %v2812
  %v2829 = vpack.c.b16 %v2815, %v2814
  %v2830 = vpack.c.b16 %v2817, %v2816
  %v2831 = vpack.c.b16 %v2819, %v2818
  %v2832 = vpack.c.b16 %v2821, %v2820
  %v2833 = vpack.c.b16 %v2823, %v2822
  %v2834 = vpack.c.b16 %v2825, %v2824
  %v2835 = vpack.c.b16 %v2827, %v2826
  %2836 = vrot.lane.b32.xlu0 %v2828, 16
  %v2837 = vpop.permute.xlu0 %2836
  %2838 = vrot.lane.b32.xlu0 %v2829, 16
  %v2839 = vpop.permute.xlu0 %2838
  %2840 = vrot.lane.b32.xlu0 %v2830, 16
  %v2841 = vpop.permute.xlu0 %2840
  %2842 = vrot.lane.b32.xlu0 %v2831, 16
  %v2843 = vpop.permute.xlu0 %2842
  %2844 = vrot.lane.b32.xlu0 %v2832, 16
  %v2845 = vpop.permute.xlu0 %2844
  %2846 = vrot.lane.b32.xlu0 %v2833, 16
  %v2847 = vpop.permute.xlu0 %2846
  %2848 = vrot.lane.b32.xlu0 %v2834, 16
  %v2849 = vpop.permute.xlu0 %2848
  %2850 = vrot.lane.b32.xlu0 %v2835, 16
  %v2851 = vpop.permute.xlu0 %2850
  %vm2860 = vcmask 195712
  %2861 = vst.msk [vmem:[#allocation2] sm:$0xff] %vm2860, %v2837
  %2862 = vst.msk [vmem:[#allocation2 + $0x8] sm:$0xff] %vm2860, %v2839
  %2863 = vst.msk [vmem:[#allocation2 + $0x10] sm:$0xff] %vm2860, %v2841
  %2864 = vst.msk [vmem:[#allocation2 + $0x18] sm:$0xff] %vm2860, %v2843
  %2865 = vst.msk [vmem:[#allocation2 + $0x20] sm:$0xff] %vm2860, %v2845
  %2866 = vst.msk [vmem:[#allocation2 + $0x28] sm:$0xff] %vm2860, %v2847
  %2867 = vst.msk [vmem:[#allocation2 + $0x30] sm:$0xff] %vm2860, %v2849
  %2868 = vst.msk [vmem:[#allocation2 + $0x38] sm:$0xff] %vm2860, %v2851
  %v2869 = vld [vmem:[%s1871] sm:$0xf]
  %v2870 = vld [vmem:[%s1871 + $0x8] sm:$0xf]
  %v2871 = vld [vmem:[%s1871 + $0x10] sm:$0xf]
  %v2872 = vld [vmem:[%s1871 + $0x18] sm:$0xf]
  %v2873 = vld [vmem:[%s1871 + $0x20] sm:$0xf]
  %v2874 = vld [vmem:[%s1871 + $0x28] sm:$0xf]
  %v2875 = vld [vmem:[%s1871 + $0x30] sm:$0xf]
  %v2876 = vld [vmem:[%s1871 + $0x38] sm:$0xf]
  %v2877 = vld [vmem:[%s1871 + $0x50] sm:$0xf]
  %v2878 = vld [vmem:[%s1871 + $0x58] sm:$0xf]
  %v2879 = vld [vmem:[%s1871 + $0x60] sm:$0xf]
  %v2880 = vld [vmem:[%s1871 + $0x68] sm:$0xf]
  %v2881 = vld [vmem:[%s1871 + $0x70] sm:$0xf]
  %v2882 = vld [vmem:[%s1871 + $0x78] sm:$0xf]
  %v2883 = vld [vmem:[%s1871 + $0x80] sm:$0xf]
  %v2884 = vld [vmem:[%s1871 + $0x88] sm:$0xf]
  %v2901 = vunpack.c.l.b16 %v2869
  %v2902 = vunpack.c.l.b16 %v2870
  %v2903 = vunpack.c.l.b16 %v2871
  %v2904 = vunpack.c.l.b16 %v2872
  %v2905 = vunpack.c.l.b16 %v2873
  %v2906 = vunpack.c.l.b16 %v2874
  %v2907 = vunpack.c.l.b16 %v2875
  %v2908 = vunpack.c.l.b16 %v2876
  %v2909 = vunpack.c.l.b16 %v2877
  %v2910 = vunpack.c.l.b16 %v2878
  %v2911 = vunpack.c.l.b16 %v2879
  %v2912 = vunpack.c.l.b16 %v2880
  %v2913 = vunpack.c.l.b16 %v2881
  %v2914 = vunpack.c.l.b16 %v2882
  %v2915 = vunpack.c.l.b16 %v2883
  %v2916 = vunpack.c.l.b16 %v2884
  %v2917 = vpack.c.b16 %v2902, %v2901
  %v2918 = vpack.c.b16 %v2904, %v2903
  %v2919 = vpack.c.b16 %v2906, %v2905
  %v2920 = vpack.c.b16 %v2908, %v2907
  %v2921 = vpack.c.b16 %v2910, %v2909
  %v2922 = vpack.c.b16 %v2912, %v2911
  %v2923 = vpack.c.b16 %v2914, %v2913
  %v2924 = vpack.c.b16 %v2916, %v2915
  %2925 = vrot.lane.b32.xlu0 %v2917, 24
  %v2926 = vpop.permute.xlu0 %2925
  %2927 = vrot.lane.b32.xlu0 %v2918, 24
  %v2928 = vpop.permute.xlu0 %2927
  %2929 = vrot.lane.b32.xlu0 %v2919, 24
  %v2930 = vpop.permute.xlu0 %2929
  %2931 = vrot.lane.b32.xlu0 %v2920, 24
  %v2932 = vpop.permute.xlu0 %2931
  %2933 = vrot.lane.b32.xlu0 %v2921, 24
  %v2934 = vpop.permute.xlu0 %2933
  %2935 = vrot.lane.b32.xlu0 %v2922, 24
  %v2936 = vpop.permute.xlu0 %2935
  %2937 = vrot.lane.b32.xlu0 %v2923, 24
  %v2938 = vpop.permute.xlu0 %2937
  %2939 = vrot.lane.b32.xlu0 %v2924, 24
  %v2940 = vpop.permute.xlu0 %2939
  %vm2949 = vcmask 261312
  %2950 = vst.msk [vmem:[#allocation2] sm:$0xff] %vm2949, %v2926
  %2951 = vst.msk [vmem:[#allocation2 + $0x8] sm:$0xff] %vm2949, %v2928
  %2952 = vst.msk [vmem:[#allocation2 + $0x10] sm:$0xff] %vm2949, %v2930
  %2953 = vst.msk [vmem:[#allocation2 + $0x18] sm:$0xff] %vm2949, %v2932
  %2954 = vst.msk [vmem:[#allocation2 + $0x20] sm:$0xff] %vm2949, %v2934
  %2955 = vst.msk [vmem:[#allocation2 + $0x28] sm:$0xff] %vm2949, %v2936
  %2956 = vst.msk [vmem:[#allocation2 + $0x30] sm:$0xff] %vm2949, %v2938
  %2957 = vst.msk [vmem:[#allocation2 + $0x38] sm:$0xff] %vm2949, %v2940
  %v2958 = vld [vmem:[%s1871] sm:$0xf]
  %v2959 = vld [vmem:[%s1871 + $0x4] sm:$0x1]
  %v2960 = vld [vmem:[%s1871 + $0x8] sm:$0xf]
  %v2961 = vld [vmem:[%s1871 + $0xc] sm:$0x1]
  %v2962 = vld [vmem:[%s1871 + $0x10] sm:$0xf]
  %v2963 = vld [vmem:[%s1871 + $0x14] sm:$0x1]
  %v2964 = vld [vmem:[%s1871 + $0x18] sm:$0xf]
  %v2965 = vld [vmem:[%s1871 + $0x1c] sm:$0x1]
  %v2966 = vld [vmem:[%s1871 + $0x20] sm:$0xf]
  %v2967 = vld [vmem:[%s1871 + $0x24] sm:$0x1]
  %v2968 = vld [vmem:[%s1871 + $0x28] sm:$0xf]
  %v2969 = vld [vmem:[%s1871 + $0x2c] sm:$0x1]
  %v2970 = vld [vmem:[%s1871 + $0x30] sm:$0xf]
  %v2971 = vld [vmem:[%s1871 + $0x34] sm:$0x1]
  %v2972 = vld [vmem:[%s1871 + $0x38] sm:$0xf]
  %v2973 = vld [vmem:[%s1871 + $0x3c] sm:$0x1]
  %v2974 = vld [vmem:[%s1871 + $0x50] sm:$0xf]
  %v2975 = vld [vmem:[%s1871 + $0x54] sm:$0x1]
  %v2976 = vld [vmem:[%s1871 + $0x58] sm:$0xf]
  %v2977 = vld [vmem:[%s1871 + $0x5c] sm:$0x1]
  %v2978 = vld [vmem:[%s1871 + $0x60] sm:$0xf]
  %v2979 = vld [vmem:[%s1871 + $0x64] sm:$0x1]
  %v2980 = vld [vmem:[%s1871 + $0x68] sm:$0xf]
  %v2981 = vld [vmem:[%s1871 + $0x6c] sm:$0x1]
  %v2982 = vld [vmem:[%s1871 + $0x70] sm:$0xf]
  %v2983 = vld [vmem:[%s1871 + $0x74] sm:$0x1]
  %v2984 = vld [vmem:[%s1871 + $0x78] sm:$0xf]
  %v2985 = vld [vmem:[%s1871 + $0x7c] sm:$0x1]
  %v2986 = vld [vmem:[%s1871 + $0x80] sm:$0xf]
  %v2987 = vld [vmem:[%s1871 + $0x84] sm:$0x1]
  %v2988 = vld [vmem:[%s1871 + $0x88] sm:$0xf]
  %v2989 = vld [vmem:[%s1871 + $0x8c] sm:$0x1]
  %v2991 = vshrl.u32 %v2958, 16
  %v2993 = vrot.slane %v2991, 4
  %v2994 = vshll.u32 %v2958, 16
  %v2996 = vrot.slane %v2994, 5
  %v2997 = vor.u32 %v2993, %v2996
  %v2998 = vrot.slane %v2997, 4
  %v3000 = vshll.u32 %v2959, 16
  %v3002 = vrot.slane %v3000, 5
  %v3003 = vsel %vm227, %v2998, %v3002
  %v3005 = vshrl.u32 %v2960, 16
  %v3007 = vrot.slane %v3005, 4
  %v3008 = vshll.u32 %v2960, 16
  %v3010 = vrot.slane %v3008, 5
  %v3011 = vor.u32 %v3007, %v3010
  %v3012 = vrot.slane %v3011, 4
  %v3014 = vshll.u32 %v2961, 16
  %v3016 = vrot.slane %v3014, 5
  %v3017 = vsel %vm227, %v3012, %v3016
  %v3019 = vshrl.u32 %v2962, 16
  %v3021 = vrot.slane %v3019, 4
  %v3022 = vshll.u32 %v2962, 16
  %v3024 = vrot.slane %v3022, 5
  %v3025 = vor.u32 %v3021, %v3024
  %v3026 = vrot.slane %v3025, 4
  %v3028 = vshll.u32 %v2963, 16
  %v3030 = vrot.slane %v3028, 5
  %v3031 = vsel %vm227, %v3026, %v3030
  %v3033 = vshrl.u32 %v2964, 16
  %v3035 = vrot.slane %v3033, 4
  %v3036 = vshll.u32 %v2964, 16
  %v3038 = vrot.slane %v3036, 5
  %v3039 = vor.u32 %v3035, %v3038
  %v3040 = vrot.slane %v3039, 4
  %v3042 = vshll.u32 %v2965, 16
  %v3044 = vrot.slane %v3042, 5
  %v3045 = vsel %vm227, %v3040, %v3044
  %v3047 = vshrl.u32 %v2966, 16
  %v3049 = vrot.slane %v3047, 4
  %v3050 = vshll.u32 %v2966, 16
  %v3052 = vrot.slane %v3050, 5
  %v3053 = vor.u32 %v3049, %v3052
  %v3054 = vrot.slane %v3053, 4
  %v3056 = vshll.u32 %v2967, 16
  %v3058 = vrot.slane %v3056, 5
  %v3059 = vsel %vm227, %v3054, %v3058
  %v3061 = vshrl.u32 %v2968, 16
  %v3063 = vrot.slane %v3061, 4
  %v3064 = vshll.u32 %v2968, 16
  %v3066 = vrot.slane %v3064, 5
  %v3067 = vor.u32 %v3063, %v3066
  %v3068 = vrot.slane %v3067, 4
  %v3070 = vshll.u32 %v2969, 16
  %v3072 = vrot.slane %v3070, 5
  %v3073 = vsel %vm227, %v3068, %v3072
  %v3075 = vshrl.u32 %v2970, 16
  %v3077 = vrot.slane %v3075, 4
  %v3078 = vshll.u32 %v2970, 16
  %v3080 = vrot.slane %v3078, 5
  %v3081 = vor.u32 %v3077, %v3080
  %v3082 = vrot.slane %v3081, 4
  %v3084 = vshll.u32 %v2971, 16
  %v3086 = vrot.slane %v3084, 5
  %v3087 = vsel %vm227, %v3082, %v3086
  %v3089 = vshrl.u32 %v2972, 16
  %v3091 = vrot.slane %v3089, 4
  %v3092 = vshll.u32 %v2972, 16
  %v3094 = vrot.slane %v3092, 5
  %v3095 = vor.u32 %v3091, %v3094
  %v3096 = vrot.slane %v3095, 4
  %v3098 = vshll.u32 %v2973, 16
  %v3100 = vrot.slane %v3098, 5
  %v3101 = vsel %vm227, %v3096, %v3100
  %v3103 = vshrl.u32 %v2974, 16
  %v3105 = vrot.slane %v3103, 4
  %v3106 = vshll.u32 %v2974, 16
  %v3108 = vrot.slane %v3106, 5
  %v3109 = vor.u32 %v3105, %v3108
  %v3110 = vrot.slane %v3109, 4
  %v3112 = vshll.u32 %v2975, 16
  %v3114 = vrot.slane %v3112, 5
  %v3115 = vsel %vm227, %v3110, %v3114
  %v3117 = vshrl.u32 %v2976, 16
  %v3119 = vrot.slane %v3117, 4
  %v3120 = vshll.u32 %v2976, 16
  %v3122 = vrot.slane %v3120, 5
  %v3123 = vor.u32 %v3119, %v3122
  %v3124 = vrot.slane %v3123, 4
  %v3126 = vshll.u32 %v2977, 16
  %v3128 = vrot.slane %v3126, 5
  %v3129 = vsel %vm227, %v3124, %v3128
  %v3131 = vshrl.u32 %v2978, 16
  %v3133 = vrot.slane %v3131, 4
  %v3134 = vshll.u32 %v2978, 16
  %v3136 = vrot.slane %v3134, 5
  %v3137 = vor.u32 %v3133, %v3136
  %v3138 = vrot.slane %v3137, 4
  %v3140 = vshll.u32 %v2979, 16
  %v3142 = vrot.slane %v3140, 5
  %v3143 = vsel %vm227, %v3138, %v3142
  %v3145 = vshrl.u32 %v2980, 16
  %v3147 = vrot.slane %v3145, 4
  %v3148 = vshll.u32 %v2980, 16
  %v3150 = vrot.slane %v3148, 5
  %v3151 = vor.u32 %v3147, %v3150
  %v3152 = vrot.slane %v3151, 4
  %v3154 = vshll.u32 %v2981, 16
  %v3156 = vrot.slane %v3154, 5
  %v3157 = vsel %vm227, %v3152, %v3156
  %v3159 = vshrl.u32 %v2982, 16
  %v3161 = vrot.slane %v3159, 4
  %v3162 = vshll.u32 %v2982, 16
  %v3164 = vrot.slane %v3162, 5
  %v3165 = vor.u32 %v3161, %v3164
  %v3166 = vrot.slane %v3165, 4
  %v3168 = vshll.u32 %v2983, 16
  %v3170 = vrot.slane %v3168, 5
  %v3171 = vsel %vm227, %v3166, %v3170
  %v3173 = vshrl.u32 %v2984, 16
  %v3175 = vrot.slane %v3173, 4
  %v3176 = vshll.u32 %v2984, 16
  %v3178 = vrot.slane %v3176, 5
  %v3179 = vor.u32 %v3175, %v3178
  %v3180 = vrot.slane %v3179, 4
  %v3182 = vshll.u32 %v2985, 16
  %v3184 = vrot.slane %v3182, 5
  %v3185 = vsel %vm227, %v3180, %v3184
  %v3187 = vshrl.u32 %v2986, 16
  %v3189 = vrot.slane %v3187, 4
  %v3190 = vshll.u32 %v2986, 16
  %v3192 = vrot.slane %v3190, 5
  %v3193 = vor.u32 %v3189, %v3192
  %v3194 = vrot.slane %v3193, 4
  %v3196 = vshll.u32 %v2987, 16
  %v3198 = vrot.slane %v3196, 5
  %v3199 = vsel %vm227, %v3194, %v3198
  %v3201 = vshrl.u32 %v2988, 16
  %v3203 = vrot.slane %v3201, 4
  %v3204 = vshll.u32 %v2988, 16
  %v3206 = vrot.slane %v3204, 5
  %v3207 = vor.u32 %v3203, %v3206
  %v3208 = vrot.slane %v3207, 4
  %v3210 = vshll.u32 %v2989, 16
  %v3212 = vrot.slane %v3210, 5
  %v3213 = vsel %vm227, %v3208, %v3212
  %v3214 = vunpack.c.l.b16 %v3003
  %v3215 = vunpack.c.l.b16 %v3017
  %v3216 = vunpack.c.l.b16 %v3031
  %v3217 = vunpack.c.l.b16 %v3045
  %v3218 = vunpack.c.l.b16 %v3059
  %v3219 = vunpack.c.l.b16 %v3073
  %v3220 = vunpack.c.l.b16 %v3087
  %v3221 = vunpack.c.l.b16 %v3101
  %v3222 = vunpack.c.l.b16 %v3115
  %v3223 = vunpack.c.l.b16 %v3129
  %v3224 = vunpack.c.l.b16 %v3143
  %v3225 = vunpack.c.l.b16 %v3157
  %v3226 = vunpack.c.l.b16 %v3171
  %v3227 = vunpack.c.l.b16 %v3185
  %v3228 = vunpack.c.l.b16 %v3199
  %v3229 = vunpack.c.l.b16 %v3213
  %v3230 = vpack.c.b16 %v3215, %v3214
  %v3231 = vpack.c.b16 %v3217, %v3216
  %v3232 = vpack.c.b16 %v3219, %v3218
  %v3233 = vpack.c.b16 %v3221, %v3220
  %v3234 = vpack.c.b16 %v3223, %v3222
  %v3235 = vpack.c.b16 %v3225, %v3224
  %v3236 = vpack.c.b16 %v3227, %v3226
  %v3237 = vpack.c.b16 %v3229, %v3228
  %3238 = vrot.lane.b32.xlu0 %v3230, 32
  %v3239 = vpop.permute.xlu0 %3238
  %3240 = vrot.lane.b32.xlu0 %v3231, 32
  %v3241 = vpop.permute.xlu0 %3240
  %3242 = vrot.lane.b32.xlu0 %v3232, 32
  %v3243 = vpop.permute.xlu0 %3242
  %3244 = vrot.lane.b32.xlu0 %v3233, 32
  %v3245 = vpop.permute.xlu0 %3244
  %3246 = vrot.lane.b32.xlu0 %v3234, 32
  %v3247 = vpop.permute.xlu0 %3246
  %3248 = vrot.lane.b32.xlu0 %v3235, 32
  %v3249 = vpop.permute.xlu0 %3248
  %3250 = vrot.lane.b32.xlu0 %v3236, 32
  %v3251 = vpop.permute.xlu0 %3250
  %3252 = vrot.lane.b32.xlu0 %v3237, 32
  %v3253 = vpop.permute.xlu0 %3252
  %vm3262 = vcmask 326912
  %3263 = vst.msk [vmem:[#allocation2] sm:$0xff] %vm3262, %v3239
  %3264 = vst.msk [vmem:[#allocation2 + $0x8] sm:$0xff] %vm3262, %v3241
  %3265 = vst.msk [vmem:[#allocation2 + $0x10] sm:$0xff] %vm3262, %v3243
  %3266 = vst.msk [vmem:[#allocation2 + $0x18] sm:$0xff] %vm3262, %v3245
  %3267 = vst.msk [vmem:[#allocation2 + $0x20] sm:$0xff] %vm3262, %v3247
  %3268 = vst.msk [vmem:[#allocation2 + $0x28] sm:$0xff] %vm3262, %v3249
  %3269 = vst.msk [vmem:[#allocation2 + $0x30] sm:$0xff] %vm3262, %v3251
  %3270 = vst.msk [vmem:[#allocation2 + $0x38] sm:$0xff] %vm3262, %v3253
  %v3271 = vld [vmem:[%s1871] sm:$0xe]
  %v3272 = vld [vmem:[%s1871 + $0x4] sm:$0x1]
  %v3273 = vld [vmem:[%s1871 + $0x8] sm:$0xe]
  %v3274 = vld [vmem:[%s1871 + $0xc] sm:$0x1]
  %v3275 = vld [vmem:[%s1871 + $0x10] sm:$0xe]
  %v3276 = vld [vmem:[%s1871 + $0x14] sm:$0x1]
  %v3277 = vld [vmem:[%s1871 + $0x18] sm:$0xe]
  %v3278 = vld [vmem:[%s1871 + $0x1c] sm:$0x1]
  %v3279 = vld [vmem:[%s1871 + $0x20] sm:$0xe]
  %v3280 = vld [vmem:[%s1871 + $0x24] sm:$0x1]
  %v3281 = vld [vmem:[%s1871 + $0x28] sm:$0xe]
  %v3282 = vld [vmem:[%s1871 + $0x2c] sm:$0x1]
  %v3283 = vld [vmem:[%s1871 + $0x30] sm:$0xe]
  %v3284 = vld [vmem:[%s1871 + $0x34] sm:$0x1]
  %v3285 = vld [vmem:[%s1871 + $0x38] sm:$0xe]
  %v3286 = vld [vmem:[%s1871 + $0x3c] sm:$0x1]
  %v3287 = vld [vmem:[%s1871 + $0x50] sm:$0xe]
  %v3288 = vld [vmem:[%s1871 + $0x54] sm:$0x1]
  %v3289 = vld [vmem:[%s1871 + $0x58] sm:$0xe]
  %v3290 = vld [vmem:[%s1871 + $0x5c] sm:$0x1]
  %v3291 = vld [vmem:[%s1871 + $0x60] sm:$0xe]
  %v3292 = vld [vmem:[%s1871 + $0x64] sm:$0x1]
  %v3293 = vld [vmem:[%s1871 + $0x68] sm:$0xe]
  %v3294 = vld [vmem:[%s1871 + $0x6c] sm:$0x1]
  %v3295 = vld [vmem:[%s1871 + $0x70] sm:$0xe]
  %v3296 = vld [vmem:[%s1871 + $0x74] sm:$0x1]
  %v3297 = vld [vmem:[%s1871 + $0x78] sm:$0xe]
  %v3298 = vld [vmem:[%s1871 + $0x7c] sm:$0x1]
  %v3299 = vld [vmem:[%s1871 + $0x80] sm:$0xe]
  %v3300 = vld [vmem:[%s1871 + $0x84] sm:$0x1]
  %v3301 = vld [vmem:[%s1871 + $0x88] sm:$0xe]
  %v3302 = vld [vmem:[%s1871 + $0x8c] sm:$0x1]
  %v3335 = vrot.slane %v3271, 5
  %v3336 = vrot.slane %v3335, 4
  %v3337 = vrot.slane %v3272, 5
  %v3338 = vsel %vm2747, %v3336, %v3337
  %v3339 = vrot.slane %v3273, 5
  %v3340 = vrot.slane %v3339, 4
  %v3341 = vrot.slane %v3274, 5
  %v3342 = vsel %vm2747, %v3340, %v3341
  %v3343 = vrot.slane %v3275, 5
  %v3344 = vrot.slane %v3343, 4
  %v3345 = vrot.slane %v3276, 5
  %v3346 = vsel %vm2747, %v3344, %v3345
  %v3347 = vrot.slane %v3277, 5
  %v3348 = vrot.slane %v3347, 4
  %v3349 = vrot.slane %v3278, 5
  %v3350 = vsel %vm2747, %v3348, %v3349
  %v3351 = vrot.slane %v3279, 5
  %v3352 = vrot.slane %v3351, 4
  %v3353 = vrot.slane %v3280, 5
  %v3354 = vsel %vm2747, %v3352, %v3353
  %v3355 = vrot.slane %v3281, 5
  %v3356 = vrot.slane %v3355, 4
  %v3357 = vrot.slane %v3282, 5
  %v3358 = vsel %vm2747, %v3356, %v3357
  %v3359 = vrot.slane %v3283, 5
  %v3360 = vrot.slane %v3359, 4
  %v3361 = vrot.slane %v3284, 5
  %v3362 = vsel %vm2747, %v3360, %v3361
  %v3363 = vrot.slane %v3285, 5
  %v3364 = vrot.slane %v3363, 4
  %v3365 = vrot.slane %v3286, 5
  %v3366 = vsel %vm2747, %v3364, %v3365
  %v3367 = vrot.slane %v3287, 5
  %v3368 = vrot.slane %v3367, 4
  %v3369 = vrot.slane %v3288, 5
  %v3370 = vsel %vm2747, %v3368, %v3369
  %v3371 = vrot.slane %v3289, 5
  %v3372 = vrot.slane %v3371, 4
  %v3373 = vrot.slane %v3290, 5
  %v3374 = vsel %vm2747, %v3372, %v3373
  %v3375 = vrot.slane %v3291, 5
  %v3376 = vrot.slane %v3375, 4
  %v3377 = vrot.slane %v3292, 5
  %v3378 = vsel %vm2747, %v3376, %v3377
  %v3379 = vrot.slane %v3293, 5
  %v3380 = vrot.slane %v3379, 4
  %v3381 = vrot.slane %v3294, 5
  %v3382 = vsel %vm2747, %v3380, %v3381
  %v3383 = vrot.slane %v3295, 5
  %v3384 = vrot.slane %v3383, 4
  %v3385 = vrot.slane %v3296, 5
  %v3386 = vsel %vm2747, %v3384, %v3385
  %v3387 = vrot.slane %v3297, 5
  %v3388 = vrot.slane %v3387, 4
  %v3389 = vrot.slane %v3298, 5
  %v3390 = vsel %vm2747, %v3388, %v3389
  %v3391 = vrot.slane %v3299, 5
  %v3392 = vrot.slane %v3391, 4
  %v3393 = vrot.slane %v3300, 5
  %v3394 = vsel %vm2747, %v3392, %v3393
  %v3395 = vrot.slane %v3301, 5
  %v3396 = vrot.slane %v3395, 4
  %v3397 = vrot.slane %v3302, 5
  %v3398 = vsel %vm2747, %v3396, %v3397
  %v3399 = vunpack.c.l.b16 %v3338
  %v3400 = vunpack.c.l.b16 %v3342
  %v3401 = vunpack.c.l.b16 %v3346
  %v3402 = vunpack.c.l.b16 %v3350
  %v3403 = vunpack.c.l.b16 %v3354
  %v3404 = vunpack.c.l.b16 %v3358
  %v3405 = vunpack.c.l.b16 %v3362
  %v3406 = vunpack.c.l.b16 %v3366
  %v3407 = vunpack.c.l.b16 %v3370
  %v3408 = vunpack.c.l.b16 %v3374
  %v3409 = vunpack.c.l.b16 %v3378
  %v3410 = vunpack.c.l.b16 %v3382
  %v3411 = vunpack.c.l.b16 %v3386
  %v3412 = vunpack.c.l.b16 %v3390
  %v3413 = vunpack.c.l.b16 %v3394
  %v3414 = vunpack.c.l.b16 %v3398
  %v3415 = vpack.c.b16 %v3400, %v3399
  %v3416 = vpack.c.b16 %v3402, %v3401
  %v3417 = vpack.c.b16 %v3404, %v3403
  %v3418 = vpack.c.b16 %v3406, %v3405
  %v3419 = vpack.c.b16 %v3408, %v3407
  %v3420 = vpack.c.b16 %v3410, %v3409
  %v3421 = vpack.c.b16 %v3412, %v3411
  %v3422 = vpack.c.b16 %v3414, %v3413
  %3423 = vrot.lane.b32.xlu0 %v3415, 40
  %v3424 = vpop.permute.xlu0 %3423
  %3425 = vrot.lane.b32.xlu0 %v3416, 40
  %v3426 = vpop.permute.xlu0 %3425
  %3427 = vrot.lane.b32.xlu0 %v3417, 40
  %v3428 = vpop.permute.xlu0 %3427
  %3429 = vrot.lane.b32.xlu0 %v3418, 40
  %v3430 = vpop.permute.xlu0 %3429
  %3431 = vrot.lane.b32.xlu0 %v3419, 40
  %v3432 = vpop.permute.xlu0 %3431
  %3433 = vrot.lane.b32.xlu0 %v3420, 40
  %v3434 = vpop.permute.xlu0 %3433
  %3435 = vrot.lane.b32.xlu0 %v3421, 40
  %v3436 = vpop.permute.xlu0 %3435
  %3437 = vrot.lane.b32.xlu0 %v3422, 40
  %v3438 = vpop.permute.xlu0 %3437
  %vm3447 = vcmask 392512
  %3448 = vst.msk [vmem:[#allocation2] sm:$0xff] %vm3447, %v3424
  %3449 = vst.msk [vmem:[#allocation2 + $0x8] sm:$0xff] %vm3447, %v3426
  %3450 = vst.msk [vmem:[#allocation2 + $0x10] sm:$0xff] %vm3447, %v3428
  %3451 = vst.msk [vmem:[#allocation2 + $0x18] sm:$0xff] %vm3447, %v3430
  %3452 = vst.msk [vmem:[#allocation2 + $0x20] sm:$0xff] %vm3447, %v3432
  %3453 = vst.msk [vmem:[#allocation2 + $0x28] sm:$0xff] %vm3447, %v3434
  %3454 = vst.msk [vmem:[#allocation2 + $0x30] sm:$0xff] %vm3447, %v3436
  %3455 = vst.msk [vmem:[#allocation2 + $0x38] sm:$0xff] %vm3447, %v3438
  %s3456 = scalar_lea.vmem [#allocation3], 16
  %v3457 = vld [vmem:[%s3456] sm:$0xf]
  %v3458 = vld [vmem:[%s3456 + $0x8] sm:$0xf]
  %v3459 = vld [vmem:[%s3456 + $0x10] sm:$0xf]
  %v3460 = vld [vmem:[%s3456 + $0x18] sm:$0xf]
  %v3461 = vld [vmem:[%s3456 + $0x20] sm:$0xf]
  %v3462 = vld [vmem:[%s3456 + $0x28] sm:$0xf]
  %v3463 = vld [vmem:[%s3456 + $0x30] sm:$0xf]
  %v3464 = vld [vmem:[%s3456 + $0x38] sm:$0xf]
  %v3465 = vld [vmem:[%s3456 + $0x50] sm:$0xf]
  %v3466 = vld [vmem:[%s3456 + $0x58] sm:$0xf]
  %v3467 = vld [vmem:[%s3456 + $0x60] sm:$0xf]
  %v3468 = vld [vmem:[%s3456 + $0x68] sm:$0xf]
  %v3469 = vld [vmem:[%s3456 + $0x70] sm:$0xf]
  %v3470 = vld [vmem:[%s3456 + $0x78] sm:$0xf]
  %v3471 = vld [vmem:[%s3456 + $0x80] sm:$0xf]
  %v3472 = vld [vmem:[%s3456 + $0x88] sm:$0xf]
  %v3489 = vunpack.c.l.b16 %v3457
  %v3490 = vunpack.c.l.b16 %v3458
  %v3491 = vunpack.c.l.b16 %v3459
  %v3492 = vunpack.c.l.b16 %v3460
  %v3493 = vunpack.c.l.b16 %v3461
  %v3494 = vunpack.c.l.b16 %v3462
  %v3495 = vunpack.c.l.b16 %v3463
  %v3496 = vunpack.c.l.b16 %v3464
  %v3497 = vunpack.c.l.b16 %v3465
  %v3498 = vunpack.c.l.b16 %v3466
  %v3499 = vunpack.c.l.b16 %v3467
  %v3500 = vunpack.c.l.b16 %v3468
  %v3501 = vunpack.c.l.b16 %v3469
  %v3502 = vunpack.c.l.b16 %v3470
  %v3503 = vunpack.c.l.b16 %v3471
  %v3504 = vunpack.c.l.b16 %v3472
  %v3505 = vpack.c.b16 %v3490, %v3489
  %v3506 = vpack.c.b16 %v3492, %v3491
  %v3507 = vpack.c.b16 %v3494, %v3493
  %v3508 = vpack.c.b16 %v3496, %v3495
  %v3509 = vpack.c.b16 %v3498, %v3497
  %v3510 = vpack.c.b16 %v3500, %v3499
  %v3511 = vpack.c.b16 %v3502, %v3501
  %v3512 = vpack.c.b16 %v3504, %v3503
  %3513 = vrot.lane.b32.xlu0 %v3505, 48
  %v3514 = vpop.permute.xlu0 %3513
  %3515 = vrot.lane.b32.xlu0 %v3506, 48
  %v3516 = vpop.permute.xlu0 %3515
  %3517 = vrot.lane.b32.xlu0 %v3507, 48
  %v3518 = vpop.permute.xlu0 %3517
  %3519 = vrot.lane.b32.xlu0 %v3508, 48
  %v3520 = vpop.permute.xlu0 %3519
  %3521 = vrot.lane.b32.xlu0 %v3509, 48
  %v3522 = vpop.permute.xlu0 %3521
  %3523 = vrot.lane.b32.xlu0 %v3510, 48
  %v3524 = vpop.permute.xlu0 %3523
  %3525 = vrot.lane.b32.xlu0 %v3511, 48
  %v3526 = vpop.permute.xlu0 %3525
  %3527 = vrot.lane.b32.xlu0 %v3512, 48
  %v3528 = vpop.permute.xlu0 %3527
  %vm3537 = vcmask 458112
  %3538 = vst.msk [vmem:[#allocation2] sm:$0xff] %vm3537, %v3514
  %3539 = vst.msk [vmem:[#allocation2 + $0x8] sm:$0xff] %vm3537, %v3516
  %3540 = vst.msk [vmem:[#allocation2 + $0x10] sm:$0xff] %vm3537, %v3518
  %3541 = vst.msk [vmem:[#allocation2 + $0x18] sm:$0xff] %vm3537, %v3520
  %3542 = vst.msk [vmem:[#allocation2 + $0x20] sm:$0xff] %vm3537, %v3522
  %3543 = vst.msk [vmem:[#allocation2 + $0x28] sm:$0xff] %vm3537, %v3524
  %3544 = vst.msk [vmem:[#allocation2 + $0x30] sm:$0xff] %vm3537, %v3526
  %3545 = vst.msk [vmem:[#allocation2 + $0x38] sm:$0xff] %vm3537, %v3528
  %v3546 = vld [vmem:[%s3456] sm:$0xf]
  %v3547 = vld [vmem:[%s3456 + $0x4] sm:$0x1]
  %v3548 = vld [vmem:[%s3456 + $0x8] sm:$0xf]
  %v3549 = vld [vmem:[%s3456 + $0xc] sm:$0x1]
  %v3550 = vld [vmem:[%s3456 + $0x10] sm:$0xf]
  %v3551 = vld [vmem:[%s3456 + $0x14] sm:$0x1]
  %v3552 = vld [vmem:[%s3456 + $0x18] sm:$0xf]
  %v3553 = vld [vmem:[%s3456 + $0x1c] sm:$0x1]
  %v3554 = vld [vmem:[%s3456 + $0x20] sm:$0xf]
  %v3555 = vld [vmem:[%s3456 + $0x24] sm:$0x1]
  %v3556 = vld [vmem:[%s3456 + $0x28] sm:$0xf]
  %v3557 = vld [vmem:[%s3456 + $0x2c] sm:$0x1]
  %v3558 = vld [vmem:[%s3456 + $0x30] sm:$0xf]
  %v3559 = vld [vmem:[%s3456 + $0x34] sm:$0x1]
  %v3560 = vld [vmem:[%s3456 + $0x38] sm:$0xf]
  %v3561 = vld [vmem:[%s3456 + $0x3c] sm:$0x1]
  %v3562 = vld [vmem:[%s3456 + $0x50] sm:$0xf]
  %v3563 = vld [vmem:[%s3456 + $0x54] sm:$0x1]
  %v3564 = vld [vmem:[%s3456 + $0x58] sm:$0xf]
  %v3565 = vld [vmem:[%s3456 + $0x5c] sm:$0x1]
  %v3566 = vld [vmem:[%s3456 + $0x60] sm:$0xf]
  %v3567 = vld [vmem:[%s3456 + $0x64] sm:$0x1]
  %v3568 = vld [vmem:[%s3456 + $0x68] sm:$0xf]
  %v3569 = vld [vmem:[%s3456 + $0x6c] sm:$0x1]
  %v3570 = vld [vmem:[%s3456 + $0x70] sm:$0xf]
  %v3571 = vld [vmem:[%s3456 + $0x74] sm:$0x1]
  %v3572 = vld [vmem:[%s3456 + $0x78] sm:$0xf]
  %v3573 = vld [vmem:[%s3456 + $0x7c] sm:$0x1]
  %v3574 = vld [vmem:[%s3456 + $0x80] sm:$0xf]
  %v3575 = vld [vmem:[%s3456 + $0x84] sm:$0x1]
  %v3576 = vld [vmem:[%s3456 + $0x88] sm:$0xf]
  %v3577 = vld [vmem:[%s3456 + $0x8c] sm:$0x1]
  %v3579 = vshrl.u32 %v3546, 16
  %v3581 = vrot.slane %v3579, 4
  %v3582 = vshll.u32 %v3546, 16
  %v3584 = vrot.slane %v3582, 5
  %v3585 = vor.u32 %v3581, %v3584
  %v3586 = vrot.slane %v3585, 4
  %v3588 = vshll.u32 %v3547, 16
  %v3590 = vrot.slane %v3588, 5
  %v3591 = vsel %vm227, %v3586, %v3590
  %v3593 = vshrl.u32 %v3548, 16
  %v3595 = vrot.slane %v3593, 4
  %v3596 = vshll.u32 %v3548, 16
  %v3598 = vrot.slane %v3596, 5
  %v3599 = vor.u32 %v3595, %v3598
  %v3600 = vrot.slane %v3599, 4
  %v3602 = vshll.u32 %v3549, 16
  %v3604 = vrot.slane %v3602, 5
  %v3605 = vsel %vm227, %v3600, %v3604
  %v3607 = vshrl.u32 %v3550, 16
  %v3609 = vrot.slane %v3607, 4
  %v3610 = vshll.u32 %v3550, 16
  %v3612 = vrot.slane %v3610, 5
  %v3613 = vor.u32 %v3609, %v3612
  %v3614 = vrot.slane %v3613, 4
  %v3616 = vshll.u32 %v3551, 16
  %v3618 = vrot.slane %v3616, 5
  %v3619 = vsel %vm227, %v3614, %v3618
  %v3621 = vshrl.u32 %v3552, 16
  %v3623 = vrot.slane %v3621, 4
  %v3624 = vshll.u32 %v3552, 16
  %v3626 = vrot.slane %v3624, 5
  %v3627 = vor.u32 %v3623, %v3626
  %v3628 = vrot.slane %v3627, 4
  %v3630 = vshll.u32 %v3553, 16
  %v3632 = vrot.slane %v3630, 5
  %v3633 = vsel %vm227, %v3628, %v3632
  %v3635 = vshrl.u32 %v3554, 16
  %v3637 = vrot.slane %v3635, 4
  %v3638 = vshll.u32 %v3554, 16
  %v3640 = vrot.slane %v3638, 5
  %v3641 = vor.u32 %v3637, %v3640
  %v3642 = vrot.slane %v3641, 4
  %v3644 = vshll.u32 %v3555, 16
  %v3646 = vrot.slane %v3644, 5
  %v3647 = vsel %vm227, %v3642, %v3646
  %v3649 = vshrl.u32 %v3556, 16
  %v3651 = vrot.slane %v3649, 4
  %v3652 = vshll.u32 %v3556, 16
  %v3654 = vrot.slane %v3652, 5
  %v3655 = vor.u32 %v3651, %v3654
  %v3656 = vrot.slane %v3655, 4
  %v3658 = vshll.u32 %v3557, 16
  %v3660 = vrot.slane %v3658, 5
  %v3661 = vsel %vm227, %v3656, %v3660
  %v3663 = vshrl.u32 %v3558, 16
  %v3665 = vrot.slane %v3663, 4
  %v3666 = vshll.u32 %v3558, 16
  %v3668 = vrot.slane %v3666, 5
  %v3669 = vor.u32 %v3665, %v3668
  %v3670 = vrot.slane %v3669, 4
  %v3672 = vshll.u32 %v3559, 16
  %v3674 = vrot.slane %v3672, 5
  %v3675 = vsel %vm227, %v3670, %v3674
  %v3677 = vshrl.u32 %v3560, 16
  %v3679 = vrot.slane %v3677, 4
  %v3680 = vshll.u32 %v3560, 16
  %v3682 = vrot.slane %v3680, 5
  %v3683 = vor.u32 %v3679, %v3682
  %v3684 = vrot.slane %v3683, 4
  %v3686 = vshll.u32 %v3561, 16
  %v3688 = vrot.slane %v3686, 5
  %v3689 = vsel %vm227, %v3684, %v3688
  %v3691 = vshrl.u32 %v3562, 16
  %v3693 = vrot.slane %v3691, 4
  %v3694 = vshll.u32 %v3562, 16
  %v3696 = vrot.slane %v3694, 5
  %v3697 = vor.u32 %v3693, %v3696
  %v3698 = vrot.slane %v3697, 4
  %v3700 = vshll.u32 %v3563, 16
  %v3702 = vrot.slane %v3700, 5
  %v3703 = vsel %vm227, %v3698, %v3702
  %v3705 = vshrl.u32 %v3564, 16
  %v3707 = vrot.slane %v3705, 4
  %v3708 = vshll.u32 %v3564, 16
  %v3710 = vrot.slane %v3708, 5
  %v3711 = vor.u32 %v3707, %v3710
  %v3712 = vrot.slane %v3711, 4
  %v3714 = vshll.u32 %v3565, 16
  %v3716 = vrot.slane %v3714, 5
  %v3717 = vsel %vm227, %v3712, %v3716
  %v3719 = vshrl.u32 %v3566, 16
  %v3721 = vrot.slane %v3719, 4
  %v3722 = vshll.u32 %v3566, 16
  %v3724 = vrot.slane %v3722, 5
  %v3725 = vor.u32 %v3721, %v3724
  %v3726 = vrot.slane %v3725, 4
  %v3728 = vshll.u32 %v3567, 16
  %v3730 = vrot.slane %v3728, 5
  %v3731 = vsel %vm227, %v3726, %v3730
  %v3733 = vshrl.u32 %v3568, 16
  %v3735 = vrot.slane %v3733, 4
  %v3736 = vshll.u32 %v3568, 16
  %v3738 = vrot.slane %v3736, 5
  %v3739 = vor.u32 %v3735, %v3738
  %v3740 = vrot.slane %v3739, 4
  %v3742 = vshll.u32 %v3569, 16
  %v3744 = vrot.slane %v3742, 5
  %v3745 = vsel %vm227, %v3740, %v3744
  %v3747 = vshrl.u32 %v3570, 16
  %v3749 = vrot.slane %v3747, 4
  %v3750 = vshll.u32 %v3570, 16
  %v3752 = vrot.slane %v3750, 5
  %v3753 = vor.u32 %v3749, %v3752
  %v3754 = vrot.slane %v3753, 4
  %v3756 = vshll.u32 %v3571, 16
  %v3758 = vrot.slane %v3756, 5
  %v3759 = vsel %vm227, %v3754, %v3758
  %v3761 = vshrl.u32 %v3572, 16
  %v3763 = vrot.slane %v3761, 4
  %v3764 = vshll.u32 %v3572, 16
  %v3766 = vrot.slane %v3764, 5
  %v3767 = vor.u32 %v3763, %v3766
  %v3768 = vrot.slane %v3767, 4
  %v3770 = vshll.u32 %v3573, 16
  %v3772 = vrot.slane %v3770, 5
  %v3773 = vsel %vm227, %v3768, %v3772
  %v3775 = vshrl.u32 %v3574, 16
  %v3777 = vrot.slane %v3775, 4
  %v3778 = vshll.u32 %v3574, 16
  %v3780 = vrot.slane %v3778, 5
  %v3781 = vor.u32 %v3777, %v3780
  %v3782 = vrot.slane %v3781, 4
  %v3784 = vshll.u32 %v3575, 16
  %v3786 = vrot.slane %v3784, 5
  %v3787 = vsel %vm227, %v3782, %v3786
  %v3789 = vshrl.u32 %v3576, 16
  %v3791 = vrot.slane %v3789, 4
  %v3792 = vshll.u32 %v3576, 16
  %v3794 = vrot.slane %v3792, 5
  %v3795 = vor.u32 %v3791, %v3794
  %v3796 = vrot.slane %v3795, 4
  %v3798 = vshll.u32 %v3577, 16
  %v3800 = vrot.slane %v3798, 5
  %v3801 = vsel %vm227, %v3796, %v3800
  %v3802 = vunpack.c.l.b16 %v3591
  %v3803 = vunpack.c.l.b16 %v3605
  %v3804 = vunpack.c.l.b16 %v3619
  %v3805 = vunpack.c.l.b16 %v3633
  %v3806 = vunpack.c.l.b16 %v3647
  %v3807 = vunpack.c.l.b16 %v3661
  %v3808 = vunpack.c.l.b16 %v3675
  %v3809 = vunpack.c.l.b16 %v3689
  %v3810 = vunpack.c.l.b16 %v3703
  %v3811 = vunpack.c.l.b16 %v3717
  %v3812 = vunpack.c.l.b16 %v3731
  %v3813 = vunpack.c.l.b16 %v3745
  %v3814 = vunpack.c.l.b16 %v3759
  %v3815 = vunpack.c.l.b16 %v3773
  %v3816 = vunpack.c.l.b16 %v3787
  %v3817 = vunpack.c.l.b16 %v3801
  %v3818 = vpack.c.b16 %v3803, %v3802
  %v3819 = vpack.c.b16 %v3805, %v3804
  %v3820 = vpack.c.b16 %v3807, %v3806
  %v3821 = vpack.c.b16 %v3809, %v3808
  %v3822 = vpack.c.b16 %v3811, %v3810
  %v3823 = vpack.c.b16 %v3813, %v3812
  %v3824 = vpack.c.b16 %v3815, %v3814
  %v3825 = vpack.c.b16 %v3817, %v3816
  %3826 = vrot.lane.b32.xlu0 %v3818, 56
  %v3827 = vpop.permute.xlu0 %3826
  %3828 = vrot.lane.b32.xlu0 %v3819, 56
  %v3829 = vpop.permute.xlu0 %3828
  %3830 = vrot.lane.b32.xlu0 %v3820, 56
  %v3831 = vpop.permute.xlu0 %3830
  %3832 = vrot.lane.b32.xlu0 %v3821, 56
  %v3833 = vpop.permute.xlu0 %3832
  %3834 = vrot.lane.b32.xlu0 %v3822, 56
  %v3835 = vpop.permute.xlu0 %3834
  %3836 = vrot.lane.b32.xlu0 %v3823, 56
  %v3837 = vpop.permute.xlu0 %3836
  %3838 = vrot.lane.b32.xlu0 %v3824, 56
  %v3839 = vpop.permute.xlu0 %3838
  %3840 = vrot.lane.b32.xlu0 %v3825, 56
  %v3841 = vpop.permute.xlu0 %3840
  %vm3850 = vcmask 523712
  %3851 = vst.msk [vmem:[#allocation2] sm:$0xff] %vm3850, %v3827
  %3852 = vst.msk [vmem:[#allocation2 + $0x8] sm:$0xff] %vm3850, %v3829
  %3853 = vst.msk [vmem:[#allocation2 + $0x10] sm:$0xff] %vm3850, %v3831
  %3854 = vst.msk [vmem:[#allocation2 + $0x18] sm:$0xff] %vm3850, %v3833
  %3855 = vst.msk [vmem:[#allocation2 + $0x20] sm:$0xff] %vm3850, %v3835
  %3856 = vst.msk [vmem:[#allocation2 + $0x28] sm:$0xff] %vm3850, %v3837
  %3857 = vst.msk [vmem:[#allocation2 + $0x30] sm:$0xff] %vm3850, %v3839
  %3858 = vst.msk [vmem:[#allocation2 + $0x38] sm:$0xff] %vm3850, %v3841
  %v3859 = vld [vmem:[%s3456] sm:$0xe]
  %v3860 = vld [vmem:[%s3456 + $0x4] sm:$0x1]
  %v3861 = vld [vmem:[%s3456 + $0x8] sm:$0xe]
  %v3862 = vld [vmem:[%s3456 + $0xc] sm:$0x1]
  %v3863 = vld [vmem:[%s3456 + $0x10] sm:$0xe]
  %v3864 = vld [vmem:[%s3456 + $0x14] sm:$0x1]
  %v3865 = vld [vmem:[%s3456 + $0x18] sm:$0xe]
  %v3866 = vld [vmem:[%s3456 + $0x1c] sm:$0x1]
  %v3867 = vld [vmem:[%s3456 + $0x20] sm:$0xe]
  %v3868 = vld [vmem:[%s3456 + $0x24] sm:$0x1]
  %v3869 = vld [vmem:[%s3456 + $0x28] sm:$0xe]
  %v3870 = vld [vmem:[%s3456 + $0x2c] sm:$0x1]
  %v3871 = vld [vmem:[%s3456 + $0x30] sm:$0xe]
  %v3872 = vld [vmem:[%s3456 + $0x34] sm:$0x1]
  %v3873 = vld [vmem:[%s3456 + $0x38] sm:$0xe]
  %v3874 = vld [vmem:[%s3456 + $0x3c] sm:$0x1]
  %v3875 = vld [vmem:[%s3456 + $0x50] sm:$0xe]
  %v3876 = vld [vmem:[%s3456 + $0x54] sm:$0x1]
  %v3877 = vld [vmem:[%s3456 + $0x58] sm:$0xe]
  %v3878 = vld [vmem:[%s3456 + $0x5c] sm:$0x1]
  %v3879 = vld [vmem:[%s3456 + $0x60] sm:$0xe]
  %v3880 = vld [vmem:[%s3456 + $0x64] sm:$0x1]
  %v3881 = vld [vmem:[%s3456 + $0x68] sm:$0xe]
  %v3882 = vld [vmem:[%s3456 + $0x6c] sm:$0x1]
  %v3883 = vld [vmem:[%s3456 + $0x70] sm:$0xe]
  %v3884 = vld [vmem:[%s3456 + $0x74] sm:$0x1]
  %v3885 = vld [vmem:[%s3456 + $0x78] sm:$0xe]
  %v3886 = vld [vmem:[%s3456 + $0x7c] sm:$0x1]
  %v3887 = vld [vmem:[%s3456 + $0x80] sm:$0xe]
  %v3888 = vld [vmem:[%s3456 + $0x84] sm:$0x1]
  %v3889 = vld [vmem:[%s3456 + $0x88] sm:$0xe]
  %v3890 = vld [vmem:[%s3456 + $0x8c] sm:$0x1]
  %v3923 = vrot.slane %v3859, 5
  %v3924 = vrot.slane %v3923, 4
  %v3925 = vrot.slane %v3860, 5
  %v3926 = vsel %vm2747, %v3924, %v3925
  %v3927 = vrot.slane %v3861, 5
  %v3928 = vrot.slane %v3927, 4
  %v3929 = vrot.slane %v3862, 5
  %v3930 = vsel %vm2747, %v3928, %v3929
  %v3931 = vrot.slane %v3863, 5
  %v3932 = vrot.slane %v3931, 4
  %v3933 = vrot.slane %v3864, 5
  %v3934 = vsel %vm2747, %v3932, %v3933
  %v3935 = vrot.slane %v3865, 5
  %v3936 = vrot.slane %v3935, 4
  %v3937 = vrot.slane %v3866, 5
  %v3938 = vsel %vm2747, %v3936, %v3937
  %v3939 = vrot.slane %v3867, 5
  %v3940 = vrot.slane %v3939, 4
  %v3941 = vrot.slane %v3868, 5
  %v3942 = vsel %vm2747, %v3940, %v3941
  %v3943 = vrot.slane %v3869, 5
  %v3944 = vrot.slane %v3943, 4
  %v3945 = vrot.slane %v3870, 5
  %v3946 = vsel %vm2747, %v3944, %v3945
  %v3947 = vrot.slane %v3871, 5
  %v3948 = vrot.slane %v3947, 4
  %v3949 = vrot.slane %v3872, 5
  %v3950 = vsel %vm2747, %v3948, %v3949
  %v3951 = vrot.slane %v3873, 5
  %v3952 = vrot.slane %v3951, 4
  %v3953 = vrot.slane %v3874, 5
  %v3954 = vsel %vm2747, %v3952, %v3953
  %v3955 = vrot.slane %v3875, 5
  %v3956 = vrot.slane %v3955, 4
  %v3957 = vrot.slane %v3876, 5
  %v3958 = vsel %vm2747, %v3956, %v3957
  %v3959 = vrot.slane %v3877, 5
  %v3960 = vrot.slane %v3959, 4
  %v3961 = vrot.slane %v3878, 5
  %v3962 = vsel %vm2747, %v3960, %v3961
  %v3963 = vrot.slane %v3879, 5
  %v3964 = vrot.slane %v3963, 4
  %v3965 = vrot.slane %v3880, 5
  %v3966 = vsel %vm2747, %v3964, %v3965
  %v3967 = vrot.slane %v3881, 5
  %v3968 = vrot.slane %v3967, 4
  %v3969 = vrot.slane %v3882, 5
  %v3970 = vsel %vm2747, %v3968, %v3969
  %v3971 = vrot.slane %v3883, 5
  %v3972 = vrot.slane %v3971, 4
  %v3973 = vrot.slane %v3884, 5
  %v3974 = vsel %vm2747, %v3972, %v3973
  %v3975 = vrot.slane %v3885, 5
  %v3976 = vrot.slane %v3975, 4
  %v3977 = vrot.slane %v3886, 5
  %v3978 = vsel %vm2747, %v3976, %v3977
  %v3979 = vrot.slane %v3887, 5
  %v3980 = vrot.slane %v3979, 4
  %v3981 = vrot.slane %v3888, 5
  %v3982 = vsel %vm2747, %v3980, %v3981
  %v3983 = vrot.slane %v3889, 5
  %v3984 = vrot.slane %v3983, 4
  %v3985 = vrot.slane %v3890, 5
  %v3986 = vsel %vm2747, %v3984, %v3985
  %v3987 = vunpack.c.l.b16 %v3926
  %v3988 = vunpack.c.l.b16 %v3930
  %v3989 = vunpack.c.l.b16 %v3934
  %v3990 = vunpack.c.l.b16 %v3938
  %v3991 = vunpack.c.l.b16 %v3942
  %v3992 = vunpack.c.l.b16 %v3946
  %v3993 = vunpack.c.l.b16 %v3950
  %v3994 = vunpack.c.l.b16 %v3954
  %v3995 = vunpack.c.l.b16 %v3958
  %v3996 = vunpack.c.l.b16 %v3962
  %v3997 = vunpack.c.l.b16 %v3966
  %v3998 = vunpack.c.l.b16 %v3970
  %v3999 = vunpack.c.l.b16 %v3974
  %v4000 = vunpack.c.l.b16 %v3978
  %v4001 = vunpack.c.l.b16 %v3982
  %v4002 = vunpack.c.l.b16 %v3986
  %v4003 = vpack.c.b16 %v3988, %v3987
  %v4004 = vpack.c.b16 %v3990, %v3989
  %v4005 = vpack.c.b16 %v3992, %v3991
  %v4006 = vpack.c.b16 %v3994, %v3993
  %v4007 = vpack.c.b16 %v3996, %v3995
  %v4008 = vpack.c.b16 %v3998, %v3997
  %v4009 = vpack.c.b16 %v4000, %v3999
  %v4010 = vpack.c.b16 %v4002, %v4001
  %4011 = vrot.lane.b32.xlu0 %v4003, 64
  %v4012 = vpop.permute.xlu0 %4011
  %4013 = vrot.lane.b32.xlu0 %v4004, 64
  %v4014 = vpop.permute.xlu0 %4013
  %4015 = vrot.lane.b32.xlu0 %v4005, 64
  %v4016 = vpop.permute.xlu0 %4015
  %4017 = vrot.lane.b32.xlu0 %v4006, 64
  %v4018 = vpop.permute.xlu0 %4017
  %4019 = vrot.lane.b32.xlu0 %v4007, 64
  %v4020 = vpop.permute.xlu0 %4019
  %4021 = vrot.lane.b32.xlu0 %v4008, 64
  %v4022 = vpop.permute.xlu0 %4021
  %4023 = vrot.lane.b32.xlu0 %v4009, 64
  %v4024 = vpop.permute.xlu0 %4023
  %4025 = vrot.lane.b32.xlu0 %v4010, 64
  %v4026 = vpop.permute.xlu0 %4025
  %vm4035 = vcmask 589312
  %4036 = vst.msk [vmem:[#allocation2] sm:$0xff] %vm4035, %v4012
  %4037 = vst.msk [vmem:[#allocation2 + $0x8] sm:$0xff] %vm4035, %v4014
  %4038 = vst.msk [vmem:[#allocation2 + $0x10] sm:$0xff] %vm4035, %v4016
  %4039 = vst.msk [vmem:[#allocation2 + $0x18] sm:$0xff] %vm4035, %v4018
  %4040 = vst.msk [vmem:[#allocation2 + $0x20] sm:$0xff] %vm4035, %v4020
  %4041 = vst.msk [vmem:[#allocation2 + $0x28] sm:$0xff] %vm4035, %v4022
  %4042 = vst.msk [vmem:[#allocation2 + $0x30] sm:$0xff] %vm4035, %v4024
  %4043 = vst.msk [vmem:[#allocation2 + $0x38] sm:$0xff] %vm4035, %v4026
  %v4044 = vld [vmem:[#allocation2] sm:$0xff]
  %v4045 = vld [vmem:[#allocation2 + $0x8] sm:$0xff]
  %v4046 = vld [vmem:[#allocation2 + $0x10] sm:$0xff]
  %v4047 = vld [vmem:[#allocation2 + $0x18] sm:$0xff]
  %v4048 = vld [vmem:[#allocation2 + $0x20] sm:$0xff]
  %v4049 = vld [vmem:[#allocation2 + $0x28] sm:$0xff]
  %v4050 = vld [vmem:[#allocation2 + $0x30] sm:$0xff]
  %v4051 = vld [vmem:[#allocation2 + $0x38] sm:$0xff]
  %v4052 = vld [vmem:[%s4] sm:$0xf]
  %v4053 = vld [vmem:[%s4 + $0x4] sm:$0xf]
  %v4054 = vld [vmem:[%s4 + $0x8] sm:$0xf]
  %v4055 = vld [vmem:[%s4 + $0xc] sm:$0xf]
  %v4056 = vld [vmem:[%s4 + $0x10] sm:$0xf]
  %v4057 = vld [vmem:[%s4 + $0x14] sm:$0xf]
  %v4058 = vld [vmem:[%s4 + $0x18] sm:$0xf]
  %v4059 = vld [vmem:[%s4 + $0x1c] sm:$0xf]
  %v4060 = vld [vmem:[%s4 + $0x20] sm:$0xf]
  %v4070 = vunpack.c.l.b16 %v4052
  %v4071 = vunpack.c.l.b16 %v4053
  %v4072 = vunpack.c.l.b16 %v4054
  %v4073 = vunpack.c.l.b16 %v4055
  %v4074 = vunpack.c.l.b16 %v4056
  %v4075 = vunpack.c.l.b16 %v4057
  %v4076 = vunpack.c.l.b16 %v4058
  %v4077 = vunpack.c.l.b16 %v4059
  %v4078 = vunpack.c.l.b16 %v4060
  %v4079 = vpack.c.b16 %v4071, %v4070
  %v4080 = vpack.c.b16 %v4073, %v4072
  %v4081 = vpack.c.b16 %v4075, %v4074
  %v4082 = vpack.c.b16 %v4077, %v4076
  %v4083 = vpack.c.b16 %v4078, %v4078
  %vm4088 = vcmask 588800
  %v4090 = vsel %vm4088, %v4044, 0
  %v4093 = vsel %vm4088, %v4045, 0
  %v4096 = vsel %vm4088, %v4046, 0
  %v4099 = vsel %vm4088, %v4047, 0
  %v4102 = vsel %vm4088, %v4048, 0
  %v4105 = vsel %vm4088, %v4049, 0
  %v4108 = vsel %vm4088, %v4050, 0
  %v4111 = vsel %vm4088, %v4051, 0
  %vm4113 = vcmask 1043456
  %v4115 = vsel %vm4113, %v4083, 0
  %4117 = vmatprep.subr.bf16.mxu0 0
  %4118 = vmatpush1.bf16.msra.mxu0 %v4079
  %4119 = vmatprep.subr.bf16.mxu0 0
  %4120 = vmatpush1.bf16.msra.mxu0 %v4080
  %4121 = vmatprep.subr.bf16.mxu0 0
  %4122 = vmatpush1.bf16.msra.mxu0 %v4081
  %4123 = vmatprep.subr.bf16.mxu0 0
  %4124 = vmatpush1.bf16.msra.mxu0 %v4082
  %4125 = vmatprep.subr.bf16.mxu0 0
  %4126 = vmatpush1.bf16.msra.mxu0 %v4115
  %4127 = vmatprep.subr.bf16.mxu0 0
  %4128 = vmatpush1.bf16.msra.mxu0 0
  %4129 = vmatprep.subr.bf16.mxu0 0
  %4130 = vmatpush1.bf16.msra.mxu0 0
  %4131 = vmatprep.subr.bf16.mxu0 0
  %4132 = vmatpush1.bf16.msra.mxu0 0
  %4133 = vmatprep.subr.bf16.mxu0 0
  %4134 = vmatpush1.bf16.msra.mxu0 0
  %4135 = vmatprep.subr.bf16.mxu0 0
  %4136 = vmatpush1.bf16.msra.mxu0 0
  %4137 = vmatprep.subr.bf16.mxu0 0
  %4138 = vmatpush1.bf16.msra.mxu0 0
  %4139 = vmatprep.subr.bf16.mxu0 0
  %4140 = vmatpush1.bf16.msra.mxu0 0
  %4141 = vmatprep.subr.bf16.mxu0 0
  %4142 = vmatpush1.bf16.msra.mxu0 0
  %4143 = vmatprep.subr.bf16.mxu0 0
  %4144 = vmatpush1.bf16.msra.mxu0 0
  %4145 = vmatprep.subr.bf16.mxu0 0
  %4146 = vmatpush1.bf16.msra.mxu0 0
  %4147 = vmatprep.subr.bf16.mxu0 0
  %4148 = vmatpush1.bf16.msra.mxu0 0
  %4149 = vmatprep.mubr.bf16.mxu0 0
  %4150 = vmatmul.mubr.bf16.gmra.mrb[0].mxu0 %v4090
  %v4151 = vpop.f32.mrb[0].mxu0
  %v4152 = vadd.f32 0.0, %v4151
  %v4153 = vpop.f32.mrb[0].mxu0
  %v4154 = vpop.f32.mrb[0].mxu0
  %v4155 = vadd.f32 0.0, %v4154
  %v4156 = vpop.f32.mrb[0].mxu0
  %4157 = vmatprep.mubr.bf16.mxu0 0
  %4158 = vmatmul.mubr.bf16.gmra.mrb[0].mxu0 %v4093
  %v4159 = vpop.f32.mrb[0].mxu0
  %v4160 = vadd.f32 0.0, %v4159
  %v4161 = vpop.f32.mrb[0].mxu0
  %v4162 = vpop.f32.mrb[0].mxu0
  %v4163 = vadd.f32 0.0, %v4162
  %v4164 = vpop.f32.mrb[0].mxu0
  %4165 = vmatprep.mubr.bf16.mxu0 0
  %4166 = vmatmul.mubr.bf16.gmra.mrb[0].mxu0 %v4096
  %v4167 = vpop.f32.mrb[0].mxu0
  %v4168 = vadd.f32 0.0, %v4167
  %v4169 = vpop.f32.mrb[0].mxu0
  %v4170 = vpop.f32.mrb[0].mxu0
  %v4171 = vadd.f32 0.0, %v4170
  %v4172 = vpop.f32.mrb[0].mxu0
  %4173 = vmatprep.mubr.bf16.mxu0 0
  %4174 = vmatmul.mubr.bf16.gmra.mrb[0].mxu0 %v4099
  %v4175 = vpop.f32.mrb[0].mxu0
  %v4176 = vadd.f32 0.0, %v4175
  %v4177 = vpop.f32.mrb[0].mxu0
  %v4178 = vpop.f32.mrb[0].mxu0
  %v4179 = vadd.f32 0.0, %v4178
  %v4180 = vpop.f32.mrb[0].mxu0
  %4181 = vmatprep.mubr.bf16.mxu0 0
  %4182 = vmatmul.mubr.bf16.gmra.mrb[0].mxu0 %v4102
  %v4183 = vpop.f32.mrb[0].mxu0
  %v4184 = vadd.f32 0.0, %v4183
  %v4185 = vpop.f32.mrb[0].mxu0
  %v4186 = vpop.f32.mrb[0].mxu0
  %v4187 = vadd.f32 0.0, %v4186
  %v4188 = vpop.f32.mrb[0].mxu0
  %4189 = vmatprep.mubr.bf16.mxu0 0
  %4190 = vmatmul.mubr.bf16.gmra.mrb[0].mxu0 %v4105
  %v4191 = vpop.f32.mrb[0].mxu0
  %v4192 = vadd.f32 0.0, %v4191
  %v4193 = vpop.f32.mrb[0].mxu0
  %v4194 = vpop.f32.mrb[0].mxu0
  %v4195 = vadd.f32 0.0, %v4194
  %v4196 = vpop.f32.mrb[0].mxu0
  %4197 = vmatprep.mubr.bf16.mxu0 0
  %4198 = vmatmul.mubr.bf16.gmra.mrb[0].mxu0 %v4108
  %v4199 = vpop.f32.mrb[0].mxu0
  %v4200 = vadd.f32 0.0, %v4199
  %v4201 = vpop.f32.mrb[0].mxu0
  %v4202 = vpop.f32.mrb[0].mxu0
  %v4203 = vadd.f32 0.0, %v4202
  %v4204 = vpop.f32.mrb[0].mxu0
  %4205 = vmatprep.mubr.bf16.mxu0 0
  %4206 = vmatmul.mubr.bf16.gmra.mrb[0].mxu0 %v4111
  %v4207 = vpop.f32.mrb[0].mxu0
  %v4208 = vadd.f32 0.0, %v4207
  %v4209 = vpop.f32.mrb[0].mxu0
  %v4210 = vpop.f32.mrb[0].mxu0
  %v4211 = vadd.f32 0.0, %v4210
  %v4212 = vpop.f32.mrb[0].mxu0
  %4213 = vdwg.mxu0
  %v4214 = vld [vmem:[%s5] sm:$0x1]
  %v4216 = vlaneseq
  %v4217 = vshrl.u32 %v4216, 7
  %v4218 = vsub.s32 0, %v4217
  %v4219 = vrot.slane %v4214, %v4218
  %v4221 = vmul.f32 %v4152, %v4219
  %v4222 = vmul.f32 %v4155, %v4219
  %v4223 = vmul.f32 %v4160, %v4219
  %v4224 = vmul.f32 %v4163, %v4219
  %v4225 = vmul.f32 %v4168, %v4219
  %v4226 = vmul.f32 %v4171, %v4219
  %v4227 = vmul.f32 %v4176, %v4219
  %v4228 = vmul.f32 %v4179, %v4219
  %v4229 = vmul.f32 %v4184, %v4219
  %v4230 = vmul.f32 %v4187, %v4219
  %v4231 = vmul.f32 %v4192, %v4219
  %v4232 = vmul.f32 %v4195, %v4219
  %v4233 = vmul.f32 %v4200, %v4219
  %v4234 = vmul.f32 %v4203, %v4219
  %v4235 = vmul.f32 %v4208, %v4219
  %v4236 = vmul.f32 %v4211, %v4219
  %v4237 = vld [vmem:[%s6] sm:$0x1]
  %v4239 = vlaneseq
  %v4240 = vshrl.u32 %v4239, 7
  %v4241 = vsub.s32 0, %v4240
  %v4242 = vrot.slane %v4237, %v4241
  %v4244 = vadd.f32 %v4221, %v4242
  %v4245 = vadd.f32 %v4222, %v4242
  %v4246 = vadd.f32 %v4223, %v4242
  %v4247 = vadd.f32 %v4224, %v4242
  %v4248 = vadd.f32 %v4225, %v4242
  %v4249 = vadd.f32 %v4226, %v4242
  %v4250 = vadd.f32 %v4227, %v4242
  %v4251 = vadd.f32 %v4228, %v4242
  %v4252 = vadd.f32 %v4229, %v4242
  %v4253 = vadd.f32 %v4230, %v4242
  %v4254 = vadd.f32 %v4231, %v4242
  %v4255 = vadd.f32 %v4232, %v4242
  %v4256 = vadd.f32 %v4233, %v4242
  %v4257 = vadd.f32 %v4234, %v4242
  %v4258 = vadd.f32 %v4235, %v4242
  %v4259 = vadd.f32 %v4236, %v4242
  %v4260 = vadd.f32 %v4244, %v1591
  %v4261 = vadd.f32 %v4245, %v1594
  %v4262 = vadd.f32 %v4246, %v1599
  %v4263 = vadd.f32 %v4247, %v1602
  %v4264 = vadd.f32 %v4248, %v1607
  %v4265 = vadd.f32 %v4249, %v1610
  %v4266 = vadd.f32 %v4250, %v1615
  %v4267 = vadd.f32 %v4251, %v1618
  %v4268 = vadd.f32 %v4252, %v1623
  %v4269 = vadd.f32 %v4253, %v1626
  %v4270 = vadd.f32 %v4254, %v1631
  %v4271 = vadd.f32 %v4255, %v1634
  %v4272 = vadd.f32 %v4256, %v1639
  %v4273 = vadd.f32 %v4257, %v1642
  %v4274 = vadd.f32 %v4258, %v1647
  %v4275 = vadd.f32 %v4259, %v1650
  %v4276 = vmax.f32 %v4260, 0.0
  %v4277 = vmax.f32 %v4261, 0.0
  %v4278 = vmax.f32 %v4262, 0.0
  %v4279 = vmax.f32 %v4263, 0.0
  %v4280 = vmax.f32 %v4264, 0.0
  %v4281 = vmax.f32 %v4265, 0.0
  %v4282 = vmax.f32 %v4266, 0.0
  %v4283 = vmax.f32 %v4267, 0.0
  %v4284 = vmax.f32 %v4268, 0.0
  %v4285 = vmax.f32 %v4269, 0.0
  %v4286 = vmax.f32 %v4270, 0.0
  %v4287 = vmax.f32 %v4271, 0.0
  %v4288 = vmax.f32 %v4272, 0.0
  %v4289 = vmax.f32 %v4273, 0.0
  %v4290 = vmax.f32 %v4274, 0.0
  %v4291 = vmax.f32 %v4275, 0.0
  %4292 = vst.msk [vmem:[%s8] sm:$0xff] %vm2359, %v4276
  %4293 = vst.msk [vmem:[%s8 + $0x8] sm:$0xff] %vm2359, %v4277
  %4294 = vst.msk [vmem:[%s8 + $0x10] sm:$0xff] %vm2359, %v4278
  %4295 = vst.msk [vmem:[%s8 + $0x18] sm:$0xff] %vm2359, %v4279
  %4296 = vst.msk [vmem:[%s8 + $0x20] sm:$0xff] %vm2359, %v4280
  %4297 = vst.msk [vmem:[%s8 + $0x28] sm:$0xff] %vm2359, %v4281
  %4298 = vst.msk [vmem:[%s8 + $0x30] sm:$0xff] %vm2359, %v4282
  %4299 = vst.msk [vmem:[%s8 + $0x38] sm:$0xff] %vm2359, %v4283
  %4300 = vst.msk [vmem:[%s8 + $0x40] sm:$0xff] %vm2359, %v4284
  %4301 = vst.msk [vmem:[%s8 + $0x48] sm:$0xff] %vm2359, %v4285
  %4302 = vst.msk [vmem:[%s8 + $0x50] sm:$0xff] %vm2359, %v4286
  %4303 = vst.msk [vmem:[%s8 + $0x58] sm:$0xff] %vm2359, %v4287
  %4304 = vst.msk [vmem:[%s8 + $0x60] sm:$0xff] %vm2359, %v4288
  %4305 = vst.msk [vmem:[%s8 + $0x68] sm:$0xff] %vm2359, %v4289
  %4306 = vst.msk [vmem:[%s8 + $0x70] sm:$0xff] %vm2359, %v4290
  %4307 = vst.msk [vmem:[%s8 + $0x78] sm:$0xff] %vm2359, %v4291
  // Predicated region
  $region34: #{tpu_custom_call.1} parent=0 // pred_check
    _
  $region35: #{tpu_custom_call.1} parent=0 // pred_check_branch
    %4309 = sbr.rel (0) target = $region37
  $region36: #{tpu_custom_call.1} parent=0 // pred_region
    _
  $region37: #{tpu_custom_call.1} parent=0 // pred_fallthru
    _
  // Predicated region
  $region38: #{tpu_custom_call.1} parent=0 // pred_check
    _
  $region39: #{tpu_custom_call.1} parent=0 // pred_check_branch
    %4311 = sbr.rel (0) target = $region41
  $region40: #{tpu_custom_call.1} parent=0 // pred_region
    _
  $region41: #{tpu_custom_call.1} parent=0 // pred_fallthru
    _

</llo_original>
